<compile_context>
chip_gen: v7x
topology: tpu7x:2x2x1
jax: 0.10.0
libtpu: 0.0.40
codegen_flags: <defaults>
</compile_context>

<pallas_src>
import jax
import jax.numpy as jnp
from jax.experimental import pallas as pl
from jax.experimental.pallas import tpu as pltpu  # noqa: F401  (TPU backend import)


# ------------------------- fused LSTM(2 layers) + FC kernel -------------------------
def _fused_lstm_fc_kernel(x_ref, wih0_ref, b0_ref, whh0_ref, wl1_ref, b1_ref,
                          fcw_ref, fcb_ref, out_ref):
    T, B, _ = x_ref.shape
    H = whh0_ref.shape[0]

    # Tiny row vectors only (~9 vregs total): safe to hoist.  The (H,4H)/(2H,4H)
    # weight matrices are deliberately NOT hoisted (see header comment).
    wih0 = wih0_ref[...]        # (1, 4H) f32
    b0 = b0_ref[...]            # (1, 4H) f32
    b1 = b1_ref[...]            # (1, 4H) f32
    fcw = fcw_ref[...]          # (1, H)  f32
    fcb = fcb_ref[...]          # (1, 1)  f32

    def lstm_cell(gates, c):
        # PyTorch gate layout [i | f | g | o]; each slice is a lane-aligned 128-wide chunk.
        i = jax.nn.sigmoid(gates[:, 0 * H:1 * H])
        f = jax.nn.sigmoid(gates[:, 1 * H:2 * H])
        g = jnp.tanh(gates[:, 2 * H:3 * H])
        o = jax.nn.sigmoid(gates[:, 3 * H:4 * H])
        c_new = f * c + i * g
        h_new = o * jnp.tanh(c_new)
        return h_new, c_new

    def body(t, carry):
        h0, c0, h1, c1 = carry
        # Layer 0: input_size == 1 -> input projection is a VPU broadcast FMA,
        # hidden under the recurrent matmul.
        xt = x_ref[t]                                         # (B, 1) f32
        gates0 = (xt * wih0 + b0
                  + jnp.dot(h0.astype(jnp.bfloat16), whh0_ref[...],
                            preferred_element_type=jnp.float32))
        h0, c0 = lstm_cell(gates0, c0)
        # Layer 1: single fused K=2H matmul over the stacked [W_ih1^T ; W_hh1^T].
        hcat = jnp.concatenate([h0, h1], axis=-1).astype(jnp.bfloat16)   # (B, 2H)
        gates1 = (jnp.dot(hcat, wl1_ref[...],
                          preferred_element_type=jnp.float32) + b1)
        h1, c1 = lstm_cell(gates1, c1)
        return h0, c0, h1, c1

    zeros = jnp.zeros((B, H), jnp.float32)
    _, _, h1, _ = jax.lax.fori_loop(0, T, body, (zeros, zeros, zeros, zeros),
                                    unroll=True)

    # FC head (H -> 1): VPU elementwise product + XLU lane reduction
    # (an N=1 MXU matmul would waste 127/128 of a weight-load/drain pass).
    out_ref[...] = (jnp.sum(h1 * fcw, axis=-1, keepdims=True) + fcb
                    ).astype(out_ref.dtype)


def fused_lstm_fc(x_tm, wih0, b0, whh0, wl1, b1, fcw, fcb):
    """x_tm: (T, B_pad, 1) time-major input. Returns (B_pad, 1) FC output at last step."""
    T, B, _ = x_tm.shape
    H = whh0.shape[0]
    G = 4 * H
    return pl.pallas_call(
        _fused_lstm_fc_kernel,
        out_shape=jax.ShapeDtypeStruct((B, 1), jnp.float32),
        grid=(),
        in_specs=[
            pl.BlockSpec((T, B, 1), lambda: (0, 0, 0)),   # x, time-major (tiny)
            pl.BlockSpec((1, G), lambda: (0, 0)),         # W_ih0^T row (f32)
            pl.BlockSpec((1, G), lambda: (0, 0)),         # b_ih0 + b_hh0
            pl.BlockSpec((H, G), lambda: (0, 0)),         # W_hh0^T (bf16)
            pl.BlockSpec((2 * H, G), lambda: (0, 0)),     # [W_ih1^T ; W_hh1^T] (bf16)
            pl.BlockSpec((1, G), lambda: (0, 0)),         # b_ih1 + b_hh1
            pl.BlockSpec((1, H), lambda: (0, 0)),         # fc weight row (f32)
            pl.BlockSpec((1, 1), lambda: (0, 0)),         # fc bias
        ],
        out_specs=pl.BlockSpec((B, 1), lambda: (0, 0)),
    )(x_tm, wih0, b0, whh0, wl1, b1, fcw, fcb)


# --------------------------------- params ---------------------------------
def init_params(key, input_size=1, hidden_size=128, num_layers=2):
    """Deterministic init mimicking PyTorch's U(-1/sqrt(H), 1/sqrt(H)) (PyTorch layout)."""
    k = 1.0 / jnp.sqrt(jnp.float32(hidden_size))
    params = {"layers": []}
    for layer in range(num_layers):
        d_in = input_size if layer == 0 else hidden_size
        key, k1, k2, k3, k4 = jax.random.split(key, 5)
        w_ih = jax.random.uniform(k1, (4 * hidden_size, d_in), jnp.float32, -k, k)
        w_hh = jax.random.uniform(k2, (4 * hidden_size, hidden_size), jnp.float32, -k, k)
        b_ih = jax.random.uniform(k3, (4 * hidden_size,), jnp.float32, -k, k)
        b_hh = jax.random.uniform(k4, (4 * hidden_size,), jnp.float32, -k, k)
        params["layers"].append((w_ih, w_hh, b_ih, b_hh))
    key, k5, k6 = jax.random.split(key, 3)
    params["fc_w"] = jax.random.uniform(k5, (1, hidden_size), jnp.float32, -k, k)
    params["fc_b"] = jax.random.uniform(k6, (1,), jnp.float32, -k, k)
    return params


def pack_params(params):
    """One-time repack: pre-transpose, pre-sum biases, stack layer-1 weights, bf16 MXU operands."""
    (w_ih0, w_hh0, b_ih0, b_hh0), (w_ih1, w_hh1, b_ih1, b_hh1) = params["layers"]
    return {
        "w_ih0_row": jnp.transpose(w_ih0).astype(jnp.float32),          # (1, 4H)  VPU path, f32
        "b0": (b_ih0 + b_hh0)[None, :].astype(jnp.float32),             # (1, 4H)
        "w_hh0T": jnp.transpose(w_hh0).astype(jnp.bfloat16),            # (H, 4H)  MXU, bf16
        "w_l1": jnp.concatenate([jnp.transpose(w_ih1), jnp.transpose(w_hh1)],
                                axis=0).astype(jnp.bfloat16),           # (2H, 4H) MXU, bf16
        "b1": (b_ih1 + b_hh1)[None, :].astype(jnp.float32),             # (1, 4H)
        "fc_w_row": params["fc_w"].astype(jnp.float32),                 # (1, H)   VPU path, f32
        "fc_b": params["fc_b"][None, :].astype(jnp.float32),            # (1, 1)
    }


# --------------------------------- forward ---------------------------------
def _round_up(n, m):
    return ((n + m - 1) // m) * m


@jax.jit
def lstm_model_forward(packed, x):
    """x: (B, T, input_size=1) -> (B, 1), matching LSTMModel.forward (eval mode)."""
    x = x.astype(jnp.float32)
    B, T, D = x.shape
    assert D == 1, "fused kernel assumes input_size == 1"
    B_pad = _round_up(max(B, 8), 8)                      # f32 sublane minimum

    x_p = jnp.pad(x, ((0, B_pad - B), (0, 0), (0, 0)))
    x_tm = jnp.transpose(x_p, (1, 0, 2))                 # (T, B_pad, 1) time-major

    out_p = fused_lstm_fc(x_tm, packed["w_ih0_row"], packed["b0"],
                          packed["w_hh0T"], packed["w_l1"], packed["b1"],
                          packed["fc_w_row"], packed["fc_b"])
    return out_p[:B]                                     # drop batch padding


# ------------------------ pure-JAX reference (correctness) ------------------------
def _reference_forward(params, x):
    def cell(w_ih, w_hh, b_ih, b_hh, x_t, h, c):
        gates = x_t @ w_ih.T + b_ih + h @ w_hh.T + b_hh
        H = h.shape[1]
        i = jax.nn.sigmoid(gates[:, 0 * H:1 * H])
        f = jax.nn.sigmoid(gates[:, 1 * H:2 * H])
        g = jnp.tanh(gates[:, 2 * H:3 * H])
        o = jax.nn.sigmoid(gates[:, 3 * H:4 * H])
        c = f * c + i * g
        h = o * jnp.tanh(c)
        return h, c

    B, T, _ = x.shape
    seq = x.astype(jnp.float32)
    for (w_ih, w_hh, b_ih, b_hh) in params["layers"]:
        H = w_hh.shape[1]
        h = jnp.zeros((B, H), jnp.float32)
        c = jnp.zeros((B, H), jnp.float32)
        outs = []
        for t in range(T):
            h, c = cell(w_ih, w_hh, b_ih, b_hh, seq[:, t, :], h, c)
            outs.append(h)
        seq = jnp.stack(outs, axis=1)
    return seq[:, -1, :] @ params["fc_w"].T + params["fc_b"]


if __name__ == "__main__":
    B, T, INPUT_SIZE, HIDDEN = 2, 8, 1, 128

    key = jax.random.PRNGKey(0)
    pkey, xkey = jax.random.split(key)
    params = init_params(pkey, input_size=INPUT_SIZE, hidden_size=HIDDEN, num_layers=2)
    packed = pack_params(params)
    x = jax.random.normal(xkey, (B, T, INPUT_SIZE), jnp.float32)

    out = lstm_model_forward(packed, x)
    out = jax.block_until_ready(out)

    ref = _reference_forward(params, x)
    assert out.shape == (B, 1), out.shape
    # Tolerance loosened (bf16 MXU weights; cell-state math stays f32).
    assert jnp.allclose(out, ref, atol=2e-2, rtol=2e-2), "mismatch vs reference"

    print("KERNEL_OK")
</pallas_src>

<mosaic_0001>
module attributes {stable_mosaic.version = 11 : i64} {
  func.func @_fused_lstm_fc_kernel(%arg0: memref<8x8x1xf32, #tpu.memory_space<vmem>>, %arg1: memref<1x512xf32, #tpu.memory_space<vmem>>, %arg2: memref<1x512xf32, #tpu.memory_space<vmem>>, %arg3: memref<128x512xbf16, #tpu.memory_space<vmem>>, %arg4: memref<256x512xbf16, #tpu.memory_space<vmem>>, %arg5: memref<1x512xf32, #tpu.memory_space<vmem>>, %arg6: memref<1x128xf32, #tpu.memory_space<vmem>>, %arg7: memref<1x1xf32, #tpu.memory_space<vmem>>, %arg8: memref<8x1xf32, #tpu.memory_space<vmem>>) attributes {dimension_semantics = [], scalar_prefetch = 0 : i64, scratch_operands = 0 : i64, tpu.core_type = #tpu.core_type<tc>} {
    %c0 = arith.constant 0 : index
    %c0_0 = arith.constant 0 : index
    %0 = vector.load %arg1[%c0, %c0_0] : memref<1x512xf32, #tpu.memory_space<vmem>>, vector<1x512xf32>
    %c0_1 = arith.constant 0 : index
    %c0_2 = arith.constant 0 : index
    %1 = vector.load %arg2[%c0_1, %c0_2] : memref<1x512xf32, #tpu.memory_space<vmem>>, vector<1x512xf32>
    %c0_3 = arith.constant 0 : index
    %c0_4 = arith.constant 0 : index
    %2 = vector.load %arg5[%c0_3, %c0_4] : memref<1x512xf32, #tpu.memory_space<vmem>>, vector<1x512xf32>
    %c0_5 = arith.constant 0 : index
    %c0_6 = arith.constant 0 : index
    %3 = vector.load %arg6[%c0_5, %c0_6] : memref<1x128xf32, #tpu.memory_space<vmem>>, vector<1x128xf32>
    %c0_7 = arith.constant 0 : index
    %c0_8 = arith.constant 0 : index
    %4 = vector.load %arg7[%c0_7, %c0_8] : memref<1x1xf32, #tpu.memory_space<vmem>>, vector<1x1xf32>
    %cst = arith.constant 0.000000e+00 : f32
    %5 = vector.broadcast %cst : f32 to vector<8x128xf32>
    %c0_i32 = arith.constant 0 : i32
    %6 = arith.index_cast %c0_i32 : i32 to index
    %c0_9 = arith.constant 0 : index
    %c0_10 = arith.constant 0 : index
    %7 = vector.load %arg0[%6, %c0_9, %c0_10] : memref<8x8x1xf32, #tpu.memory_space<vmem>>, vector<1x8x1xf32>
    %8 = vector.shape_cast %7 : vector<1x8x1xf32> to vector<8x1xf32>
    %9 = vector.broadcast %8 : vector<8x1xf32> to vector<8x512xf32>
    %10 = vector.broadcast %0 : vector<1x512xf32> to vector<8x512xf32>
    %11 = arith.mulf %9, %10 : vector<8x512xf32>
    %12 = vector.broadcast %1 : vector<1x512xf32> to vector<8x512xf32>
    %13 = arith.addf %11, %12 : vector<8x512xf32>
    %14 = arith.truncf %5 : vector<8x128xf32> to vector<8x128xbf16>
    %c0_11 = arith.constant 0 : index
    %c0_12 = arith.constant 0 : index
    %15 = vector.load %arg3[%c0_11, %c0_12] : memref<128x512xbf16, #tpu.memory_space<vmem>>, vector<128x512xbf16>
    %cst_13 = arith.constant dense<0.000000e+00> : vector<8x512xf32>
    %16 = tpu.matmul %14, %15, %cst_13 {dimension_numbers = #tpu.dot_dimension_numbers<[1], [0], [0], [1], [0, 0, 1, 1], [], []>} : vector<8x128xbf16>, vector<128x512xbf16>, vector<8x512xf32> -> vector<8x512xf32>
    %17 = arith.addf %13, %16 : vector<8x512xf32>
    %18 = vector.extract_strided_slice %17 {offsets = [0, 0], sizes = [8, 128], strides = [1, 1]} : vector<8x512xf32> to vector<8x128xf32>
    %19 = arith.negf %18 : vector<8x128xf32>
    %20 = math.exp %19 : vector<8x128xf32>
    %cst_14 = arith.constant 1.000000e+00 : f32
    %21 = vector.broadcast %cst_14 : f32 to vector<8x128xf32>
    %22 = arith.addf %21, %20 : vector<8x128xf32>
    %23 = arith.divf %21, %22 : vector<8x128xf32>
    %24 = vector.extract_strided_slice %17 {offsets = [0, 128], sizes = [8, 128], strides = [1, 1]} : vector<8x512xf32> to vector<8x128xf32>
    %25 = arith.negf %24 : vector<8x128xf32>
    %26 = math.exp %25 : vector<8x128xf32>
    %cst_15 = arith.constant 1.000000e+00 : f32
    %27 = vector.broadcast %cst_15 : f32 to vector<8x128xf32>
    %28 = arith.addf %27, %26 : vector<8x128xf32>
    %29 = arith.divf %27, %28 : vector<8x128xf32>
    %30 = vector.extract_strided_slice %17 {offsets = [0, 256], sizes = [8, 128], strides = [1, 1]} : vector<8x512xf32> to vector<8x128xf32>
    %31 = math.tanh %30 : vector<8x128xf32>
    %32 = vector.extract_strided_slice %17 {offsets = [0, 384], sizes = [8, 128], strides = [1, 1]} : vector<8x512xf32> to vector<8x128xf32>
    %33 = arith.negf %32 : vector<8x128xf32>
    %34 = math.exp %33 : vector<8x128xf32>
    %cst_16 = arith.constant 1.000000e+00 : f32
    %35 = vector.broadcast %cst_16 : f32 to vector<8x128xf32>
    %36 = arith.addf %35, %34 : vector<8x128xf32>
    %37 = arith.divf %35, %36 : vector<8x128xf32>
    %38 = arith.mulf %29, %5 : vector<8x128xf32>
    %39 = arith.mulf %23, %31 : vector<8x128xf32>
    %40 = arith.addf %38, %39 : vector<8x128xf32>
    %41 = math.tanh %40 : vector<8x128xf32>
    %42 = arith.mulf %37, %41 : vector<8x128xf32>
    %43 = tpu.concatenate %42, %5 in 1 : vector<8x128xf32>, vector<8x128xf32> -> vector<8x256xf32>
    %44 = arith.truncf %43 : vector<8x256xf32> to vector<8x256xbf16>
    %c0_17 = arith.constant 0 : index
    %c0_18 = arith.constant 0 : index
    %45 = vector.load %arg4[%c0_17, %c0_18] : memref<256x512xbf16, #tpu.memory_space<vmem>>, vector<256x512xbf16>
    %cst_19 = arith.constant dense<0.000000e+00> : vector<8x512xf32>
    %46 = tpu.matmul %44, %45, %cst_19 {dimension_numbers = #tpu.dot_dimension_numbers<[1], [0], [0], [1], [0, 0, 1, 1], [], []>} : vector<8x256xbf16>, vector<256x512xbf16>, vector<8x512xf32> -> vector<8x512xf32>
    %47 = vector.broadcast %2 : vector<1x512xf32> to vector<8x512xf32>
    %48 = arith.addf %46, %47 : vector<8x512xf32>
    %49 = vector.extract_strided_slice %48 {offsets = [0, 0], sizes = [8, 128], strides = [1, 1]} : vector<8x512xf32> to vector<8x128xf32>
    %50 = arith.negf %49 : vector<8x128xf32>
    %51 = math.exp %50 : vector<8x128xf32>
    %cst_20 = arith.constant 1.000000e+00 : f32
    %52 = vector.broadcast %cst_20 : f32 to vector<8x128xf32>
    %53 = arith.addf %52, %51 : vector<8x128xf32>
    %54 = arith.divf %52, %53 : vector<8x128xf32>
    %55 = vector.extract_strided_slice %48 {offsets = [0, 128], sizes = [8, 128], strides = [1, 1]} : vector<8x512xf32> to vector<8x128xf32>
    %56 = arith.negf %55 : vector<8x128xf32>
    %57 = math.exp %56 : vector<8x128xf32>
    %cst_21 = arith.constant 1.000000e+00 : f32
    %58 = vector.broadcast %cst_21 : f32 to vector<8x128xf32>
    %59 = arith.addf %58, %57 : vector<8x128xf32>
    %60 = arith.divf %58, %59 : vector<8x128xf32>
    %61 = vector.extract_strided_slice %48 {offsets = [0, 256], sizes = [8, 128], strides = [1, 1]} : vector<8x512xf32> to vector<8x128xf32>
    %62 = math.tanh %61 : vector<8x128xf32>
    %63 = vector.extract_strided_slice %48 {offsets = [0, 384], sizes = [8, 128], strides = [1, 1]} : vector<8x512xf32> to vector<8x128xf32>
    %64 = arith.negf %63 : vector<8x128xf32>
    %65 = math.exp %64 : vector<8x128xf32>
    %cst_22 = arith.constant 1.000000e+00 : f32
    %66 = vector.broadcast %cst_22 : f32 to vector<8x128xf32>
    %67 = arith.addf %66, %65 : vector<8x128xf32>
    %68 = arith.divf %66, %67 : vector<8x128xf32>
    %69 = arith.mulf %60, %5 : vector<8x128xf32>
    %70 = arith.mulf %54, %62 : vector<8x128xf32>
    %71 = arith.addf %69, %70 : vector<8x128xf32>
    %72 = math.tanh %71 : vector<8x128xf32>
    %73 = arith.mulf %68, %72 : vector<8x128xf32>
    %c1_i32 = arith.constant 1 : i32
    %74 = arith.index_cast %c1_i32 : i32 to index
    %c0_23 = arith.constant 0 : index
    %c0_24 = arith.constant 0 : index
    %75 = vector.load %arg0[%74, %c0_23, %c0_24] : memref<8x8x1xf32, #tpu.memory_space<vmem>>, vector<1x8x1xf32>
    %76 = vector.shape_cast %75 : vector<1x8x1xf32> to vector<8x1xf32>
    %77 = vector.broadcast %76 : vector<8x1xf32> to vector<8x512xf32>
    %78 = vector.broadcast %0 : vector<1x512xf32> to vector<8x512xf32>
    %79 = arith.mulf %77, %78 : vector<8x512xf32>
    %80 = vector.broadcast %1 : vector<1x512xf32> to vector<8x512xf32>
    %81 = arith.addf %79, %80 : vector<8x512xf32>
    %82 = arith.truncf %42 : vector<8x128xf32> to vector<8x128xbf16>
    %c0_25 = arith.constant 0 : index
    %c0_26 = arith.constant 0 : index
    %83 = vector.load %arg3[%c0_25, %c0_26] : memref<128x512xbf16, #tpu.memory_space<vmem>>, vector<128x512xbf16>
    %cst_27 = arith.constant dense<0.000000e+00> : vector<8x512xf32>
    %84 = tpu.matmul %82, %83, %cst_27 {dimension_numbers = #tpu.dot_dimension_numbers<[1], [0], [0], [1], [0, 0, 1, 1], [], []>} : vector<8x128xbf16>, vector<128x512xbf16>, vector<8x512xf32> -> vector<8x512xf32>
    %85 = arith.addf %81, %84 : vector<8x512xf32>
    %86 = vector.extract_strided_slice %85 {offsets = [0, 0], sizes = [8, 128], strides = [1, 1]} : vector<8x512xf32> to vector<8x128xf32>
    %87 = arith.negf %86 : vector<8x128xf32>
    %88 = math.exp %87 : vector<8x128xf32>
    %cst_28 = arith.constant 1.000000e+00 : f32
    %89 = vector.broadcast %cst_28 : f32 to vector<8x128xf32>
    %90 = arith.addf %89, %88 : vector<8x128xf32>
    %91 = arith.divf %89, %90 : vector<8x128xf32>
    %92 = vector.extract_strided_slice %85 {offsets = [0, 128], sizes = [8, 128], strides = [1, 1]} : vector<8x512xf32> to vector<8x128xf32>
    %93 = arith.negf %92 : vector<8x128xf32>
    %94 = math.exp %93 : vector<8x128xf32>
    %cst_29 = arith.constant 1.000000e+00 : f32
    %95 = vector.broadcast %cst_29 : f32 to vector<8x128xf32>
    %96 = arith.addf %95, %94 : vector<8x128xf32>
    %97 = arith.divf %95, %96 : vector<8x128xf32>
    %98 = vector.extract_strided_slice %85 {offsets = [0, 256], sizes = [8, 128], strides = [1, 1]} : vector<8x512xf32> to vector<8x128xf32>
    %99 = math.tanh %98 : vector<8x128xf32>
    %100 = vector.extract_strided_slice %85 {offsets = [0, 384], sizes = [8, 128], strides = [1, 1]} : vector<8x512xf32> to vector<8x128xf32>
    %101 = arith.negf %100 : vector<8x128xf32>
    %102 = math.exp %101 : vector<8x128xf32>
    %cst_30 = arith.constant 1.000000e+00 : f32
    %103 = vector.broadcast %cst_30 : f32 to vector<8x128xf32>
    %104 = arith.addf %103, %102 : vector<8x128xf32>
    %105 = arith.divf %103, %104 : vector<8x128xf32>
    %106 = arith.mulf %97, %40 : vector<8x128xf32>
    %107 = arith.mulf %91, %99 : vector<8x128xf32>
    %108 = arith.addf %106, %107 : vector<8x128xf32>
    %109 = math.tanh %108 : vector<8x128xf32>
    %110 = arith.mulf %105, %109 : vector<8x128xf32>
    %111 = tpu.concatenate %110, %73 in 1 : vector<8x128xf32>, vector<8x128xf32> -> vector<8x256xf32>
    %112 = arith.truncf %111 : vector<8x256xf32> to vector<8x256xbf16>
    %c0_31 = arith.constant 0 : index
    %c0_32 = arith.constant 0 : index
    %113 = vector.load %arg4[%c0_31, %c0_32] : memref<256x512xbf16, #tpu.memory_space<vmem>>, vector<256x512xbf16>
    %cst_33 = arith.constant dense<0.000000e+00> : vector<8x512xf32>
    %114 = tpu.matmul %112, %113, %cst_33 {dimension_numbers = #tpu.dot_dimension_numbers<[1], [0], [0], [1], [0, 0, 1, 1], [], []>} : vector<8x256xbf16>, vector<256x512xbf16>, vector<8x512xf32> -> vector<8x512xf32>
    %115 = vector.broadcast %2 : vector<1x512xf32> to vector<8x512xf32>
    %116 = arith.addf %114, %115 : vector<8x512xf32>
    %117 = vector.extract_strided_slice %116 {offsets = [0, 0], sizes = [8, 128], strides = [1, 1]} : vector<8x512xf32> to vector<8x128xf32>
    %118 = arith.negf %117 : vector<8x128xf32>
    %119 = math.exp %118 : vector<8x128xf32>
    %cst_34 = arith.constant 1.000000e+00 : f32
    %120 = vector.broadcast %cst_34 : f32 to vector<8x128xf32>
    %121 = arith.addf %120, %119 : vector<8x128xf32>
    %122 = arith.divf %120, %121 : vector<8x128xf32>
    %123 = vector.extract_strided_slice %116 {offsets = [0, 128], sizes = [8, 128], strides = [1, 1]} : vector<8x512xf32> to vector<8x128xf32>
    %124 = arith.negf %123 : vector<8x128xf32>
    %125 = math.exp %124 : vector<8x128xf32>
    %cst_35 = arith.constant 1.000000e+00 : f32
    %126 = vector.broadcast %cst_35 : f32 to vector<8x128xf32>
    %127 = arith.addf %126, %125 : vector<8x128xf32>
    %128 = arith.divf %126, %127 : vector<8x128xf32>
    %129 = vector.extract_strided_slice %116 {offsets = [0, 256], sizes = [8, 128], strides = [1, 1]} : vector<8x512xf32> to vector<8x128xf32>
    %130 = math.tanh %129 : vector<8x128xf32>
    %131 = vector.extract_strided_slice %116 {offsets = [0, 384], sizes = [8, 128], strides = [1, 1]} : vector<8x512xf32> to vector<8x128xf32>
    %132 = arith.negf %131 : vector<8x128xf32>
    %133 = math.exp %132 : vector<8x128xf32>
    %cst_36 = arith.constant 1.000000e+00 : f32
    %134 = vector.broadcast %cst_36 : f32 to vector<8x128xf32>
    %135 = arith.addf %134, %133 : vector<8x128xf32>
    %136 = arith.divf %134, %135 : vector<8x128xf32>
    %137 = arith.mulf %128, %71 : vector<8x128xf32>
    %138 = arith.mulf %122, %130 : vector<8x128xf32>
    %139 = arith.addf %137, %138 : vector<8x128xf32>
    %140 = math.tanh %139 : vector<8x128xf32>
    %141 = arith.mulf %136, %140 : vector<8x128xf32>
    %c2_i32 = arith.constant 2 : i32
    %142 = arith.index_cast %c2_i32 : i32 to index
    %c0_37 = arith.constant 0 : index
    %c0_38 = arith.constant 0 : index
    %143 = vector.load %arg0[%142, %c0_37, %c0_38] : memref<8x8x1xf32, #tpu.memory_space<vmem>>, vector<1x8x1xf32>
    %144 = vector.shape_cast %143 : vector<1x8x1xf32> to vector<8x1xf32>
    %145 = vector.broadcast %144 : vector<8x1xf32> to vector<8x512xf32>
    %146 = vector.broadcast %0 : vector<1x512xf32> to vector<8x512xf32>
    %147 = arith.mulf %145, %146 : vector<8x512xf32>
    %148 = vector.broadcast %1 : vector<1x512xf32> to vector<8x512xf32>
    %149 = arith.addf %147, %148 : vector<8x512xf32>
    %150 = arith.truncf %110 : vector<8x128xf32> to vector<8x128xbf16>
    %c0_39 = arith.constant 0 : index
    %c0_40 = arith.constant 0 : index
    %151 = vector.load %arg3[%c0_39, %c0_40] : memref<128x512xbf16, #tpu.memory_space<vmem>>, vector<128x512xbf16>
    %cst_41 = arith.constant dense<0.000000e+00> : vector<8x512xf32>
    %152 = tpu.matmul %150, %151, %cst_41 {dimension_numbers = #tpu.dot_dimension_numbers<[1], [0], [0], [1], [0, 0, 1, 1], [], []>} : vector<8x128xbf16>, vector<128x512xbf16>, vector<8x512xf32> -> vector<8x512xf32>
    %153 = arith.addf %149, %152 : vector<8x512xf32>
    %154 = vector.extract_strided_slice %153 {offsets = [0, 0], sizes = [8, 128], strides = [1, 1]} : vector<8x512xf32> to vector<8x128xf32>
    %155 = arith.negf %154 : vector<8x128xf32>
    %156 = math.exp %155 : vector<8x128xf32>
    %cst_42 = arith.constant 1.000000e+00 : f32
    %157 = vector.broadcast %cst_42 : f32 to vector<8x128xf32>
    %158 = arith.addf %157, %156 : vector<8x128xf32>
    %159 = arith.divf %157, %158 : vector<8x128xf32>
    %160 = vector.extract_strided_slice %153 {offsets = [0, 128], sizes = [8, 128], strides = [1, 1]} : vector<8x512xf32> to vector<8x128xf32>
    %161 = arith.negf %160 : vector<8x128xf32>
    %162 = math.exp %161 : vector<8x128xf32>
    %cst_43 = arith.constant 1.000000e+00 : f32
    %163 = vector.broadcast %cst_43 : f32 to vector<8x128xf32>
    %164 = arith.addf %163, %162 : vector<8x128xf32>
    %165 = arith.divf %163, %164 : vector<8x128xf32>
    %166 = vector.extract_strided_slice %153 {offsets = [0, 256], sizes = [8, 128], strides = [1, 1]} : vector<8x512xf32> to vector<8x128xf32>
    %167 = math.tanh %166 : vector<8x128xf32>
    %168 = vector.extract_strided_slice %153 {offsets = [0, 384], sizes = [8, 128], strides = [1, 1]} : vector<8x512xf32> to vector<8x128xf32>
    %169 = arith.negf %168 : vector<8x128xf32>
    %170 = math.exp %169 : vector<8x128xf32>
    %cst_44 = arith.constant 1.000000e+00 : f32
    %171 = vector.broadcast %cst_44 : f32 to vector<8x128xf32>
    %172 = arith.addf %171, %170 : vector<8x128xf32>
    %173 = arith.divf %171, %172 : vector<8x128xf32>
    %174 = arith.mulf %165, %108 : vector<8x128xf32>
    %175 = arith.mulf %159, %167 : vector<8x128xf32>
    %176 = arith.addf %174, %175 : vector<8x128xf32>
    %177 = math.tanh %176 : vector<8x128xf32>
    %178 = arith.mulf %173, %177 : vector<8x128xf32>
    %179 = tpu.concatenate %178, %141 in 1 : vector<8x128xf32>, vector<8x128xf32> -> vector<8x256xf32>
    %180 = arith.truncf %179 : vector<8x256xf32> to vector<8x256xbf16>
    %c0_45 = arith.constant 0 : index
    %c0_46 = arith.constant 0 : index
    %181 = vector.load %arg4[%c0_45, %c0_46] : memref<256x512xbf16, #tpu.memory_space<vmem>>, vector<256x512xbf16>
    %cst_47 = arith.constant dense<0.000000e+00> : vector<8x512xf32>
    %182 = tpu.matmul %180, %181, %cst_47 {dimension_numbers = #tpu.dot_dimension_numbers<[1], [0], [0], [1], [0, 0, 1, 1], [], []>} : vector<8x256xbf16>, vector<256x512xbf16>, vector<8x512xf32> -> vector<8x512xf32>
    %183 = vector.broadcast %2 : vector<1x512xf32> to vector<8x512xf32>
    %184 = arith.addf %182, %183 : vector<8x512xf32>
    %185 = vector.extract_strided_slice %184 {offsets = [0, 0], sizes = [8, 128], strides = [1, 1]} : vector<8x512xf32> to vector<8x128xf32>
    %186 = arith.negf %185 : vector<8x128xf32>
    %187 = math.exp %186 : vector<8x128xf32>
    %cst_48 = arith.constant 1.000000e+00 : f32
    %188 = vector.broadcast %cst_48 : f32 to vector<8x128xf32>
    %189 = arith.addf %188, %187 : vector<8x128xf32>
    %190 = arith.divf %188, %189 : vector<8x128xf32>
    %191 = vector.extract_strided_slice %184 {offsets = [0, 128], sizes = [8, 128], strides = [1, 1]} : vector<8x512xf32> to vector<8x128xf32>
    %192 = arith.negf %191 : vector<8x128xf32>
    %193 = math.exp %192 : vector<8x128xf32>
    %cst_49 = arith.constant 1.000000e+00 : f32
    %194 = vector.broadcast %cst_49 : f32 to vector<8x128xf32>
    %195 = arith.addf %194, %193 : vector<8x128xf32>
    %196 = arith.divf %194, %195 : vector<8x128xf32>
    %197 = vector.extract_strided_slice %184 {offsets = [0, 256], sizes = [8, 128], strides = [1, 1]} : vector<8x512xf32> to vector<8x128xf32>
    %198 = math.tanh %197 : vector<8x128xf32>
    %199 = vector.extract_strided_slice %184 {offsets = [0, 384], sizes = [8, 128], strides = [1, 1]} : vector<8x512xf32> to vector<8x128xf32>
    %200 = arith.negf %199 : vector<8x128xf32>
    %201 = math.exp %200 : vector<8x128xf32>
    %cst_50 = arith.constant 1.000000e+00 : f32
    %202 = vector.broadcast %cst_50 : f32 to vector<8x128xf32>
    %203 = arith.addf %202, %201 : vector<8x128xf32>
    %204 = arith.divf %202, %203 : vector<8x128xf32>
    %205 = arith.mulf %196, %139 : vector<8x128xf32>
    %206 = arith.mulf %190, %198 : vector<8x128xf32>
    %207 = arith.addf %205, %206 : vector<8x128xf32>
    %208 = math.tanh %207 : vector<8x128xf32>
    %209 = arith.mulf %204, %208 : vector<8x128xf32>
    %c3_i32 = arith.constant 3 : i32
    %210 = arith.index_cast %c3_i32 : i32 to index
    %c0_51 = arith.constant 0 : index
    %c0_52 = arith.constant 0 : index
    %211 = vector.load %arg0[%210, %c0_51, %c0_52] : memref<8x8x1xf32, #tpu.memory_space<vmem>>, vector<1x8x1xf32>
    %212 = vector.shape_cast %211 : vector<1x8x1xf32> to vector<8x1xf32>
    %213 = vector.broadcast %212 : vector<8x1xf32> to vector<8x512xf32>
    %214 = vector.broadcast %0 : vector<1x512xf32> to vector<8x512xf32>
    %215 = arith.mulf %213, %214 : vector<8x512xf32>
    %216 = vector.broadcast %1 : vector<1x512xf32> to vector<8x512xf32>
    %217 = arith.addf %215, %216 : vector<8x512xf32>
    %218 = arith.truncf %178 : vector<8x128xf32> to vector<8x128xbf16>
    %c0_53 = arith.constant 0 : index
    %c0_54 = arith.constant 0 : index
    %219 = vector.load %arg3[%c0_53, %c0_54] : memref<128x512xbf16, #tpu.memory_space<vmem>>, vector<128x512xbf16>
    %cst_55 = arith.constant dense<0.000000e+00> : vector<8x512xf32>
    %220 = tpu.matmul %218, %219, %cst_55 {dimension_numbers = #tpu.dot_dimension_numbers<[1], [0], [0], [1], [0, 0, 1, 1], [], []>} : vector<8x128xbf16>, vector<128x512xbf16>, vector<8x512xf32> -> vector<8x512xf32>
    %221 = arith.addf %217, %220 : vector<8x512xf32>
    %222 = vector.extract_strided_slice %221 {offsets = [0, 0], sizes = [8, 128], strides = [1, 1]} : vector<8x512xf32> to vector<8x128xf32>
    %223 = arith.negf %222 : vector<8x128xf32>
    %224 = math.exp %223 : vector<8x128xf32>
    %cst_56 = arith.constant 1.000000e+00 : f32
    %225 = vector.broadcast %cst_56 : f32 to vector<8x128xf32>
    %226 = arith.addf %225, %224 : vector<8x128xf32>
    %227 = arith.divf %225, %226 : vector<8x128xf32>
    %228 = vector.extract_strided_slice %221 {offsets = [0, 128], sizes = [8, 128], strides = [1, 1]} : vector<8x512xf32> to vector<8x128xf32>
    %229 = arith.negf %228 : vector<8x128xf32>
    %230 = math.exp %229 : vector<8x128xf32>
    %cst_57 = arith.constant 1.000000e+00 : f32
    %231 = vector.broadcast %cst_57 : f32 to vector<8x128xf32>
    %232 = arith.addf %231, %230 : vector<8x128xf32>
    %233 = arith.divf %231, %232 : vector<8x128xf32>
    %234 = vector.extract_strided_slice %221 {offsets = [0, 256], sizes = [8, 128], strides = [1, 1]} : vector<8x512xf32> to vector<8x128xf32>
    %235 = math.tanh %234 : vector<8x128xf32>
    %236 = vector.extract_strided_slice %221 {offsets = [0, 384], sizes = [8, 128], strides = [1, 1]} : vector<8x512xf32> to vector<8x128xf32>
    %237 = arith.negf %236 : vector<8x128xf32>
    %238 = math.exp %237 : vector<8x128xf32>
    %cst_58 = arith.constant 1.000000e+00 : f32
    %239 = vector.broadcast %cst_58 : f32 to vector<8x128xf32>
    %240 = arith.addf %239, %238 : vector<8x128xf32>
    %241 = arith.divf %239, %240 : vector<8x128xf32>
    %242 = arith.mulf %233, %176 : vector<8x128xf32>
    %243 = arith.mulf %227, %235 : vector<8x128xf32>
    %244 = arith.addf %242, %243 : vector<8x128xf32>
    %245 = math.tanh %244 : vector<8x128xf32>
    %246 = arith.mulf %241, %245 : vector<8x128xf32>
    %247 = tpu.concatenate %246, %209 in 1 : vector<8x128xf32>, vector<8x128xf32> -> vector<8x256xf32>
    %248 = arith.truncf %247 : vector<8x256xf32> to vector<8x256xbf16>
    %c0_59 = arith.constant 0 : index
    %c0_60 = arith.constant 0 : index
    %249 = vector.load %arg4[%c0_59, %c0_60] : memref<256x512xbf16, #tpu.memory_space<vmem>>, vector<256x512xbf16>
    %cst_61 = arith.constant dense<0.000000e+00> : vector<8x512xf32>
    %250 = tpu.matmul %248, %249, %cst_61 {dimension_numbers = #tpu.dot_dimension_numbers<[1], [0], [0], [1], [0, 0, 1, 1], [], []>} : vector<8x256xbf16>, vector<256x512xbf16>, vector<8x512xf32> -> vector<8x512xf32>
    %251 = vector.broadcast %2 : vector<1x512xf32> to vector<8x512xf32>
    %252 = arith.addf %250, %251 : vector<8x512xf32>
    %253 = vector.extract_strided_slice %252 {offsets = [0, 0], sizes = [8, 128], strides = [1, 1]} : vector<8x512xf32> to vector<8x128xf32>
    %254 = arith.negf %253 : vector<8x128xf32>
    %255 = math.exp %254 : vector<8x128xf32>
    %cst_62 = arith.constant 1.000000e+00 : f32
    %256 = vector.broadcast %cst_62 : f32 to vector<8x128xf32>
    %257 = arith.addf %256, %255 : vector<8x128xf32>
    %258 = arith.divf %256, %257 : vector<8x128xf32>
    %259 = vector.extract_strided_slice %252 {offsets = [0, 128], sizes = [8, 128], strides = [1, 1]} : vector<8x512xf32> to vector<8x128xf32>
    %260 = arith.negf %259 : vector<8x128xf32>
    %261 = math.exp %260 : vector<8x128xf32>
    %cst_63 = arith.constant 1.000000e+00 : f32
    %262 = vector.broadcast %cst_63 : f32 to vector<8x128xf32>
    %263 = arith.addf %262, %261 : vector<8x128xf32>
    %264 = arith.divf %262, %263 : vector<8x128xf32>
    %265 = vector.extract_strided_slice %252 {offsets = [0, 256], sizes = [8, 128], strides = [1, 1]} : vector<8x512xf32> to vector<8x128xf32>
    %266 = math.tanh %265 : vector<8x128xf32>
    %267 = vector.extract_strided_slice %252 {offsets = [0, 384], sizes = [8, 128], strides = [1, 1]} : vector<8x512xf32> to vector<8x128xf32>
    %268 = arith.negf %267 : vector<8x128xf32>
    %269 = math.exp %268 : vector<8x128xf32>
    %cst_64 = arith.constant 1.000000e+00 : f32
    %270 = vector.broadcast %cst_64 : f32 to vector<8x128xf32>
    %271 = arith.addf %270, %269 : vector<8x128xf32>
    %272 = arith.divf %270, %271 : vector<8x128xf32>
    %273 = arith.mulf %264, %207 : vector<8x128xf32>
    %274 = arith.mulf %258, %266 : vector<8x128xf32>
    %275 = arith.addf %273, %274 : vector<8x128xf32>
    %276 = math.tanh %275 : vector<8x128xf32>
    %277 = arith.mulf %272, %276 : vector<8x128xf32>
    %c4_i32 = arith.constant 4 : i32
    %278 = arith.index_cast %c4_i32 : i32 to index
    %c0_65 = arith.constant 0 : index
    %c0_66 = arith.constant 0 : index
    %279 = vector.load %arg0[%278, %c0_65, %c0_66] : memref<8x8x1xf32, #tpu.memory_space<vmem>>, vector<1x8x1xf32>
    %280 = vector.shape_cast %279 : vector<1x8x1xf32> to vector<8x1xf32>
    %281 = vector.broadcast %280 : vector<8x1xf32> to vector<8x512xf32>
    %282 = vector.broadcast %0 : vector<1x512xf32> to vector<8x512xf32>
    %283 = arith.mulf %281, %282 : vector<8x512xf32>
    %284 = vector.broadcast %1 : vector<1x512xf32> to vector<8x512xf32>
    %285 = arith.addf %283, %284 : vector<8x512xf32>
    %286 = arith.truncf %246 : vector<8x128xf32> to vector<8x128xbf16>
    %c0_67 = arith.constant 0 : index
    %c0_68 = arith.constant 0 : index
    %287 = vector.load %arg3[%c0_67, %c0_68] : memref<128x512xbf16, #tpu.memory_space<vmem>>, vector<128x512xbf16>
    %cst_69 = arith.constant dense<0.000000e+00> : vector<8x512xf32>
    %288 = tpu.matmul %286, %287, %cst_69 {dimension_numbers = #tpu.dot_dimension_numbers<[1], [0], [0], [1], [0, 0, 1, 1], [], []>} : vector<8x128xbf16>, vector<128x512xbf16>, vector<8x512xf32> -> vector<8x512xf32>
    %289 = arith.addf %285, %288 : vector<8x512xf32>
    %290 = vector.extract_strided_slice %289 {offsets = [0, 0], sizes = [8, 128], strides = [1, 1]} : vector<8x512xf32> to vector<8x128xf32>
    %291 = arith.negf %290 : vector<8x128xf32>
    %292 = math.exp %291 : vector<8x128xf32>
    %cst_70 = arith.constant 1.000000e+00 : f32
    %293 = vector.broadcast %cst_70 : f32 to vector<8x128xf32>
    %294 = arith.addf %293, %292 : vector<8x128xf32>
    %295 = arith.divf %293, %294 : vector<8x128xf32>
    %296 = vector.extract_strided_slice %289 {offsets = [0, 128], sizes = [8, 128], strides = [1, 1]} : vector<8x512xf32> to vector<8x128xf32>
    %297 = arith.negf %296 : vector<8x128xf32>
    %298 = math.exp %297 : vector<8x128xf32>
    %cst_71 = arith.constant 1.000000e+00 : f32
    %299 = vector.broadcast %cst_71 : f32 to vector<8x128xf32>
    %300 = arith.addf %299, %298 : vector<8x128xf32>
    %301 = arith.divf %299, %300 : vector<8x128xf32>
    %302 = vector.extract_strided_slice %289 {offsets = [0, 256], sizes = [8, 128], strides = [1, 1]} : vector<8x512xf32> to vector<8x128xf32>
    %303 = math.tanh %302 : vector<8x128xf32>
    %304 = vector.extract_strided_slice %289 {offsets = [0, 384], sizes = [8, 128], strides = [1, 1]} : vector<8x512xf32> to vector<8x128xf32>
    %305 = arith.negf %304 : vector<8x128xf32>
    %306 = math.exp %305 : vector<8x128xf32>
    %cst_72 = arith.constant 1.000000e+00 : f32
    %307 = vector.broadcast %cst_72 : f32 to vector<8x128xf32>
    %308 = arith.addf %307, %306 : vector<8x128xf32>
    %309 = arith.divf %307, %308 : vector<8x128xf32>
    %310 = arith.mulf %301, %244 : vector<8x128xf32>
    %311 = arith.mulf %295, %303 : vector<8x128xf32>
    %312 = arith.addf %310, %311 : vector<8x128xf32>
    %313 = math.tanh %312 : vector<8x128xf32>
    %314 = arith.mulf %309, %313 : vector<8x128xf32>
    %315 = tpu.concatenate %314, %277 in 1 : vector<8x128xf32>, vector<8x128xf32> -> vector<8x256xf32>
    %316 = arith.truncf %315 : vector<8x256xf32> to vector<8x256xbf16>
    %c0_73 = arith.constant 0 : index
    %c0_74 = arith.constant 0 : index
    %317 = vector.load %arg4[%c0_73, %c0_74] : memref<256x512xbf16, #tpu.memory_space<vmem>>, vector<256x512xbf16>
    %cst_75 = arith.constant dense<0.000000e+00> : vector<8x512xf32>
    %318 = tpu.matmul %316, %317, %cst_75 {dimension_numbers = #tpu.dot_dimension_numbers<[1], [0], [0], [1], [0, 0, 1, 1], [], []>} : vector<8x256xbf16>, vector<256x512xbf16>, vector<8x512xf32> -> vector<8x512xf32>
    %319 = vector.broadcast %2 : vector<1x512xf32> to vector<8x512xf32>
    %320 = arith.addf %318, %319 : vector<8x512xf32>
    %321 = vector.extract_strided_slice %320 {offsets = [0, 0], sizes = [8, 128], strides = [1, 1]} : vector<8x512xf32> to vector<8x128xf32>
    %322 = arith.negf %321 : vector<8x128xf32>
    %323 = math.exp %322 : vector<8x128xf32>
    %cst_76 = arith.constant 1.000000e+00 : f32
    %324 = vector.broadcast %cst_76 : f32 to vector<8x128xf32>
    %325 = arith.addf %324, %323 : vector<8x128xf32>
    %326 = arith.divf %324, %325 : vector<8x128xf32>
    %327 = vector.extract_strided_slice %320 {offsets = [0, 128], sizes = [8, 128], strides = [1, 1]} : vector<8x512xf32> to vector<8x128xf32>
    %328 = arith.negf %327 : vector<8x128xf32>
    %329 = math.exp %328 : vector<8x128xf32>
    %cst_77 = arith.constant 1.000000e+00 : f32
    %330 = vector.broadcast %cst_77 : f32 to vector<8x128xf32>
    %331 = arith.addf %330, %329 : vector<8x128xf32>
    %332 = arith.divf %330, %331 : vector<8x128xf32>
    %333 = vector.extract_strided_slice %320 {offsets = [0, 256], sizes = [8, 128], strides = [1, 1]} : vector<8x512xf32> to vector<8x128xf32>
    %334 = math.tanh %333 : vector<8x128xf32>
    %335 = vector.extract_strided_slice %320 {offsets = [0, 384], sizes = [8, 128], strides = [1, 1]} : vector<8x512xf32> to vector<8x128xf32>
    %336 = arith.negf %335 : vector<8x128xf32>
    %337 = math.exp %336 : vector<8x128xf32>
    %cst_78 = arith.constant 1.000000e+00 : f32
    %338 = vector.broadcast %cst_78 : f32 to vector<8x128xf32>
    %339 = arith.addf %338, %337 : vector<8x128xf32>
    %340 = arith.divf %338, %339 : vector<8x128xf32>
    %341 = arith.mulf %332, %275 : vector<8x128xf32>
    %342 = arith.mulf %326, %334 : vector<8x128xf32>
    %343 = arith.addf %341, %342 : vector<8x128xf32>
    %344 = math.tanh %343 : vector<8x128xf32>
    %345 = arith.mulf %340, %344 : vector<8x128xf32>
    %c5_i32 = arith.constant 5 : i32
    %346 = arith.index_cast %c5_i32 : i32 to index
    %c0_79 = arith.constant 0 : index
    %c0_80 = arith.constant 0 : index
    %347 = vector.load %arg0[%346, %c0_79, %c0_80] : memref<8x8x1xf32, #tpu.memory_space<vmem>>, vector<1x8x1xf32>
    %348 = vector.shape_cast %347 : vector<1x8x1xf32> to vector<8x1xf32>
    %349 = vector.broadcast %348 : vector<8x1xf32> to vector<8x512xf32>
    %350 = vector.broadcast %0 : vector<1x512xf32> to vector<8x512xf32>
    %351 = arith.mulf %349, %350 : vector<8x512xf32>
    %352 = vector.broadcast %1 : vector<1x512xf32> to vector<8x512xf32>
    %353 = arith.addf %351, %352 : vector<8x512xf32>
    %354 = arith.truncf %314 : vector<8x128xf32> to vector<8x128xbf16>
    %c0_81 = arith.constant 0 : index
    %c0_82 = arith.constant 0 : index
    %355 = vector.load %arg3[%c0_81, %c0_82] : memref<128x512xbf16, #tpu.memory_space<vmem>>, vector<128x512xbf16>
    %cst_83 = arith.constant dense<0.000000e+00> : vector<8x512xf32>
    %356 = tpu.matmul %354, %355, %cst_83 {dimension_numbers = #tpu.dot_dimension_numbers<[1], [0], [0], [1], [0, 0, 1, 1], [], []>} : vector<8x128xbf16>, vector<128x512xbf16>, vector<8x512xf32> -> vector<8x512xf32>
    %357 = arith.addf %353, %356 : vector<8x512xf32>
    %358 = vector.extract_strided_slice %357 {offsets = [0, 0], sizes = [8, 128], strides = [1, 1]} : vector<8x512xf32> to vector<8x128xf32>
    %359 = arith.negf %358 : vector<8x128xf32>
    %360 = math.exp %359 : vector<8x128xf32>
    %cst_84 = arith.constant 1.000000e+00 : f32
    %361 = vector.broadcast %cst_84 : f32 to vector<8x128xf32>
    %362 = arith.addf %361, %360 : vector<8x128xf32>
    %363 = arith.divf %361, %362 : vector<8x128xf32>
    %364 = vector.extract_strided_slice %357 {offsets = [0, 128], sizes = [8, 128], strides = [1, 1]} : vector<8x512xf32> to vector<8x128xf32>
    %365 = arith.negf %364 : vector<8x128xf32>
    %366 = math.exp %365 : vector<8x128xf32>
    %cst_85 = arith.constant 1.000000e+00 : f32
    %367 = vector.broadcast %cst_85 : f32 to vector<8x128xf32>
    %368 = arith.addf %367, %366 : vector<8x128xf32>
    %369 = arith.divf %367, %368 : vector<8x128xf32>
    %370 = vector.extract_strided_slice %357 {offsets = [0, 256], sizes = [8, 128], strides = [1, 1]} : vector<8x512xf32> to vector<8x128xf32>
    %371 = math.tanh %370 : vector<8x128xf32>
    %372 = vector.extract_strided_slice %357 {offsets = [0, 384], sizes = [8, 128], strides = [1, 1]} : vector<8x512xf32> to vector<8x128xf32>
    %373 = arith.negf %372 : vector<8x128xf32>
    %374 = math.exp %373 : vector<8x128xf32>
    %cst_86 = arith.constant 1.000000e+00 : f32
    %375 = vector.broadcast %cst_86 : f32 to vector<8x128xf32>
    %376 = arith.addf %375, %374 : vector<8x128xf32>
    %377 = arith.divf %375, %376 : vector<8x128xf32>
    %378 = arith.mulf %369, %312 : vector<8x128xf32>
    %379 = arith.mulf %363, %371 : vector<8x128xf32>
    %380 = arith.addf %378, %379 : vector<8x128xf32>
    %381 = math.tanh %380 : vector<8x128xf32>
    %382 = arith.mulf %377, %381 : vector<8x128xf32>
    %383 = tpu.concatenate %382, %345 in 1 : vector<8x128xf32>, vector<8x128xf32> -> vector<8x256xf32>
    %384 = arith.truncf %383 : vector<8x256xf32> to vector<8x256xbf16>
    %c0_87 = arith.constant 0 : index
    %c0_88 = arith.constant 0 : index
    %385 = vector.load %arg4[%c0_87, %c0_88] : memref<256x512xbf16, #tpu.memory_space<vmem>>, vector<256x512xbf16>
    %cst_89 = arith.constant dense<0.000000e+00> : vector<8x512xf32>
    %386 = tpu.matmul %384, %385, %cst_89 {dimension_numbers = #tpu.dot_dimension_numbers<[1], [0], [0], [1], [0, 0, 1, 1], [], []>} : vector<8x256xbf16>, vector<256x512xbf16>, vector<8x512xf32> -> vector<8x512xf32>
    %387 = vector.broadcast %2 : vector<1x512xf32> to vector<8x512xf32>
    %388 = arith.addf %386, %387 : vector<8x512xf32>
    %389 = vector.extract_strided_slice %388 {offsets = [0, 0], sizes = [8, 128], strides = [1, 1]} : vector<8x512xf32> to vector<8x128xf32>
    %390 = arith.negf %389 : vector<8x128xf32>
    %391 = math.exp %390 : vector<8x128xf32>
    %cst_90 = arith.constant 1.000000e+00 : f32
    %392 = vector.broadcast %cst_90 : f32 to vector<8x128xf32>
    %393 = arith.addf %392, %391 : vector<8x128xf32>
    %394 = arith.divf %392, %393 : vector<8x128xf32>
    %395 = vector.extract_strided_slice %388 {offsets = [0, 128], sizes = [8, 128], strides = [1, 1]} : vector<8x512xf32> to vector<8x128xf32>
    %396 = arith.negf %395 : vector<8x128xf32>
    %397 = math.exp %396 : vector<8x128xf32>
    %cst_91 = arith.constant 1.000000e+00 : f32
    %398 = vector.broadcast %cst_91 : f32 to vector<8x128xf32>
    %399 = arith.addf %398, %397 : vector<8x128xf32>
    %400 = arith.divf %398, %399 : vector<8x128xf32>
    %401 = vector.extract_strided_slice %388 {offsets = [0, 256], sizes = [8, 128], strides = [1, 1]} : vector<8x512xf32> to vector<8x128xf32>
    %402 = math.tanh %401 : vector<8x128xf32>
    %403 = vector.extract_strided_slice %388 {offsets = [0, 384], sizes = [8, 128], strides = [1, 1]} : vector<8x512xf32> to vector<8x128xf32>
    %404 = arith.negf %403 : vector<8x128xf32>
    %405 = math.exp %404 : vector<8x128xf32>
    %cst_92 = arith.constant 1.000000e+00 : f32
    %406 = vector.broadcast %cst_92 : f32 to vector<8x128xf32>
    %407 = arith.addf %406, %405 : vector<8x128xf32>
    %408 = arith.divf %406, %407 : vector<8x128xf32>
    %409 = arith.mulf %400, %343 : vector<8x128xf32>
    %410 = arith.mulf %394, %402 : vector<8x128xf32>
    %411 = arith.addf %409, %410 : vector<8x128xf32>
    %412 = math.tanh %411 : vector<8x128xf32>
    %413 = arith.mulf %408, %412 : vector<8x128xf32>
    %c6_i32 = arith.constant 6 : i32
    %414 = arith.index_cast %c6_i32 : i32 to index
    %c0_93 = arith.constant 0 : index
    %c0_94 = arith.constant 0 : index
    %415 = vector.load %arg0[%414, %c0_93, %c0_94] : memref<8x8x1xf32, #tpu.memory_space<vmem>>, vector<1x8x1xf32>
    %416 = vector.shape_cast %415 : vector<1x8x1xf32> to vector<8x1xf32>
    %417 = vector.broadcast %416 : vector<8x1xf32> to vector<8x512xf32>
    %418 = vector.broadcast %0 : vector<1x512xf32> to vector<8x512xf32>
    %419 = arith.mulf %417, %418 : vector<8x512xf32>
    %420 = vector.broadcast %1 : vector<1x512xf32> to vector<8x512xf32>
    %421 = arith.addf %419, %420 : vector<8x512xf32>
    %422 = arith.truncf %382 : vector<8x128xf32> to vector<8x128xbf16>
    %c0_95 = arith.constant 0 : index
    %c0_96 = arith.constant 0 : index
    %423 = vector.load %arg3[%c0_95, %c0_96] : memref<128x512xbf16, #tpu.memory_space<vmem>>, vector<128x512xbf16>
    %cst_97 = arith.constant dense<0.000000e+00> : vector<8x512xf32>
    %424 = tpu.matmul %422, %423, %cst_97 {dimension_numbers = #tpu.dot_dimension_numbers<[1], [0], [0], [1], [0, 0, 1, 1], [], []>} : vector<8x128xbf16>, vector<128x512xbf16>, vector<8x512xf32> -> vector<8x512xf32>
    %425 = arith.addf %421, %424 : vector<8x512xf32>
    %426 = vector.extract_strided_slice %425 {offsets = [0, 0], sizes = [8, 128], strides = [1, 1]} : vector<8x512xf32> to vector<8x128xf32>
    %427 = arith.negf %426 : vector<8x128xf32>
    %428 = math.exp %427 : vector<8x128xf32>
    %cst_98 = arith.constant 1.000000e+00 : f32
    %429 = vector.broadcast %cst_98 : f32 to vector<8x128xf32>
    %430 = arith.addf %429, %428 : vector<8x128xf32>
    %431 = arith.divf %429, %430 : vector<8x128xf32>
    %432 = vector.extract_strided_slice %425 {offsets = [0, 128], sizes = [8, 128], strides = [1, 1]} : vector<8x512xf32> to vector<8x128xf32>
    %433 = arith.negf %432 : vector<8x128xf32>
    %434 = math.exp %433 : vector<8x128xf32>
    %cst_99 = arith.constant 1.000000e+00 : f32
    %435 = vector.broadcast %cst_99 : f32 to vector<8x128xf32>
    %436 = arith.addf %435, %434 : vector<8x128xf32>
    %437 = arith.divf %435, %436 : vector<8x128xf32>
    %438 = vector.extract_strided_slice %425 {offsets = [0, 256], sizes = [8, 128], strides = [1, 1]} : vector<8x512xf32> to vector<8x128xf32>
    %439 = math.tanh %438 : vector<8x128xf32>
    %440 = vector.extract_strided_slice %425 {offsets = [0, 384], sizes = [8, 128], strides = [1, 1]} : vector<8x512xf32> to vector<8x128xf32>
    %441 = arith.negf %440 : vector<8x128xf32>
    %442 = math.exp %441 : vector<8x128xf32>
    %cst_100 = arith.constant 1.000000e+00 : f32
    %443 = vector.broadcast %cst_100 : f32 to vector<8x128xf32>
    %444 = arith.addf %443, %442 : vector<8x128xf32>
    %445 = arith.divf %443, %444 : vector<8x128xf32>
    %446 = arith.mulf %437, %380 : vector<8x128xf32>
    %447 = arith.mulf %431, %439 : vector<8x128xf32>
    %448 = arith.addf %446, %447 : vector<8x128xf32>
    %449 = math.tanh %448 : vector<8x128xf32>
    %450 = arith.mulf %445, %449 : vector<8x128xf32>
    %451 = tpu.concatenate %450, %413 in 1 : vector<8x128xf32>, vector<8x128xf32> -> vector<8x256xf32>
    %452 = arith.truncf %451 : vector<8x256xf32> to vector<8x256xbf16>
    %c0_101 = arith.constant 0 : index
    %c0_102 = arith.constant 0 : index
    %453 = vector.load %arg4[%c0_101, %c0_102] : memref<256x512xbf16, #tpu.memory_space<vmem>>, vector<256x512xbf16>
    %cst_103 = arith.constant dense<0.000000e+00> : vector<8x512xf32>
    %454 = tpu.matmul %452, %453, %cst_103 {dimension_numbers = #tpu.dot_dimension_numbers<[1], [0], [0], [1], [0, 0, 1, 1], [], []>} : vector<8x256xbf16>, vector<256x512xbf16>, vector<8x512xf32> -> vector<8x512xf32>
    %455 = vector.broadcast %2 : vector<1x512xf32> to vector<8x512xf32>
    %456 = arith.addf %454, %455 : vector<8x512xf32>
    %457 = vector.extract_strided_slice %456 {offsets = [0, 0], sizes = [8, 128], strides = [1, 1]} : vector<8x512xf32> to vector<8x128xf32>
    %458 = arith.negf %457 : vector<8x128xf32>
    %459 = math.exp %458 : vector<8x128xf32>
    %cst_104 = arith.constant 1.000000e+00 : f32
    %460 = vector.broadcast %cst_104 : f32 to vector<8x128xf32>
    %461 = arith.addf %460, %459 : vector<8x128xf32>
    %462 = arith.divf %460, %461 : vector<8x128xf32>
    %463 = vector.extract_strided_slice %456 {offsets = [0, 128], sizes = [8, 128], strides = [1, 1]} : vector<8x512xf32> to vector<8x128xf32>
    %464 = arith.negf %463 : vector<8x128xf32>
    %465 = math.exp %464 : vector<8x128xf32>
    %cst_105 = arith.constant 1.000000e+00 : f32
    %466 = vector.broadcast %cst_105 : f32 to vector<8x128xf32>
    %467 = arith.addf %466, %465 : vector<8x128xf32>
    %468 = arith.divf %466, %467 : vector<8x128xf32>
    %469 = vector.extract_strided_slice %456 {offsets = [0, 256], sizes = [8, 128], strides = [1, 1]} : vector<8x512xf32> to vector<8x128xf32>
    %470 = math.tanh %469 : vector<8x128xf32>
    %471 = vector.extract_strided_slice %456 {offsets = [0, 384], sizes = [8, 128], strides = [1, 1]} : vector<8x512xf32> to vector<8x128xf32>
    %472 = arith.negf %471 : vector<8x128xf32>
    %473 = math.exp %472 : vector<8x128xf32>
    %cst_106 = arith.constant 1.000000e+00 : f32
    %474 = vector.broadcast %cst_106 : f32 to vector<8x128xf32>
    %475 = arith.addf %474, %473 : vector<8x128xf32>
    %476 = arith.divf %474, %475 : vector<8x128xf32>
    %477 = arith.mulf %468, %411 : vector<8x128xf32>
    %478 = arith.mulf %462, %470 : vector<8x128xf32>
    %479 = arith.addf %477, %478 : vector<8x128xf32>
    %480 = math.tanh %479 : vector<8x128xf32>
    %481 = arith.mulf %476, %480 : vector<8x128xf32>
    %c7_i32 = arith.constant 7 : i32
    %482 = arith.index_cast %c7_i32 : i32 to index
    %c0_107 = arith.constant 0 : index
    %c0_108 = arith.constant 0 : index
    %483 = vector.load %arg0[%482, %c0_107, %c0_108] : memref<8x8x1xf32, #tpu.memory_space<vmem>>, vector<1x8x1xf32>
    %484 = vector.shape_cast %483 : vector<1x8x1xf32> to vector<8x1xf32>
    %485 = vector.broadcast %484 : vector<8x1xf32> to vector<8x512xf32>
    %486 = vector.broadcast %0 : vector<1x512xf32> to vector<8x512xf32>
    %487 = arith.mulf %485, %486 : vector<8x512xf32>
    %488 = vector.broadcast %1 : vector<1x512xf32> to vector<8x512xf32>
    %489 = arith.addf %487, %488 : vector<8x512xf32>
    %490 = arith.truncf %450 : vector<8x128xf32> to vector<8x128xbf16>
    %c0_109 = arith.constant 0 : index
    %c0_110 = arith.constant 0 : index
    %491 = vector.load %arg3[%c0_109, %c0_110] : memref<128x512xbf16, #tpu.memory_space<vmem>>, vector<128x512xbf16>
    %cst_111 = arith.constant dense<0.000000e+00> : vector<8x512xf32>
    %492 = tpu.matmul %490, %491, %cst_111 {dimension_numbers = #tpu.dot_dimension_numbers<[1], [0], [0], [1], [0, 0, 1, 1], [], []>} : vector<8x128xbf16>, vector<128x512xbf16>, vector<8x512xf32> -> vector<8x512xf32>
    %493 = arith.addf %489, %492 : vector<8x512xf32>
    %494 = vector.extract_strided_slice %493 {offsets = [0, 0], sizes = [8, 128], strides = [1, 1]} : vector<8x512xf32> to vector<8x128xf32>
    %495 = arith.negf %494 : vector<8x128xf32>
    %496 = math.exp %495 : vector<8x128xf32>
    %cst_112 = arith.constant 1.000000e+00 : f32
    %497 = vector.broadcast %cst_112 : f32 to vector<8x128xf32>
    %498 = arith.addf %497, %496 : vector<8x128xf32>
    %499 = arith.divf %497, %498 : vector<8x128xf32>
    %500 = vector.extract_strided_slice %493 {offsets = [0, 128], sizes = [8, 128], strides = [1, 1]} : vector<8x512xf32> to vector<8x128xf32>
    %501 = arith.negf %500 : vector<8x128xf32>
    %502 = math.exp %501 : vector<8x128xf32>
    %cst_113 = arith.constant 1.000000e+00 : f32
    %503 = vector.broadcast %cst_113 : f32 to vector<8x128xf32>
    %504 = arith.addf %503, %502 : vector<8x128xf32>
    %505 = arith.divf %503, %504 : vector<8x128xf32>
    %506 = vector.extract_strided_slice %493 {offsets = [0, 256], sizes = [8, 128], strides = [1, 1]} : vector<8x512xf32> to vector<8x128xf32>
    %507 = math.tanh %506 : vector<8x128xf32>
    %508 = vector.extract_strided_slice %493 {offsets = [0, 384], sizes = [8, 128], strides = [1, 1]} : vector<8x512xf32> to vector<8x128xf32>
    %509 = arith.negf %508 : vector<8x128xf32>
    %510 = math.exp %509 : vector<8x128xf32>
    %cst_114 = arith.constant 1.000000e+00 : f32
    %511 = vector.broadcast %cst_114 : f32 to vector<8x128xf32>
    %512 = arith.addf %511, %510 : vector<8x128xf32>
    %513 = arith.divf %511, %512 : vector<8x128xf32>
    %514 = arith.mulf %505, %448 : vector<8x128xf32>
    %515 = arith.mulf %499, %507 : vector<8x128xf32>
    %516 = arith.addf %514, %515 : vector<8x128xf32>
    %517 = math.tanh %516 : vector<8x128xf32>
    %518 = arith.mulf %513, %517 : vector<8x128xf32>
    %519 = tpu.concatenate %518, %481 in 1 : vector<8x128xf32>, vector<8x128xf32> -> vector<8x256xf32>
    %520 = arith.truncf %519 : vector<8x256xf32> to vector<8x256xbf16>
    %c0_115 = arith.constant 0 : index
    %c0_116 = arith.constant 0 : index
    %521 = vector.load %arg4[%c0_115, %c0_116] : memref<256x512xbf16, #tpu.memory_space<vmem>>, vector<256x512xbf16>
    %cst_117 = arith.constant dense<0.000000e+00> : vector<8x512xf32>
    %522 = tpu.matmul %520, %521, %cst_117 {dimension_numbers = #tpu.dot_dimension_numbers<[1], [0], [0], [1], [0, 0, 1, 1], [], []>} : vector<8x256xbf16>, vector<256x512xbf16>, vector<8x512xf32> -> vector<8x512xf32>
    %523 = vector.broadcast %2 : vector<1x512xf32> to vector<8x512xf32>
    %524 = arith.addf %522, %523 : vector<8x512xf32>
    %525 = vector.extract_strided_slice %524 {offsets = [0, 0], sizes = [8, 128], strides = [1, 1]} : vector<8x512xf32> to vector<8x128xf32>
    %526 = arith.negf %525 : vector<8x128xf32>
    %527 = math.exp %526 : vector<8x128xf32>
    %cst_118 = arith.constant 1.000000e+00 : f32
    %528 = vector.broadcast %cst_118 : f32 to vector<8x128xf32>
    %529 = arith.addf %528, %527 : vector<8x128xf32>
    %530 = arith.divf %528, %529 : vector<8x128xf32>
    %531 = vector.extract_strided_slice %524 {offsets = [0, 128], sizes = [8, 128], strides = [1, 1]} : vector<8x512xf32> to vector<8x128xf32>
    %532 = arith.negf %531 : vector<8x128xf32>
    %533 = math.exp %532 : vector<8x128xf32>
    %cst_119 = arith.constant 1.000000e+00 : f32
    %534 = vector.broadcast %cst_119 : f32 to vector<8x128xf32>
    %535 = arith.addf %534, %533 : vector<8x128xf32>
    %536 = arith.divf %534, %535 : vector<8x128xf32>
    %537 = vector.extract_strided_slice %524 {offsets = [0, 256], sizes = [8, 128], strides = [1, 1]} : vector<8x512xf32> to vector<8x128xf32>
    %538 = math.tanh %537 : vector<8x128xf32>
    %539 = vector.extract_strided_slice %524 {offsets = [0, 384], sizes = [8, 128], strides = [1, 1]} : vector<8x512xf32> to vector<8x128xf32>
    %540 = arith.negf %539 : vector<8x128xf32>
    %541 = math.exp %540 : vector<8x128xf32>
    %cst_120 = arith.constant 1.000000e+00 : f32
    %542 = vector.broadcast %cst_120 : f32 to vector<8x128xf32>
    %543 = arith.addf %542, %541 : vector<8x128xf32>
    %544 = arith.divf %542, %543 : vector<8x128xf32>
    %545 = arith.mulf %536, %479 : vector<8x128xf32>
    %546 = arith.mulf %530, %538 : vector<8x128xf32>
    %547 = arith.addf %545, %546 : vector<8x128xf32>
    %548 = math.tanh %547 : vector<8x128xf32>
    %549 = arith.mulf %544, %548 : vector<8x128xf32>
    %c8_i32 = arith.constant 8 : i32
    %550 = vector.broadcast %3 : vector<1x128xf32> to vector<8x128xf32>
    %551 = arith.mulf %549, %550 : vector<8x128xf32>
    %cst_121 = arith.constant dense<0.000000e+00> : vector<8xf32>
    %552 = vector.multi_reduction <add>, %551, %cst_121 [1] : vector<8x128xf32> to vector<8xf32>
    %553 = vector.shape_cast %552 : vector<8xf32> to vector<8x1xf32>
    %554 = vector.broadcast %4 : vector<1x1xf32> to vector<8x1xf32>
    %555 = arith.addf %553, %554 : vector<8x1xf32>
    %c0_122 = arith.constant 0 : index
    %c0_123 = arith.constant 0 : index
    %556 = vector.load %arg8[%c0_122, %c0_123] : memref<8x1xf32, #tpu.memory_space<vmem>>, vector<8x1xf32>
    tpu.vector_store %arg8[%c0_122, %c0_123], %555 {strides = array<i32>} : memref<8x1xf32, #tpu.memory_space<vmem>>, vector<8x1xf32>,
    return
  }
}

</mosaic_0001>

<llo_original>
// kernel: lstm_model_forward.1
$region0: #{lstm_model_forward.1}
  #allocation0 [shape = 'u32[]', space=smem, size = 0x4, offset = 0x4, fixed_abs, tag = 'smem constant byte address 0x4 - core index']
  #allocation1 [shape = 'u32[144,128]{1,0:T(1,128)}', space=vmem, size = 0x12000, scoped, tag = 'internal scratch']
  #allocation2 [shape = 'f32[1,1]{1,0:T(1,128)S(1)}', space=vmem, size = 0x200, scoped, tag = 'scoped memory for lstm_model_forward.1']
  %s0 = inlined_call_operand.vmem [shape: f32[8,8,1], index: 0, kind: input, shape index: {}]
  %s1 = inlined_call_operand.vmem [shape: f32[1,512], index: 1, kind: input, shape index: {}]
  %s2 = inlined_call_operand.vmem [shape: f32[1,512], index: 2, kind: input, shape index: {}]
  %s3 = inlined_call_operand.hbm [shape: bf16[128,512], index: 3, kind: input, shape index: {}]
  %s4 = inlined_call_operand.hbm [shape: bf16[256,512], index: 4, kind: input, shape index: {}]
  %s5 = inlined_call_operand.vmem [shape: f32[1,512], index: 5, kind: input, shape index: {}]
  %s6 = inlined_call_operand.vmem [shape: f32[1,128], index: 6, kind: input, shape index: {}]
  %s7 = inlined_call_operand.<no memory space> [shape: f32[1,1], index: 7, kind: input, shape index: {}]
  %s8 = inlined_call_operand.vmem [shape: f32[8,1], index: 8, kind: output, shape index: {}]
  %s9 = sld [smem:[#allocation0]]
  $region50: #{lstm_model_forward.1} parent=0
    _
  %s11 = ssub.s32 1, %s9
  %s12 = scalar_select 0, %s11, %s9
  %v13 = vstv %s7
  %14 = vst [vmem:[#allocation2] sm:$0x1] %v13
  $region1: #{lstm_model_forward.1} parent=0
    #allocation3 [shape = 'u8[131072]{0}', space=vmem, size = 0x20000, scoped, tag = 'input window, operand 3, single buffered']
    #allocation4 [shape = 's32[1]{0}', space=sflag, size = 0x4, scoped, tag = 'scoped memory for lstm_model_forward.1']
    #allocation5 [shape = 'u8[262144]{0}', space=vmem, size = 0x40000, scoped, tag = 'input window, operand 4, single buffered']
    #allocation6 [shape = 's32[1]{0}', space=sflag, size = 0x4, scoped, tag = 'scoped memory for lstm_model_forward.1']
    %15 = vsyncpa [#allocation4], 0
    %16 = vsyncpa [#allocation6], 0
    // Predicated region
    $region2: #{lstm_model_forward.1} parent=1 // pred_check
      _
    $region3: #{lstm_model_forward.1} parent=1 // pred_check_branch
      %18 = sbr.rel (0) target = $region5
    $region4: #{lstm_model_forward.1} parent=1 // pred_region
      _
    $region5: #{lstm_model_forward.1} parent=1 // pred_fallthru
      _
    // Predicated region
    $region6: #{lstm_model_forward.1} parent=1 // pred_check
      _
    $region7: #{lstm_model_forward.1} parent=1 // pred_check_branch
      %20 = sbr.rel (0) target = $region9
    $region8: #{lstm_model_forward.1} parent=1 // pred_region
      _
    $region9: #{lstm_model_forward.1} parent=1 // pred_fallthru
      _
    // Predicated region
    $region10: #{lstm_model_forward.1} parent=1 // pred_check
      _
    $region11: #{lstm_model_forward.1} parent=1 // pred_check_branch
      %22 = sbr.rel (0) target = $region13
    $region12: #{lstm_model_forward.1} parent=1 // pred_region
      _
    $region13: #{lstm_model_forward.1} parent=1 // pred_fallthru
      _
    // Predicated region
    $region14: #{lstm_model_forward.1} parent=1 // pred_check
      _
    $region15: #{lstm_model_forward.1} parent=1 // pred_check_branch
      %24 = sbr.rel (0) target = $region17
    $region16: #{lstm_model_forward.1} parent=1 // pred_region
      %s26 = ssub.s32 4096, 4096
      %27 = vsyncadd [#allocation4], %s26
      %s28 = sshll.u32 [#allocation3], 4
      %s29 = int_to_ptr.vmem [resolvable:$true] %s28
      %34 = dma.hbm_to_vmem [thread:$0]  %s3, 4096, %s29, [#allocation4], 256, 256, 16
    $region17: #{lstm_model_forward.1} parent=1 // pred_fallthru
      _
    // Predicated region
    $region18: #{lstm_model_forward.1} parent=1 // pred_check
      _
    $region19: #{lstm_model_forward.1} parent=1 // pred_check_branch
      %36 = sbr.rel (0) target = $region21
    $region20: #{lstm_model_forward.1} parent=1 // pred_region
      %s38 = ssub.s32 8192, 8192
      %39 = vsyncadd [#allocation6], %s38
      %s40 = sshll.u32 [#allocation5], 4
      %s41 = int_to_ptr.vmem [resolvable:$true] %s40
      %46 = dma.hbm_to_vmem [thread:$0]  %s4, 8192, %s41, [#allocation6], 256, 256, 16
    $region21: #{lstm_model_forward.1} parent=1 // pred_fallthru
      _
    // Predicated region
    $region22: #{lstm_model_forward.1} parent=1 // pred_check
      _
    $region23: #{lstm_model_forward.1} parent=1 // pred_check_branch
      %48 = sbr.rel (0) target = $region25
    $region24: #{lstm_model_forward.1} parent=1 // pred_region
      _
    $region25: #{lstm_model_forward.1} parent=1 // pred_fallthru
      _
    // Predicated region
    $region26: #{lstm_model_forward.1} parent=1 // pred_check
      _
    $region27: #{lstm_model_forward.1} parent=1 // pred_check_branch
      %50 = sbr.rel (0) target = $region29
    $region28: #{lstm_model_forward.1} parent=1 // pred_region
      _
    $region29: #{lstm_model_forward.1} parent=1 // pred_fallthru
      _
    // Predicated region
    $region30: #{lstm_model_forward.1} parent=1 // pred_check
      _
    $region31: #{lstm_model_forward.1} parent=1 // pred_check_branch
      %52 = sbr.rel (0) target = $region33
    $region32: #{lstm_model_forward.1} parent=1 // pred_region
      _
    $region33: #{lstm_model_forward.1} parent=1 // pred_fallthru
      _
    // Predicated region
    $region34: #{lstm_model_forward.1} parent=1 // pred_check
      _
    $region35: #{lstm_model_forward.1} parent=1 // pred_check_branch
      %54 = sbr.rel (0) target = $region37
    $region36: #{lstm_model_forward.1} parent=1 // pred_region
      %55 = dma.done [#allocation4], 4096
    $region37: #{lstm_model_forward.1} parent=1 // pred_fallthru
      _
    // Predicated region
    $region38: #{lstm_model_forward.1} parent=1 // pred_check
      _
    $region39: #{lstm_model_forward.1} parent=1 // pred_check_branch
      %57 = sbr.rel (0) target = $region41
    $region40: #{lstm_model_forward.1} parent=1 // pred_region
      %58 = dma.done [#allocation6], 8192
    $region41: #{lstm_model_forward.1} parent=1 // pred_fallthru
      _
    %v60 = vld [vmem:[%s1] sm:$0xf]
    %v61 = vld [vmem:[%s2] sm:$0xf]
    %v62 = vld [vmem:[%s5] sm:$0xf]
    %v63 = vld [vmem:[%s6] sm:$0x1]
    %v64 = vld [vmem:[#allocation2] sm:$0x1]
    %v65 = vld [vmem:[%s0] sm:$0xff]
    %67 = vset.pattern.permute.xlu0 0
    %68 = vperm.xlu0 %67, %v65
    %v69 = vpop.permute.xlu0 %68
    %v72 = vlaneseq
    %v73 = vshrl.u32 %v72, 7
    %v74 = vsub.s32 0, %v73
    %v75 = vrot.slane %v60, %v74
    %v76 = vlaneseq
    %v77 = vshrl.u32 %v76, 7
    %v78 = vsub.s32 1, %v77
    %v79 = vrot.slane %v60, %v78
    %v80 = vlaneseq
    %v81 = vshrl.u32 %v80, 7
    %v82 = vsub.s32 2, %v81
    %v83 = vrot.slane %v60, %v82
    %v84 = vlaneseq
    %v85 = vshrl.u32 %v84, 7
    %v86 = vsub.s32 3, %v85
    %v87 = vrot.slane %v60, %v86
    %v92 = vmul.f32 %v69, %v75
    %v93 = vmul.f32 %v69, %v79
    %v94 = vmul.f32 %v69, %v83
    %v95 = vmul.f32 %v69, %v87
    %v97 = vlaneseq
    %v98 = vshrl.u32 %v97, 7
    %v99 = vsub.s32 0, %v98
    %v100 = vrot.slane %v61, %v99
    %v101 = vlaneseq
    %v102 = vshrl.u32 %v101, 7
    %v103 = vsub.s32 1, %v102
    %v104 = vrot.slane %v61, %v103
    %v105 = vlaneseq
    %v106 = vshrl.u32 %v105, 7
    %v107 = vsub.s32 2, %v106
    %v108 = vrot.slane %v61, %v107
    %v109 = vlaneseq
    %v110 = vshrl.u32 %v109, 7
    %v111 = vsub.s32 3, %v110
    %v112 = vrot.slane %v61, %v111
    %v117 = vadd.f32 %v92, %v100
    %v118 = vadd.f32 %v93, %v104
    %v119 = vadd.f32 %v94, %v108
    %v120 = vadd.f32 %v95, %v112
    %v121 = vld [vmem:[#allocation3] sm:$0xff]
    %v122 = vld [vmem:[#allocation3 + $0x8] sm:$0xff]
    %v123 = vld [vmem:[#allocation3 + $0x10] sm:$0xff]
    %v124 = vld [vmem:[#allocation3 + $0x18] sm:$0xff]
    %v125 = vld [vmem:[#allocation3 + $0x20] sm:$0xff]
    %v126 = vld [vmem:[#allocation3 + $0x28] sm:$0xff]
    %v127 = vld [vmem:[#allocation3 + $0x30] sm:$0xff]
    %v128 = vld [vmem:[#allocation3 + $0x38] sm:$0xff]
    %v129 = vld [vmem:[#allocation3 + $0x40] sm:$0xff]
    %v130 = vld [vmem:[#allocation3 + $0x48] sm:$0xff]
    %v131 = vld [vmem:[#allocation3 + $0x50] sm:$0xff]
    %v132 = vld [vmem:[#allocation3 + $0x58] sm:$0xff]
    %v133 = vld [vmem:[#allocation3 + $0x60] sm:$0xff]
    %v134 = vld [vmem:[#allocation3 + $0x68] sm:$0xff]
    %v135 = vld [vmem:[#allocation3 + $0x70] sm:$0xff]
    %v136 = vld [vmem:[#allocation3 + $0x78] sm:$0xff]
    %v137 = vld [vmem:[#allocation3 + $0x80] sm:$0xff]
    %v138 = vld [vmem:[#allocation3 + $0x88] sm:$0xff]
    %v139 = vld [vmem:[#allocation3 + $0x90] sm:$0xff]
    %v140 = vld [vmem:[#allocation3 + $0x98] sm:$0xff]
    %v141 = vld [vmem:[#allocation3 + $0xa0] sm:$0xff]
    %v142 = vld [vmem:[#allocation3 + $0xa8] sm:$0xff]
    %v143 = vld [vmem:[#allocation3 + $0xb0] sm:$0xff]
    %v144 = vld [vmem:[#allocation3 + $0xb8] sm:$0xff]
    %v145 = vld [vmem:[#allocation3 + $0xc0] sm:$0xff]
    %v146 = vld [vmem:[#allocation3 + $0xc8] sm:$0xff]
    %v147 = vld [vmem:[#allocation3 + $0xd0] sm:$0xff]
    %v148 = vld [vmem:[#allocation3 + $0xd8] sm:$0xff]
    %v149 = vld [vmem:[#allocation3 + $0xe0] sm:$0xff]
    %v150 = vld [vmem:[#allocation3 + $0xe8] sm:$0xff]
    %v151 = vld [vmem:[#allocation3 + $0xf0] sm:$0xff]
    %v152 = vld [vmem:[#allocation3 + $0xf8] sm:$0xff]
    %v185 = vunpack.c.l.b16 %v121
    %v186 = vunpack.c.h.b16 %v121
    %v187 = vunpack.c.l.b16 %v122
    %v188 = vunpack.c.h.b16 %v122
    %v189 = vunpack.c.l.b16 %v123
    %v190 = vunpack.c.h.b16 %v123
    %v191 = vunpack.c.l.b16 %v124
    %v192 = vunpack.c.h.b16 %v124
    %v193 = vunpack.c.l.b16 %v125
    %v194 = vunpack.c.h.b16 %v125
    %v195 = vunpack.c.l.b16 %v126
    %v196 = vunpack.c.h.b16 %v126
    %v197 = vunpack.c.l.b16 %v127
    %v198 = vunpack.c.h.b16 %v127
    %v199 = vunpack.c.l.b16 %v128
    %v200 = vunpack.c.h.b16 %v128
    %v201 = vunpack.c.l.b16 %v129
    %v202 = vunpack.c.h.b16 %v129
    %v203 = vunpack.c.l.b16 %v130
    %v204 = vunpack.c.h.b16 %v130
    %v205 = vunpack.c.l.b16 %v131
    %v206 = vunpack.c.h.b16 %v131
    %v207 = vunpack.c.l.b16 %v132
    %v208 = vunpack.c.h.b16 %v132
    %v209 = vunpack.c.l.b16 %v133
    %v210 = vunpack.c.h.b16 %v133
    %v211 = vunpack.c.l.b16 %v134
    %v212 = vunpack.c.h.b16 %v134
    %v213 = vunpack.c.l.b16 %v135
    %v214 = vunpack.c.h.b16 %v135
    %v215 = vunpack.c.l.b16 %v136
    %v216 = vunpack.c.h.b16 %v136
    %v217 = vunpack.c.l.b16 %v137
    %v218 = vunpack.c.h.b16 %v137
    %v219 = vunpack.c.l.b16 %v138
    %v220 = vunpack.c.h.b16 %v138
    %v221 = vunpack.c.l.b16 %v139
    %v222 = vunpack.c.h.b16 %v139
    %v223 = vunpack.c.l.b16 %v140
    %v224 = vunpack.c.h.b16 %v140
    %v225 = vunpack.c.l.b16 %v141
    %v226 = vunpack.c.h.b16 %v141
    %v227 = vunpack.c.l.b16 %v142
    %v228 = vunpack.c.h.b16 %v142
    %v229 = vunpack.c.l.b16 %v143
    %v230 = vunpack.c.h.b16 %v143
    %v231 = vunpack.c.l.b16 %v144
    %v232 = vunpack.c.h.b16 %v144
    %v233 = vunpack.c.l.b16 %v145
    %v234 = vunpack.c.h.b16 %v145
    %v235 = vunpack.c.l.b16 %v146
    %v236 = vunpack.c.h.b16 %v146
    %v237 = vunpack.c.l.b16 %v147
    %v238 = vunpack.c.h.b16 %v147
    %v239 = vunpack.c.l.b16 %v148
    %v240 = vunpack.c.h.b16 %v148
    %v241 = vunpack.c.l.b16 %v149
    %v242 = vunpack.c.h.b16 %v149
    %v243 = vunpack.c.l.b16 %v150
    %v244 = vunpack.c.h.b16 %v150
    %v245 = vunpack.c.l.b16 %v151
    %v246 = vunpack.c.h.b16 %v151
    %v247 = vunpack.c.l.b16 %v152
    %v248 = vunpack.c.h.b16 %v152
    %v249 = vpack.c.b16 %v189, %v185
    %v250 = vpack.c.b16 %v190, %v186
    %v251 = vpack.c.b16 %v191, %v187
    %v252 = vpack.c.b16 %v192, %v188
    %v253 = vpack.c.b16 %v197, %v193
    %v254 = vpack.c.b16 %v198, %v194
    %v255 = vpack.c.b16 %v199, %v195
    %v256 = vpack.c.b16 %v200, %v196
    %v257 = vpack.c.b16 %v205, %v201
    %v258 = vpack.c.b16 %v206, %v202
    %v259 = vpack.c.b16 %v207, %v203
    %v260 = vpack.c.b16 %v208, %v204
    %v261 = vpack.c.b16 %v213, %v209
    %v262 = vpack.c.b16 %v214, %v210
    %v263 = vpack.c.b16 %v215, %v211
    %v264 = vpack.c.b16 %v216, %v212
    %v265 = vpack.c.b16 %v221, %v217
    %v266 = vpack.c.b16 %v222, %v218
    %v267 = vpack.c.b16 %v223, %v219
    %v268 = vpack.c.b16 %v224, %v220
    %v269 = vpack.c.b16 %v229, %v225
    %v270 = vpack.c.b16 %v230, %v226
    %v271 = vpack.c.b16 %v231, %v227
    %v272 = vpack.c.b16 %v232, %v228
    %v273 = vpack.c.b16 %v237, %v233
    %v274 = vpack.c.b16 %v238, %v234
    %v275 = vpack.c.b16 %v239, %v235
    %v276 = vpack.c.b16 %v240, %v236
    %v277 = vpack.c.b16 %v245, %v241
    %v278 = vpack.c.b16 %v246, %v242
    %v279 = vpack.c.b16 %v247, %v243
    %v280 = vpack.c.b16 %v248, %v244
    %313 = vmatprep.subr.bf16.mxu0 %v250
    %314 = vmatpush1.bf16.msra.mxu0 %v249
    %315 = vmatprep.subr.bf16.mxu0 %v254
    %316 = vmatpush1.bf16.msra.mxu0 %v253
    %317 = vmatprep.subr.bf16.mxu0 %v258
    %318 = vmatpush1.bf16.msra.mxu0 %v257
    %319 = vmatprep.subr.bf16.mxu0 %v262
    %320 = vmatpush1.bf16.msra.mxu0 %v261
    %321 = vmatprep.subr.bf16.mxu0 %v266
    %322 = vmatpush1.bf16.msra.mxu0 %v265
    %323 = vmatprep.subr.bf16.mxu0 %v270
    %324 = vmatpush1.bf16.msra.mxu0 %v269
    %325 = vmatprep.subr.bf16.mxu0 %v274
    %326 = vmatpush1.bf16.msra.mxu0 %v273
    %327 = vmatprep.subr.bf16.mxu0 %v278
    %328 = vmatpush1.bf16.msra.mxu0 %v277
    %329 = vmatprep.subr.bf16.mxu0 0
    %330 = vmatpush1.bf16.msra.mxu0 0
    %331 = vmatprep.subr.bf16.mxu0 0
    %332 = vmatpush1.bf16.msra.mxu0 0
    %333 = vmatprep.subr.bf16.mxu0 0
    %334 = vmatpush1.bf16.msra.mxu0 0
    %335 = vmatprep.subr.bf16.mxu0 0
    %336 = vmatpush1.bf16.msra.mxu0 0
    %337 = vmatprep.subr.bf16.mxu0 0
    %338 = vmatpush1.bf16.msra.mxu0 0
    %339 = vmatprep.subr.bf16.mxu0 0
    %340 = vmatpush1.bf16.msra.mxu0 0
    %341 = vmatprep.subr.bf16.mxu0 0
    %342 = vmatpush1.bf16.msra.mxu0 0
    %343 = vmatprep.subr.bf16.mxu0 0
    %344 = vmatpush1.bf16.msra.mxu0 0
    %345 = vmatprep.mubr.bf16.mxu0 0
    %346 = vmatmul.mubr.bf16.gmra.mrb[0].mxu0 0
    %v347 = vpop.f32.mrb[0].mxu0
    %v348 = vadd.f32 0.0, %v347
    %v349 = vpop.f32.mrb[0].mxu0
    %v350 = vadd.f32 0.0, %v349
    %v351 = vpop.f32.mrb[0].mxu0
    %v352 = vpop.f32.mrb[0].mxu0
    %353 = vdwg.mxu0
    %354 = vmatprep.subr.bf16.mxu0 %v252
    %355 = vmatpush1.bf16.msra.mxu0 %v251
    %356 = vmatprep.subr.bf16.mxu0 %v256
    %357 = vmatpush1.bf16.msra.mxu0 %v255
    %358 = vmatprep.subr.bf16.mxu0 %v260
    %359 = vmatpush1.bf16.msra.mxu0 %v259
    %360 = vmatprep.subr.bf16.mxu0 %v264
    %361 = vmatpush1.bf16.msra.mxu0 %v263
    %362 = vmatprep.subr.bf16.mxu0 %v268
    %363 = vmatpush1.bf16.msra.mxu0 %v267
    %364 = vmatprep.subr.bf16.mxu0 %v272
    %365 = vmatpush1.bf16.msra.mxu0 %v271
    %366 = vmatprep.subr.bf16.mxu0 %v276
    %367 = vmatpush1.bf16.msra.mxu0 %v275
    %368 = vmatprep.subr.bf16.mxu0 %v280
    %369 = vmatpush1.bf16.msra.mxu0 %v279
    %370 = vmatprep.subr.bf16.mxu0 0
    %371 = vmatpush1.bf16.msra.mxu0 0
    %372 = vmatprep.subr.bf16.mxu0 0
    %373 = vmatpush1.bf16.msra.mxu0 0
    %374 = vmatprep.subr.bf16.mxu0 0
    %375 = vmatpush1.bf16.msra.mxu0 0
    %376 = vmatprep.subr.bf16.mxu0 0
    %377 = vmatpush1.bf16.msra.mxu0 0
    %378 = vmatprep.subr.bf16.mxu0 0
    %379 = vmatpush1.bf16.msra.mxu0 0
    %380 = vmatprep.subr.bf16.mxu0 0
    %381 = vmatpush1.bf16.msra.mxu0 0
    %382 = vmatprep.subr.bf16.mxu0 0
    %383 = vmatpush1.bf16.msra.mxu0 0
    %384 = vmatprep.subr.bf16.mxu0 0
    %385 = vmatpush1.bf16.msra.mxu0 0
    %386 = vmatprep.mubr.bf16.mxu0 0
    %387 = vmatmul.mubr.bf16.gmra.mrb[0].mxu0 0
    %v388 = vpop.f32.mrb[0].mxu0
    %v389 = vadd.f32 0.0, %v388
    %v390 = vpop.f32.mrb[0].mxu0
    %v391 = vadd.f32 0.0, %v390
    %v392 = vpop.f32.mrb[0].mxu0
    %v393 = vpop.f32.mrb[0].mxu0
    %394 = vdwg.mxu0
    %v395 = vadd.f32 %v117, %v348
    %v396 = vadd.f32 %v118, %v350
    %v397 = vadd.f32 %v119, %v389
    %v398 = vadd.f32 %v120, %v391
    %v399 = vxor.u32 %v395, 2147483648
    %v400 = vmul.f32 %v399, 1.442695
    %v401 = vpow.pop %v400
    %v402 = vadd.f32 %v401, 1.0
    %v403 = vrcp.pop %v402
    %v404 = vmul.f32 1.0, %v403
    %v405 = vxor.u32 %v396, 2147483648
    %v406 = vmul.f32 %v405, 1.442695
    %v407 = vpow.pop %v406
    %v408 = vadd.f32 %v407, 1.0
    %v409 = vrcp.pop %v408
    %v410 = vmul.f32 1.0, %v409
    %v411 = vtanh.pop %v397
    %v412 = vxor.u32 %v398, 2147483648
    %v413 = vmul.f32 %v412, 1.442695
    %v414 = vpow.pop %v413
    %v415 = vadd.f32 %v414, 1.0
    %v416 = vrcp.pop %v415
    %v417 = vmul.f32 1.0, %v416
    %v418 = vmul.f32 %v410, 0.0
    %v419 = vmul.f32 %v404, %v411
    %v420 = vadd.f32 %v418, %v419
    %v421 = vtanh.pop %v420
    %v422 = vmul.f32 %v417, %v421
    %v423 = vpack.c.bf16 %v422, %v422
    %v424 = vpack.c.bf16 0.0, 0.0
    %v425 = vld [vmem:[#allocation5] sm:$0xff]
    %v426 = vld [vmem:[#allocation5 + $0x8] sm:$0xff]
    %v427 = vld [vmem:[#allocation5 + $0x10] sm:$0xff]
    %v428 = vld [vmem:[#allocation5 + $0x18] sm:$0xff]
    %v429 = vld [vmem:[#allocation5 + $0x20] sm:$0xff]
    %v430 = vld [vmem:[#allocation5 + $0x28] sm:$0xff]
    %v431 = vld [vmem:[#allocation5 + $0x30] sm:$0xff]
    %v432 = vld [vmem:[#allocation5 + $0x38] sm:$0xff]
    %v433 = vld [vmem:[#allocation5 + $0x40] sm:$0xff]
    %v434 = vld [vmem:[#allocation5 + $0x48] sm:$0xff]
    %v435 = vld [vmem:[#allocation5 + $0x50] sm:$0xff]
    %v436 = vld [vmem:[#allocation5 + $0x58] sm:$0xff]
    %v437 = vld [vmem:[#allocation5 + $0x60] sm:$0xff]
    %v438 = vld [vmem:[#allocation5 + $0x68] sm:$0xff]
    %v439 = vld [vmem:[#allocation5 + $0x70] sm:$0xff]
    %v440 = vld [vmem:[#allocation5 + $0x78] sm:$0xff]
    %v441 = vld [vmem:[#allocation5 + $0x80] sm:$0xff]
    %v442 = vld [vmem:[#allocation5 + $0x88] sm:$0xff]
    %v443 = vld [vmem:[#allocation5 + $0x90] sm:$0xff]
    %v444 = vld [vmem:[#allocation5 + $0x98] sm:$0xff]
    %v445 = vld [vmem:[#allocation5 + $0xa0] sm:$0xff]
    %v446 = vld [vmem:[#allocation5 + $0xa8] sm:$0xff]
    %v447 = vld [vmem:[#allocation5 + $0xb0] sm:$0xff]
    %v448 = vld [vmem:[#allocation5 + $0xb8] sm:$0xff]
    %v449 = vld [vmem:[#allocation5 + $0xc0] sm:$0xff]
    %v450 = vld [vmem:[#allocation5 + $0xc8] sm:$0xff]
    %v451 = vld [vmem:[#allocation5 + $0xd0] sm:$0xff]
    %v452 = vld [vmem:[#allocation5 + $0xd8] sm:$0xff]
    %v453 = vld [vmem:[#allocation5 + $0xe0] sm:$0xff]
    %v454 = vld [vmem:[#allocation5 + $0xe8] sm:$0xff]
    %v455 = vld [vmem:[#allocation5 + $0xf0] sm:$0xff]
    %v456 = vld [vmem:[#allocation5 + $0xf8] sm:$0xff]
    %v457 = vld [vmem:[#allocation5 + $0x100] sm:$0xff]
    %v458 = vld [vmem:[#allocation5 + $0x108] sm:$0xff]
    %v459 = vld [vmem:[#allocation5 + $0x110] sm:$0xff]
    %v460 = vld [vmem:[#allocation5 + $0x118] sm:$0xff]
    %v461 = vld [vmem:[#allocation5 + $0x120] sm:$0xff]
    %v462 = vld [vmem:[#allocation5 + $0x128] sm:$0xff]
    %v463 = vld [vmem:[#allocation5 + $0x130] sm:$0xff]
    %v464 = vld [vmem:[#allocation5 + $0x138] sm:$0xff]
    %v465 = vld [vmem:[#allocation5 + $0x140] sm:$0xff]
    %v466 = vld [vmem:[#allocation5 + $0x148] sm:$0xff]
    %v467 = vld [vmem:[#allocation5 + $0x150] sm:$0xff]
    %v468 = vld [vmem:[#allocation5 + $0x158] sm:$0xff]
    %v469 = vld [vmem:[#allocation5 + $0x160] sm:$0xff]
    %v470 = vld [vmem:[#allocation5 + $0x168] sm:$0xff]
    %v471 = vld [vmem:[#allocation5 + $0x170] sm:$0xff]
    %v472 = vld [vmem:[#allocation5 + $0x178] sm:$0xff]
    %v473 = vld [vmem:[#allocation5 + $0x180] sm:$0xff]
    %v474 = vld [vmem:[#allocation5 + $0x188] sm:$0xff]
    %v475 = vld [vmem:[#allocation5 + $0x190] sm:$0xff]
    %v476 = vld [vmem:[#allocation5 + $0x198] sm:$0xff]
    %v477 = vld [vmem:[#allocation5 + $0x1a0] sm:$0xff]
    %v478 = vld [vmem:[#allocation5 + $0x1a8] sm:$0xff]
    %v479 = vld [vmem:[#allocation5 + $0x1b0] sm:$0xff]
    %v480 = vld [vmem:[#allocation5 + $0x1b8] sm:$0xff]
    %v481 = vld [vmem:[#allocation5 + $0x1c0] sm:$0xff]
    %v482 = vld [vmem:[#allocation5 + $0x1c8] sm:$0xff]
    %v483 = vld [vmem:[#allocation5 + $0x1d0] sm:$0xff]
    %v484 = vld [vmem:[#allocation5 + $0x1d8] sm:$0xff]
    %v485 = vld [vmem:[#allocation5 + $0x1e0] sm:$0xff]
    %v486 = vld [vmem:[#allocation5 + $0x1e8] sm:$0xff]
    %v487 = vld [vmem:[#allocation5 + $0x1f0] sm:$0xff]
    %v488 = vld [vmem:[#allocation5 + $0x1f8] sm:$0xff]
    %v490 = vlaneseq
    %v491 = vshrl.u32 %v490, 7
    %v492 = vsub.s32 0, %v491
    %v493 = vrot.slane %v62, %v492
    %v494 = vlaneseq
    %v495 = vshrl.u32 %v494, 7
    %v496 = vsub.s32 1, %v495
    %v497 = vrot.slane %v62, %v496
    %v498 = vlaneseq
    %v499 = vshrl.u32 %v498, 7
    %v500 = vsub.s32 2, %v499
    %v501 = vrot.slane %v62, %v500
    %v502 = vlaneseq
    %v503 = vshrl.u32 %v502, 7
    %v504 = vsub.s32 3, %v503
    %v505 = vrot.slane %v62, %v504
    %v574 = vunpack.c.l.b16 %v425
    %v575 = vunpack.c.h.b16 %v425
    %v576 = vunpack.c.l.b16 %v426
    %v577 = vunpack.c.h.b16 %v426
    %v578 = vunpack.c.l.b16 %v427
    %v579 = vunpack.c.h.b16 %v427
    %v580 = vunpack.c.l.b16 %v428
    %v581 = vunpack.c.h.b16 %v428
    %v582 = vunpack.c.l.b16 %v429
    %v583 = vunpack.c.h.b16 %v429
    %v584 = vunpack.c.l.b16 %v430
    %v585 = vunpack.c.h.b16 %v430
    %v586 = vunpack.c.l.b16 %v431
    %v587 = vunpack.c.h.b16 %v431
    %v588 = vunpack.c.l.b16 %v432
    %v589 = vunpack.c.h.b16 %v432
    %v590 = vunpack.c.l.b16 %v433
    %v591 = vunpack.c.h.b16 %v433
    %v592 = vunpack.c.l.b16 %v434
    %v593 = vunpack.c.h.b16 %v434
    %v594 = vunpack.c.l.b16 %v435
    %v595 = vunpack.c.h.b16 %v435
    %v596 = vunpack.c.l.b16 %v436
    %v597 = vunpack.c.h.b16 %v436
    %v598 = vunpack.c.l.b16 %v437
    %v599 = vunpack.c.h.b16 %v437
    %v600 = vunpack.c.l.b16 %v438
    %v601 = vunpack.c.h.b16 %v438
    %v602 = vunpack.c.l.b16 %v439
    %v603 = vunpack.c.h.b16 %v439
    %v604 = vunpack.c.l.b16 %v440
    %v605 = vunpack.c.h.b16 %v440
    %v606 = vunpack.c.l.b16 %v441
    %v607 = vunpack.c.h.b16 %v441
    %v608 = vunpack.c.l.b16 %v442
    %v609 = vunpack.c.h.b16 %v442
    %v610 = vunpack.c.l.b16 %v443
    %v611 = vunpack.c.h.b16 %v443
    %v612 = vunpack.c.l.b16 %v444
    %v613 = vunpack.c.h.b16 %v444
    %v614 = vunpack.c.l.b16 %v445
    %v615 = vunpack.c.h.b16 %v445
    %v616 = vunpack.c.l.b16 %v446
    %v617 = vunpack.c.h.b16 %v446
    %v618 = vunpack.c.l.b16 %v447
    %v619 = vunpack.c.h.b16 %v447
    %v620 = vunpack.c.l.b16 %v448
    %v621 = vunpack.c.h.b16 %v448
    %v622 = vunpack.c.l.b16 %v449
    %v623 = vunpack.c.h.b16 %v449
    %v624 = vunpack.c.l.b16 %v450
    %v625 = vunpack.c.h.b16 %v450
    %v626 = vunpack.c.l.b16 %v451
    %v627 = vunpack.c.h.b16 %v451
    %v628 = vunpack.c.l.b16 %v452
    %v629 = vunpack.c.h.b16 %v452
    %v630 = vunpack.c.l.b16 %v453
    %v631 = vunpack.c.h.b16 %v453
    %v632 = vunpack.c.l.b16 %v454
    %v633 = vunpack.c.h.b16 %v454
    %v634 = vunpack.c.l.b16 %v455
    %v635 = vunpack.c.h.b16 %v455
    %v636 = vunpack.c.l.b16 %v456
    %v637 = vunpack.c.h.b16 %v456
    %v638 = vunpack.c.l.b16 %v457
    %v639 = vunpack.c.h.b16 %v457
    %v640 = vunpack.c.l.b16 %v458
    %v641 = vunpack.c.h.b16 %v458
    %v642 = vunpack.c.l.b16 %v459
    %v643 = vunpack.c.h.b16 %v459
    %v644 = vunpack.c.l.b16 %v460
    %v645 = vunpack.c.h.b16 %v460
    %v646 = vunpack.c.l.b16 %v461
    %v647 = vunpack.c.h.b16 %v461
    %v648 = vunpack.c.l.b16 %v462
    %v649 = vunpack.c.h.b16 %v462
    %v650 = vunpack.c.l.b16 %v463
    %v651 = vunpack.c.h.b16 %v463
    %v652 = vunpack.c.l.b16 %v464
    %v653 = vunpack.c.h.b16 %v464
    %v654 = vunpack.c.l.b16 %v465
    %v655 = vunpack.c.h.b16 %v465
    %v656 = vunpack.c.l.b16 %v466
    %v657 = vunpack.c.h.b16 %v466
    %v658 = vunpack.c.l.b16 %v467
    %v659 = vunpack.c.h.b16 %v467
    %v660 = vunpack.c.l.b16 %v468
    %v661 = vunpack.c.h.b16 %v468
    %v662 = vunpack.c.l.b16 %v469
    %v663 = vunpack.c.h.b16 %v469
    %v664 = vunpack.c.l.b16 %v470
    %v665 = vunpack.c.h.b16 %v470
    %v666 = vunpack.c.l.b16 %v471
    %v667 = vunpack.c.h.b16 %v471
    %v668 = vunpack.c.l.b16 %v472
    %v669 = vunpack.c.h.b16 %v472
    %v670 = vunpack.c.l.b16 %v473
    %v671 = vunpack.c.h.b16 %v473
    %v672 = vunpack.c.l.b16 %v474
    %v673 = vunpack.c.h.b16 %v474
    %v674 = vunpack.c.l.b16 %v475
    %v675 = vunpack.c.h.b16 %v475
    %v676 = vunpack.c.l.b16 %v476
    %v677 = vunpack.c.h.b16 %v476
    %v678 = vunpack.c.l.b16 %v477
    %v679 = vunpack.c.h.b16 %v477
    %v680 = vunpack.c.l.b16 %v478
    %v681 = vunpack.c.h.b16 %v478
    %v682 = vunpack.c.l.b16 %v479
    %v683 = vunpack.c.h.b16 %v479
    %v684 = vunpack.c.l.b16 %v480
    %v685 = vunpack.c.h.b16 %v480
    %v686 = vunpack.c.l.b16 %v481
    %v687 = vunpack.c.h.b16 %v481
    %v688 = vunpack.c.l.b16 %v482
    %v689 = vunpack.c.h.b16 %v482
    %v690 = vunpack.c.l.b16 %v483
    %v691 = vunpack.c.h.b16 %v483
    %v692 = vunpack.c.l.b16 %v484
    %v693 = vunpack.c.h.b16 %v484
    %v694 = vunpack.c.l.b16 %v485
    %v695 = vunpack.c.h.b16 %v485
    %v696 = vunpack.c.l.b16 %v486
    %v697 = vunpack.c.h.b16 %v486
    %v698 = vunpack.c.l.b16 %v487
    %v699 = vunpack.c.h.b16 %v487
    %v700 = vunpack.c.l.b16 %v488
    %v701 = vunpack.c.h.b16 %v488
    %v702 = vpack.c.b16 %v578, %v574
    %v703 = vpack.c.b16 %v579, %v575
    %v704 = vpack.c.b16 %v580, %v576
    %v705 = vpack.c.b16 %v581, %v577
    %v706 = vpack.c.b16 %v586, %v582
    %v707 = vpack.c.b16 %v587, %v583
    %v708 = vpack.c.b16 %v588, %v584
    %v709 = vpack.c.b16 %v589, %v585
    %v710 = vpack.c.b16 %v594, %v590
    %v711 = vpack.c.b16 %v595, %v591
    %v712 = vpack.c.b16 %v596, %v592
    %v713 = vpack.c.b16 %v597, %v593
    %v714 = vpack.c.b16 %v602, %v598
    %v715 = vpack.c.b16 %v603, %v599
    %v716 = vpack.c.b16 %v604, %v600
    %v717 = vpack.c.b16 %v605, %v601
    %v718 = vpack.c.b16 %v610, %v606
    %v719 = vpack.c.b16 %v611, %v607
    %v720 = vpack.c.b16 %v612, %v608
    %v721 = vpack.c.b16 %v613, %v609
    %v722 = vpack.c.b16 %v618, %v614
    %v723 = vpack.c.b16 %v619, %v615
    %v724 = vpack.c.b16 %v620, %v616
    %v725 = vpack.c.b16 %v621, %v617
    %v726 = vpack.c.b16 %v626, %v622
    %v727 = vpack.c.b16 %v627, %v623
    %v728 = vpack.c.b16 %v628, %v624
    %v729 = vpack.c.b16 %v629, %v625
    %v730 = vpack.c.b16 %v634, %v630
    %v731 = vpack.c.b16 %v635, %v631
    %v732 = vpack.c.b16 %v636, %v632
    %v733 = vpack.c.b16 %v637, %v633
    %v734 = vpack.c.b16 %v642, %v638
    %v735 = vpack.c.b16 %v643, %v639
    %v736 = vpack.c.b16 %v644, %v640
    %v737 = vpack.c.b16 %v645, %v641
    %v738 = vpack.c.b16 %v650, %v646
    %v739 = vpack.c.b16 %v651, %v647
    %v740 = vpack.c.b16 %v652, %v648
    %v741 = vpack.c.b16 %v653, %v649
    %v742 = vpack.c.b16 %v658, %v654
    %v743 = vpack.c.b16 %v659, %v655
    %v744 = vpack.c.b16 %v660, %v656
    %v745 = vpack.c.b16 %v661, %v657
    %v746 = vpack.c.b16 %v666, %v662
    %v747 = vpack.c.b16 %v667, %v663
    %v748 = vpack.c.b16 %v668, %v664
    %v749 = vpack.c.b16 %v669, %v665
    %v750 = vpack.c.b16 %v674, %v670
    %v751 = vpack.c.b16 %v675, %v671
    %v752 = vpack.c.b16 %v676, %v672
    %v753 = vpack.c.b16 %v677, %v673
    %v754 = vpack.c.b16 %v682, %v678
    %v755 = vpack.c.b16 %v683, %v679
    %v756 = vpack.c.b16 %v684, %v680
    %v757 = vpack.c.b16 %v685, %v681
    %v758 = vpack.c.b16 %v690, %v686
    %v759 = vpack.c.b16 %v691, %v687
    %v760 = vpack.c.b16 %v692, %v688
    %v761 = vpack.c.b16 %v693, %v689
    %v762 = vpack.c.b16 %v698, %v694
    %v763 = vpack.c.b16 %v699, %v695
    %v764 = vpack.c.b16 %v700, %v696
    %v765 = vpack.c.b16 %v701, %v697
    %830 = vmatprep.subr.bf16.mxu0 %v703
    %831 = vmatpush1.bf16.msra.mxu0 %v702
    %832 = vmatprep.subr.bf16.mxu0 %v707
    %833 = vmatpush1.bf16.msra.mxu0 %v706
    %834 = vmatprep.subr.bf16.mxu0 %v711
    %835 = vmatpush1.bf16.msra.mxu0 %v710
    %836 = vmatprep.subr.bf16.mxu0 %v715
    %837 = vmatpush1.bf16.msra.mxu0 %v714
    %838 = vmatprep.subr.bf16.mxu0 %v719
    %839 = vmatpush1.bf16.msra.mxu0 %v718
    %840 = vmatprep.subr.bf16.mxu0 %v723
    %841 = vmatpush1.bf16.msra.mxu0 %v722
    %842 = vmatprep.subr.bf16.mxu0 %v727
    %843 = vmatpush1.bf16.msra.mxu0 %v726
    %844 = vmatprep.subr.bf16.mxu0 %v731
    %845 = vmatpush1.bf16.msra.mxu0 %v730
    %846 = vmatprep.subr.bf16.mxu0 %v735
    %847 = vmatpush1.bf16.msra.mxu0 %v734
    %848 = vmatprep.subr.bf16.mxu0 %v739
    %849 = vmatpush1.bf16.msra.mxu0 %v738
    %850 = vmatprep.subr.bf16.mxu0 %v743
    %851 = vmatpush1.bf16.msra.mxu0 %v742
    %852 = vmatprep.subr.bf16.mxu0 %v747
    %853 = vmatpush1.bf16.msra.mxu0 %v746
    %854 = vmatprep.subr.bf16.mxu0 %v751
    %855 = vmatpush1.bf16.msra.mxu0 %v750
    %856 = vmatprep.subr.bf16.mxu0 %v755
    %857 = vmatpush1.bf16.msra.mxu0 %v754
    %858 = vmatprep.subr.bf16.mxu0 %v759
    %859 = vmatpush1.bf16.msra.mxu0 %v758
    %860 = vmatprep.subr.bf16.mxu0 %v763
    %861 = vmatpush1.bf16.msra.mxu0 %v762
    %862 = vmatprep.mubr.bf16.mxu0 %v424
    %863 = vmatmul.mubr.bf16.gmra.mrb[0].mxu0 %v423
    %v864 = vpop.f32.mrb[0].mxu0
    %v865 = vadd.f32 %v493, %v864
    %v866 = vpop.f32.mrb[0].mxu0
    %v867 = vadd.f32 %v497, %v866
    %v868 = vpop.f32.mrb[0].mxu0
    %v869 = vpop.f32.mrb[0].mxu0
    %870 = vdwg.mxu0
    %871 = vmatprep.subr.bf16.mxu0 %v705
    %872 = vmatpush1.bf16.msra.mxu0 %v704
    %873 = vmatprep.subr.bf16.mxu0 %v709
    %874 = vmatpush1.bf16.msra.mxu0 %v708
    %875 = vmatprep.subr.bf16.mxu0 %v713
    %876 = vmatpush1.bf16.msra.mxu0 %v712
    %877 = vmatprep.subr.bf16.mxu0 %v717
    %878 = vmatpush1.bf16.msra.mxu0 %v716
    %879 = vmatprep.subr.bf16.mxu0 %v721
    %880 = vmatpush1.bf16.msra.mxu0 %v720
    %881 = vmatprep.subr.bf16.mxu0 %v725
    %882 = vmatpush1.bf16.msra.mxu0 %v724
    %883 = vmatprep.subr.bf16.mxu0 %v729
    %884 = vmatpush1.bf16.msra.mxu0 %v728
    %885 = vmatprep.subr.bf16.mxu0 %v733
    %886 = vmatpush1.bf16.msra.mxu0 %v732
    %887 = vmatprep.subr.bf16.mxu0 %v737
    %888 = vmatpush1.bf16.msra.mxu0 %v736
    %889 = vmatprep.subr.bf16.mxu0 %v741
    %890 = vmatpush1.bf16.msra.mxu0 %v740
    %891 = vmatprep.subr.bf16.mxu0 %v745
    %892 = vmatpush1.bf16.msra.mxu0 %v744
    %893 = vmatprep.subr.bf16.mxu0 %v749
    %894 = vmatpush1.bf16.msra.mxu0 %v748
    %895 = vmatprep.subr.bf16.mxu0 %v753
    %896 = vmatpush1.bf16.msra.mxu0 %v752
    %897 = vmatprep.subr.bf16.mxu0 %v757
    %898 = vmatpush1.bf16.msra.mxu0 %v756
    %899 = vmatprep.subr.bf16.mxu0 %v761
    %900 = vmatpush1.bf16.msra.mxu0 %v760
    %901 = vmatprep.subr.bf16.mxu0 %v765
    %902 = vmatpush1.bf16.msra.mxu0 %v764
    %903 = vmatprep.mubr.bf16.mxu0 %v424
    %904 = vmatmul.mubr.bf16.gmra.mrb[0].mxu0 %v423
    %v905 = vpop.f32.mrb[0].mxu0
    %v906 = vadd.f32 %v501, %v905
    %v907 = vpop.f32.mrb[0].mxu0
    %v908 = vadd.f32 %v505, %v907
    %v909 = vpop.f32.mrb[0].mxu0
    %v910 = vpop.f32.mrb[0].mxu0
    %911 = vdwg.mxu0
    %v912 = vxor.u32 %v865, 2147483648
    %v913 = vmul.f32 %v912, 1.442695
    %v914 = vpow.pop %v913
    %v915 = vadd.f32 %v914, 1.0
    %v916 = vrcp.pop %v915
    %v917 = vmul.f32 1.0, %v916
    %v918 = vxor.u32 %v867, 2147483648
    %v919 = vmul.f32 %v918, 1.442695
    %v920 = vpow.pop %v919
    %v921 = vadd.f32 %v920, 1.0
    %v922 = vrcp.pop %v921
    %v923 = vmul.f32 1.0, %v922
    %v924 = vtanh.pop %v906
    %v925 = vxor.u32 %v908, 2147483648
    %v926 = vmul.f32 %v925, 1.442695
    %v927 = vpow.pop %v926
    %v928 = vadd.f32 %v927, 1.0
    %v929 = vrcp.pop %v928
    %v930 = vmul.f32 1.0, %v929
    %v931 = vmul.f32 %v923, 0.0
    %v932 = vmul.f32 %v917, %v924
    %v933 = vadd.f32 %v931, %v932
    %v934 = vtanh.pop %v933
    %v935 = vmul.f32 %v930, %v934
    %s936 = scalar_lea.vmem %s0, 8
    %v937 = vld [vmem:[%s936] sm:$0xff]
    %939 = vset.pattern.permute.xlu0 0
    %940 = vperm.xlu0 %939, %v937
    %v941 = vpop.permute.xlu0 %940
    %v943 = vmul.f32 %v941, %v75
    %v944 = vmul.f32 %v941, %v79
    %v945 = vmul.f32 %v941, %v83
    %v946 = vmul.f32 %v941, %v87
    %v947 = vadd.f32 %v943, %v100
    %v948 = vadd.f32 %v944, %v104
    %v949 = vadd.f32 %v945, %v108
    %v950 = vadd.f32 %v946, %v112
    %951 = vmatprep.subr.bf16.mxu0 %v250
    %952 = vmatpush1.bf16.msra.mxu0 %v249
    %953 = vmatprep.subr.bf16.mxu0 %v254
    %954 = vmatpush1.bf16.msra.mxu0 %v253
    %955 = vmatprep.subr.bf16.mxu0 %v258
    %956 = vmatpush1.bf16.msra.mxu0 %v257
    %957 = vmatprep.subr.bf16.mxu0 %v262
    %958 = vmatpush1.bf16.msra.mxu0 %v261
    %959 = vmatprep.subr.bf16.mxu0 %v266
    %960 = vmatpush1.bf16.msra.mxu0 %v265
    %961 = vmatprep.subr.bf16.mxu0 %v270
    %962 = vmatpush1.bf16.msra.mxu0 %v269
    %963 = vmatprep.subr.bf16.mxu0 %v274
    %964 = vmatpush1.bf16.msra.mxu0 %v273
    %965 = vmatprep.subr.bf16.mxu0 %v278
    %966 = vmatpush1.bf16.msra.mxu0 %v277
    %967 = vmatprep.subr.bf16.mxu0 0
    %968 = vmatpush1.bf16.msra.mxu0 0
    %969 = vmatprep.subr.bf16.mxu0 0
    %970 = vmatpush1.bf16.msra.mxu0 0
    %971 = vmatprep.subr.bf16.mxu0 0
    %972 = vmatpush1.bf16.msra.mxu0 0
    %973 = vmatprep.subr.bf16.mxu0 0
    %974 = vmatpush1.bf16.msra.mxu0 0
    %975 = vmatprep.subr.bf16.mxu0 0
    %976 = vmatpush1.bf16.msra.mxu0 0
    %977 = vmatprep.subr.bf16.mxu0 0
    %978 = vmatpush1.bf16.msra.mxu0 0
    %979 = vmatprep.subr.bf16.mxu0 0
    %980 = vmatpush1.bf16.msra.mxu0 0
    %981 = vmatprep.subr.bf16.mxu0 0
    %982 = vmatpush1.bf16.msra.mxu0 0
    %983 = vmatprep.mubr.bf16.mxu0 0
    %984 = vmatmul.mubr.bf16.gmra.mrb[0].mxu0 %v423
    %v985 = vpop.f32.mrb[0].mxu0
    %v986 = vadd.f32 0.0, %v985
    %v987 = vpop.f32.mrb[0].mxu0
    %v988 = vadd.f32 0.0, %v987
    %v989 = vpop.f32.mrb[0].mxu0
    %v990 = vpop.f32.mrb[0].mxu0
    %991 = vdwg.mxu0
    %992 = vmatprep.subr.bf16.mxu0 %v252
    %993 = vmatpush1.bf16.msra.mxu0 %v251
    %994 = vmatprep.subr.bf16.mxu0 %v256
    %995 = vmatpush1.bf16.msra.mxu0 %v255
    %996 = vmatprep.subr.bf16.mxu0 %v260
    %997 = vmatpush1.bf16.msra.mxu0 %v259
    %998 = vmatprep.subr.bf16.mxu0 %v264
    %999 = vmatpush1.bf16.msra.mxu0 %v263
    %1000 = vmatprep.subr.bf16.mxu0 %v268
    %1001 = vmatpush1.bf16.msra.mxu0 %v267
    %1002 = vmatprep.subr.bf16.mxu0 %v272
    %1003 = vmatpush1.bf16.msra.mxu0 %v271
    %1004 = vmatprep.subr.bf16.mxu0 %v276
    %1005 = vmatpush1.bf16.msra.mxu0 %v275
    %1006 = vmatprep.subr.bf16.mxu0 %v280
    %1007 = vmatpush1.bf16.msra.mxu0 %v279
    %1008 = vmatprep.subr.bf16.mxu0 0
    %1009 = vmatpush1.bf16.msra.mxu0 0
    %1010 = vmatprep.subr.bf16.mxu0 0
    %1011 = vmatpush1.bf16.msra.mxu0 0
    %1012 = vmatprep.subr.bf16.mxu0 0
    %1013 = vmatpush1.bf16.msra.mxu0 0
    %1014 = vmatprep.subr.bf16.mxu0 0
    %1015 = vmatpush1.bf16.msra.mxu0 0
    %1016 = vmatprep.subr.bf16.mxu0 0
    %1017 = vmatpush1.bf16.msra.mxu0 0
    %1018 = vmatprep.subr.bf16.mxu0 0
    %1019 = vmatpush1.bf16.msra.mxu0 0
    %1020 = vmatprep.subr.bf16.mxu0 0
    %1021 = vmatpush1.bf16.msra.mxu0 0
    %1022 = vmatprep.subr.bf16.mxu0 0
    %1023 = vmatpush1.bf16.msra.mxu0 0
    %1024 = vmatprep.mubr.bf16.mxu0 0
    %1025 = vmatmul.mubr.bf16.gmra.mrb[0].mxu0 %v423
    %v1026 = vpop.f32.mrb[0].mxu0
    %v1027 = vadd.f32 0.0, %v1026
    %v1028 = vpop.f32.mrb[0].mxu0
    %v1029 = vadd.f32 0.0, %v1028
    %v1030 = vpop.f32.mrb[0].mxu0
    %v1031 = vpop.f32.mrb[0].mxu0
    %1032 = vdwg.mxu0
    %v1033 = vadd.f32 %v947, %v986
    %v1034 = vadd.f32 %v948, %v988
    %v1035 = vadd.f32 %v949, %v1027
    %v1036 = vadd.f32 %v950, %v1029
    %v1037 = vxor.u32 %v1033, 2147483648
    %v1038 = vmul.f32 %v1037, 1.442695
    %v1039 = vpow.pop %v1038
    %v1040 = vadd.f32 %v1039, 1.0
    %v1041 = vrcp.pop %v1040
    %v1042 = vmul.f32 1.0, %v1041
    %v1043 = vxor.u32 %v1034, 2147483648
    %v1044 = vmul.f32 %v1043, 1.442695
    %v1045 = vpow.pop %v1044
    %v1046 = vadd.f32 %v1045, 1.0
    %v1047 = vrcp.pop %v1046
    %v1048 = vmul.f32 1.0, %v1047
    %v1049 = vtanh.pop %v1035
    %v1050 = vxor.u32 %v1036, 2147483648
    %v1051 = vmul.f32 %v1050, 1.442695
    %v1052 = vpow.pop %v1051
    %v1053 = vadd.f32 %v1052, 1.0
    %v1054 = vrcp.pop %v1053
    %v1055 = vmul.f32 1.0, %v1054
    %v1056 = vmul.f32 %v1048, %v420
    %v1057 = vmul.f32 %v1042, %v1049
    %v1058 = vadd.f32 %v1056, %v1057
    %v1059 = vtanh.pop %v1058
    %v1060 = vmul.f32 %v1055, %v1059
    %v1061 = vpack.c.bf16 %v1060, %v1060
    %v1062 = vpack.c.bf16 %v935, %v935
    %1063 = vmatprep.subr.bf16.mxu0 %v703
    %1064 = vmatpush1.bf16.msra.mxu0 %v702
    %1065 = vmatprep.subr.bf16.mxu0 %v707
    %1066 = vmatpush1.bf16.msra.mxu0 %v706
    %1067 = vmatprep.subr.bf16.mxu0 %v711
    %1068 = vmatpush1.bf16.msra.mxu0 %v710
    %1069 = vmatprep.subr.bf16.mxu0 %v715
    %1070 = vmatpush1.bf16.msra.mxu0 %v714
    %1071 = vmatprep.subr.bf16.mxu0 %v719
    %1072 = vmatpush1.bf16.msra.mxu0 %v718
    %1073 = vmatprep.subr.bf16.mxu0 %v723
    %1074 = vmatpush1.bf16.msra.mxu0 %v722
    %1075 = vmatprep.subr.bf16.mxu0 %v727
    %1076 = vmatpush1.bf16.msra.mxu0 %v726
    %1077 = vmatprep.subr.bf16.mxu0 %v731
    %1078 = vmatpush1.bf16.msra.mxu0 %v730
    %1079 = vmatprep.subr.bf16.mxu0 %v735
    %1080 = vmatpush1.bf16.msra.mxu0 %v734
    %1081 = vmatprep.subr.bf16.mxu0 %v739
    %1082 = vmatpush1.bf16.msra.mxu0 %v738
    %1083 = vmatprep.subr.bf16.mxu0 %v743
    %1084 = vmatpush1.bf16.msra.mxu0 %v742
    %1085 = vmatprep.subr.bf16.mxu0 %v747
    %1086 = vmatpush1.bf16.msra.mxu0 %v746
    %1087 = vmatprep.subr.bf16.mxu0 %v751
    %1088 = vmatpush1.bf16.msra.mxu0 %v750
    %1089 = vmatprep.subr.bf16.mxu0 %v755
    %1090 = vmatpush1.bf16.msra.mxu0 %v754
    %1091 = vmatprep.subr.bf16.mxu0 %v759
    %1092 = vmatpush1.bf16.msra.mxu0 %v758
    %1093 = vmatprep.subr.bf16.mxu0 %v763
    %1094 = vmatpush1.bf16.msra.mxu0 %v762
    %1095 = vmatprep.mubr.bf16.mxu0 %v1062
    %1096 = vmatmul.mubr.bf16.gmra.mrb[0].mxu0 %v1061
    %v1097 = vpop.f32.mrb[0].mxu0
    %v1098 = vadd.f32 %v493, %v1097
    %v1099 = vpop.f32.mrb[0].mxu0
    %v1100 = vadd.f32 %v497, %v1099
    %v1101 = vpop.f32.mrb[0].mxu0
    %v1102 = vpop.f32.mrb[0].mxu0
    %1103 = vdwg.mxu0
    %1104 = vmatprep.subr.bf16.mxu0 %v705
    %1105 = vmatpush1.bf16.msra.mxu0 %v704
    %1106 = vmatprep.subr.bf16.mxu0 %v709
    %1107 = vmatpush1.bf16.msra.mxu0 %v708
    %1108 = vmatprep.subr.bf16.mxu0 %v713
    %1109 = vmatpush1.bf16.msra.mxu0 %v712
    %1110 = vmatprep.subr.bf16.mxu0 %v717
    %1111 = vmatpush1.bf16.msra.mxu0 %v716
    %1112 = vmatprep.subr.bf16.mxu0 %v721
    %1113 = vmatpush1.bf16.msra.mxu0 %v720
    %1114 = vmatprep.subr.bf16.mxu0 %v725
    %1115 = vmatpush1.bf16.msra.mxu0 %v724
    %1116 = vmatprep.subr.bf16.mxu0 %v729
    %1117 = vmatpush1.bf16.msra.mxu0 %v728
    %1118 = vmatprep.subr.bf16.mxu0 %v733
    %1119 = vmatpush1.bf16.msra.mxu0 %v732
    %1120 = vmatprep.subr.bf16.mxu0 %v737
    %1121 = vmatpush1.bf16.msra.mxu0 %v736
    %1122 = vmatprep.subr.bf16.mxu0 %v741
    %1123 = vmatpush1.bf16.msra.mxu0 %v740
    %1124 = vmatprep.subr.bf16.mxu0 %v745
    %1125 = vmatpush1.bf16.msra.mxu0 %v744
    %1126 = vmatprep.subr.bf16.mxu0 %v749
    %1127 = vmatpush1.bf16.msra.mxu0 %v748
    %1128 = vmatprep.subr.bf16.mxu0 %v753
    %1129 = vmatpush1.bf16.msra.mxu0 %v752
    %1130 = vmatprep.subr.bf16.mxu0 %v757
    %1131 = vmatpush1.bf16.msra.mxu0 %v756
    %1132 = vmatprep.subr.bf16.mxu0 %v761
    %1133 = vmatpush1.bf16.msra.mxu0 %v760
    %1134 = vmatprep.subr.bf16.mxu0 %v765
    %1135 = vmatpush1.bf16.msra.mxu0 %v764
    %1136 = vmatprep.mubr.bf16.mxu0 %v1062
    %1137 = vmatmul.mubr.bf16.gmra.mrb[0].mxu0 %v1061
    %v1138 = vpop.f32.mrb[0].mxu0
    %v1139 = vadd.f32 %v501, %v1138
    %v1140 = vpop.f32.mrb[0].mxu0
    %v1141 = vadd.f32 %v505, %v1140
    %v1142 = vpop.f32.mrb[0].mxu0
    %v1143 = vpop.f32.mrb[0].mxu0
    %1144 = vdwg.mxu0
    %v1145 = vxor.u32 %v1098, 2147483648
    %v1146 = vmul.f32 %v1145, 1.442695
    %v1147 = vpow.pop %v1146
    %v1148 = vadd.f32 %v1147, 1.0
    %v1149 = vrcp.pop %v1148
    %v1150 = vmul.f32 1.0, %v1149
    %v1151 = vxor.u32 %v1100, 2147483648
    %v1152 = vmul.f32 %v1151, 1.442695
    %v1153 = vpow.pop %v1152
    %v1154 = vadd.f32 %v1153, 1.0
    %v1155 = vrcp.pop %v1154
    %v1156 = vmul.f32 1.0, %v1155
    %v1157 = vtanh.pop %v1139
    %v1158 = vxor.u32 %v1141, 2147483648
    %v1159 = vmul.f32 %v1158, 1.442695
    %v1160 = vpow.pop %v1159
    %v1161 = vadd.f32 %v1160, 1.0
    %v1162 = vrcp.pop %v1161
    %v1163 = vmul.f32 1.0, %v1162
    %v1164 = vmul.f32 %v1156, %v933
    %v1165 = vmul.f32 %v1150, %v1157
    %v1166 = vadd.f32 %v1164, %v1165
    %v1167 = vtanh.pop %v1166
    %v1168 = vmul.f32 %v1163, %v1167
    %s1169 = scalar_lea.vmem %s0, 16
    %v1170 = vld [vmem:[%s1169] sm:$0xff]
    %1172 = vset.pattern.permute.xlu0 0
    %1173 = vperm.xlu0 %1172, %v1170
    %v1174 = vpop.permute.xlu0 %1173
    %v1176 = vmul.f32 %v1174, %v75
    %v1177 = vmul.f32 %v1174, %v79
    %v1178 = vmul.f32 %v1174, %v83
    %v1179 = vmul.f32 %v1174, %v87
    %v1180 = vadd.f32 %v1176, %v100
    %v1181 = vadd.f32 %v1177, %v104
    %v1182 = vadd.f32 %v1178, %v108
    %v1183 = vadd.f32 %v1179, %v112
    %1184 = vmatprep.subr.bf16.mxu0 %v250
    %1185 = vmatpush1.bf16.msra.mxu0 %v249
    %1186 = vmatprep.subr.bf16.mxu0 %v254
    %1187 = vmatpush1.bf16.msra.mxu0 %v253
    %1188 = vmatprep.subr.bf16.mxu0 %v258
    %1189 = vmatpush1.bf16.msra.mxu0 %v257
    %1190 = vmatprep.subr.bf16.mxu0 %v262
    %1191 = vmatpush1.bf16.msra.mxu0 %v261
    %1192 = vmatprep.subr.bf16.mxu0 %v266
    %1193 = vmatpush1.bf16.msra.mxu0 %v265
    %1194 = vmatprep.subr.bf16.mxu0 %v270
    %1195 = vmatpush1.bf16.msra.mxu0 %v269
    %1196 = vmatprep.subr.bf16.mxu0 %v274
    %1197 = vmatpush1.bf16.msra.mxu0 %v273
    %1198 = vmatprep.subr.bf16.mxu0 %v278
    %1199 = vmatpush1.bf16.msra.mxu0 %v277
    %1200 = vmatprep.subr.bf16.mxu0 0
    %1201 = vmatpush1.bf16.msra.mxu0 0
    %1202 = vmatprep.subr.bf16.mxu0 0
    %1203 = vmatpush1.bf16.msra.mxu0 0
    %1204 = vmatprep.subr.bf16.mxu0 0
    %1205 = vmatpush1.bf16.msra.mxu0 0
    %1206 = vmatprep.subr.bf16.mxu0 0
    %1207 = vmatpush1.bf16.msra.mxu0 0
    %1208 = vmatprep.subr.bf16.mxu0 0
    %1209 = vmatpush1.bf16.msra.mxu0 0
    %1210 = vmatprep.subr.bf16.mxu0 0
    %1211 = vmatpush1.bf16.msra.mxu0 0
    %1212 = vmatprep.subr.bf16.mxu0 0
    %1213 = vmatpush1.bf16.msra.mxu0 0
    %1214 = vmatprep.subr.bf16.mxu0 0
    %1215 = vmatpush1.bf16.msra.mxu0 0
    %1216 = vmatprep.mubr.bf16.mxu0 0
    %1217 = vmatmul.mubr.bf16.gmra.mrb[0].mxu0 %v1061
    %v1218 = vpop.f32.mrb[0].mxu0
    %v1219 = vadd.f32 0.0, %v1218
    %v1220 = vpop.f32.mrb[0].mxu0
    %v1221 = vadd.f32 0.0, %v1220
    %v1222 = vpop.f32.mrb[0].mxu0
    %v1223 = vpop.f32.mrb[0].mxu0
    %1224 = vdwg.mxu0
    %1225 = vmatprep.subr.bf16.mxu0 %v252
    %1226 = vmatpush1.bf16.msra.mxu0 %v251
    %1227 = vmatprep.subr.bf16.mxu0 %v256
    %1228 = vmatpush1.bf16.msra.mxu0 %v255
    %1229 = vmatprep.subr.bf16.mxu0 %v260
    %1230 = vmatpush1.bf16.msra.mxu0 %v259
    %1231 = vmatprep.subr.bf16.mxu0 %v264
    %1232 = vmatpush1.bf16.msra.mxu0 %v263
    %1233 = vmatprep.subr.bf16.mxu0 %v268
    %1234 = vmatpush1.bf16.msra.mxu0 %v267
    %1235 = vmatprep.subr.bf16.mxu0 %v272
    %1236 = vmatpush1.bf16.msra.mxu0 %v271
    %1237 = vmatprep.subr.bf16.mxu0 %v276
    %1238 = vmatpush1.bf16.msra.mxu0 %v275
    %1239 = vmatprep.subr.bf16.mxu0 %v280
    %1240 = vmatpush1.bf16.msra.mxu0 %v279
    %1241 = vmatprep.subr.bf16.mxu0 0
    %1242 = vmatpush1.bf16.msra.mxu0 0
    %1243 = vmatprep.subr.bf16.mxu0 0
    %1244 = vmatpush1.bf16.msra.mxu0 0
    %1245 = vmatprep.subr.bf16.mxu0 0
    %1246 = vmatpush1.bf16.msra.mxu0 0
    %1247 = vmatprep.subr.bf16.mxu0 0
    %1248 = vmatpush1.bf16.msra.mxu0 0
    %1249 = vmatprep.subr.bf16.mxu0 0
    %1250 = vmatpush1.bf16.msra.mxu0 0
    %1251 = vmatprep.subr.bf16.mxu0 0
    %1252 = vmatpush1.bf16.msra.mxu0 0
    %1253 = vmatprep.subr.bf16.mxu0 0
    %1254 = vmatpush1.bf16.msra.mxu0 0
    %1255 = vmatprep.subr.bf16.mxu0 0
    %1256 = vmatpush1.bf16.msra.mxu0 0
    %1257 = vmatprep.mubr.bf16.mxu0 0
    %1258 = vmatmul.mubr.bf16.gmra.mrb[0].mxu0 %v1061
    %v1259 = vpop.f32.mrb[0].mxu0
    %v1260 = vadd.f32 0.0, %v1259
    %v1261 = vpop.f32.mrb[0].mxu0
    %v1262 = vadd.f32 0.0, %v1261
    %v1263 = vpop.f32.mrb[0].mxu0
    %v1264 = vpop.f32.mrb[0].mxu0
    %1265 = vdwg.mxu0
    %v1266 = vadd.f32 %v1180, %v1219
    %v1267 = vadd.f32 %v1181, %v1221
    %v1268 = vadd.f32 %v1182, %v1260
    %v1269 = vadd.f32 %v1183, %v1262
    %v1270 = vxor.u32 %v1266, 2147483648
    %v1271 = vmul.f32 %v1270, 1.442695
    %v1272 = vpow.pop %v1271
    %v1273 = vadd.f32 %v1272, 1.0
    %v1274 = vrcp.pop %v1273
    %v1275 = vmul.f32 1.0, %v1274
    %v1276 = vxor.u32 %v1267, 2147483648
    %v1277 = vmul.f32 %v1276, 1.442695
    %v1278 = vpow.pop %v1277
    %v1279 = vadd.f32 %v1278, 1.0
    %v1280 = vrcp.pop %v1279
    %v1281 = vmul.f32 1.0, %v1280
    %v1282 = vtanh.pop %v1268
    %v1283 = vxor.u32 %v1269, 2147483648
    %v1284 = vmul.f32 %v1283, 1.442695
    %v1285 = vpow.pop %v1284
    %v1286 = vadd.f32 %v1285, 1.0
    %v1287 = vrcp.pop %v1286
    %v1288 = vmul.f32 1.0, %v1287
    %v1289 = vmul.f32 %v1281, %v1058
    %v1290 = vmul.f32 %v1275, %v1282
    %v1291 = vadd.f32 %v1289, %v1290
    %v1292 = vtanh.pop %v1291
    %v1293 = vmul.f32 %v1288, %v1292
    %v1294 = vpack.c.bf16 %v1293, %v1293
    %v1295 = vpack.c.bf16 %v1168, %v1168
    %1296 = vmatprep.subr.bf16.mxu0 %v703
    %1297 = vmatpush1.bf16.msra.mxu0 %v702
    %1298 = vmatprep.subr.bf16.mxu0 %v707
    %1299 = vmatpush1.bf16.msra.mxu0 %v706
    %1300 = vmatprep.subr.bf16.mxu0 %v711
    %1301 = vmatpush1.bf16.msra.mxu0 %v710
    %1302 = vmatprep.subr.bf16.mxu0 %v715
    %1303 = vmatpush1.bf16.msra.mxu0 %v714
    %1304 = vmatprep.subr.bf16.mxu0 %v719
    %1305 = vmatpush1.bf16.msra.mxu0 %v718
    %1306 = vmatprep.subr.bf16.mxu0 %v723
    %1307 = vmatpush1.bf16.msra.mxu0 %v722
    %1308 = vmatprep.subr.bf16.mxu0 %v727
    %1309 = vmatpush1.bf16.msra.mxu0 %v726
    %1310 = vmatprep.subr.bf16.mxu0 %v731
    %1311 = vmatpush1.bf16.msra.mxu0 %v730
    %1312 = vmatprep.subr.bf16.mxu0 %v735
    %1313 = vmatpush1.bf16.msra.mxu0 %v734
    %1314 = vmatprep.subr.bf16.mxu0 %v739
    %1315 = vmatpush1.bf16.msra.mxu0 %v738
    %1316 = vmatprep.subr.bf16.mxu0 %v743
    %1317 = vmatpush1.bf16.msra.mxu0 %v742
    %1318 = vmatprep.subr.bf16.mxu0 %v747
    %1319 = vmatpush1.bf16.msra.mxu0 %v746
    %1320 = vmatprep.subr.bf16.mxu0 %v751
    %1321 = vmatpush1.bf16.msra.mxu0 %v750
    %1322 = vmatprep.subr.bf16.mxu0 %v755
    %1323 = vmatpush1.bf16.msra.mxu0 %v754
    %1324 = vmatprep.subr.bf16.mxu0 %v759
    %1325 = vmatpush1.bf16.msra.mxu0 %v758
    %1326 = vmatprep.subr.bf16.mxu0 %v763
    %1327 = vmatpush1.bf16.msra.mxu0 %v762
    %1328 = vmatprep.mubr.bf16.mxu0 %v1295
    %1329 = vmatmul.mubr.bf16.gmra.mrb[0].mxu0 %v1294
    %v1330 = vpop.f32.mrb[0].mxu0
    %v1331 = vadd.f32 %v493, %v1330
    %v1332 = vpop.f32.mrb[0].mxu0
    %v1333 = vadd.f32 %v497, %v1332
    %v1334 = vpop.f32.mrb[0].mxu0
    %v1335 = vpop.f32.mrb[0].mxu0
    %1336 = vdwg.mxu0
    %1337 = vmatprep.subr.bf16.mxu0 %v705
    %1338 = vmatpush1.bf16.msra.mxu0 %v704
    %1339 = vmatprep.subr.bf16.mxu0 %v709
    %1340 = vmatpush1.bf16.msra.mxu0 %v708
    %1341 = vmatprep.subr.bf16.mxu0 %v713
    %1342 = vmatpush1.bf16.msra.mxu0 %v712
    %1343 = vmatprep.subr.bf16.mxu0 %v717
    %1344 = vmatpush1.bf16.msra.mxu0 %v716
    %1345 = vmatprep.subr.bf16.mxu0 %v721
    %1346 = vmatpush1.bf16.msra.mxu0 %v720
    %1347 = vmatprep.subr.bf16.mxu0 %v725
    %1348 = vmatpush1.bf16.msra.mxu0 %v724
    %1349 = vmatprep.subr.bf16.mxu0 %v729
    %1350 = vmatpush1.bf16.msra.mxu0 %v728
    %1351 = vmatprep.subr.bf16.mxu0 %v733
    %1352 = vmatpush1.bf16.msra.mxu0 %v732
    %1353 = vmatprep.subr.bf16.mxu0 %v737
    %1354 = vmatpush1.bf16.msra.mxu0 %v736
    %1355 = vmatprep.subr.bf16.mxu0 %v741
    %1356 = vmatpush1.bf16.msra.mxu0 %v740
    %1357 = vmatprep.subr.bf16.mxu0 %v745
    %1358 = vmatpush1.bf16.msra.mxu0 %v744
    %1359 = vmatprep.subr.bf16.mxu0 %v749
    %1360 = vmatpush1.bf16.msra.mxu0 %v748
    %1361 = vmatprep.subr.bf16.mxu0 %v753
    %1362 = vmatpush1.bf16.msra.mxu0 %v752
    %1363 = vmatprep.subr.bf16.mxu0 %v757
    %1364 = vmatpush1.bf16.msra.mxu0 %v756
    %1365 = vmatprep.subr.bf16.mxu0 %v761
    %1366 = vmatpush1.bf16.msra.mxu0 %v760
    %1367 = vmatprep.subr.bf16.mxu0 %v765
    %1368 = vmatpush1.bf16.msra.mxu0 %v764
    %1369 = vmatprep.mubr.bf16.mxu0 %v1295
    %1370 = vmatmul.mubr.bf16.gmra.mrb[0].mxu0 %v1294
    %v1371 = vpop.f32.mrb[0].mxu0
    %v1372 = vadd.f32 %v501, %v1371
    %v1373 = vpop.f32.mrb[0].mxu0
    %v1374 = vadd.f32 %v505, %v1373
    %v1375 = vpop.f32.mrb[0].mxu0
    %v1376 = vpop.f32.mrb[0].mxu0
    %1377 = vdwg.mxu0
    %v1378 = vxor.u32 %v1331, 2147483648
    %v1379 = vmul.f32 %v1378, 1.442695
    %v1380 = vpow.pop %v1379
    %v1381 = vadd.f32 %v1380, 1.0
    %v1382 = vrcp.pop %v1381
    %v1383 = vmul.f32 1.0, %v1382
    %v1384 = vxor.u32 %v1333, 2147483648
    %v1385 = vmul.f32 %v1384, 1.442695
    %v1386 = vpow.pop %v1385
    %v1387 = vadd.f32 %v1386, 1.0
    %v1388 = vrcp.pop %v1387
    %v1389 = vmul.f32 1.0, %v1388
    %v1390 = vtanh.pop %v1372
    %v1391 = vxor.u32 %v1374, 2147483648
    %v1392 = vmul.f32 %v1391, 1.442695
    %v1393 = vpow.pop %v1392
    %v1394 = vadd.f32 %v1393, 1.0
    %v1395 = vrcp.pop %v1394
    %v1396 = vmul.f32 1.0, %v1395
    %v1397 = vmul.f32 %v1389, %v1166
    %v1398 = vmul.f32 %v1383, %v1390
    %v1399 = vadd.f32 %v1397, %v1398
    %v1400 = vtanh.pop %v1399
    %v1401 = vmul.f32 %v1396, %v1400
    %s1402 = scalar_lea.vmem %s0, 24
    %v1403 = vld [vmem:[%s1402] sm:$0xff]
    %1405 = vset.pattern.permute.xlu0 0
    %1406 = vperm.xlu0 %1405, %v1403
    %v1407 = vpop.permute.xlu0 %1406
    %v1409 = vmul.f32 %v1407, %v75
    %v1410 = vmul.f32 %v1407, %v79
    %v1411 = vmul.f32 %v1407, %v83
    %v1412 = vmul.f32 %v1407, %v87
    %v1413 = vadd.f32 %v1409, %v100
    %v1414 = vadd.f32 %v1410, %v104
    %v1415 = vadd.f32 %v1411, %v108
    %v1416 = vadd.f32 %v1412, %v112
    %1417 = vmatprep.subr.bf16.mxu0 %v250
    %1418 = vmatpush1.bf16.msra.mxu0 %v249
    %1419 = vmatprep.subr.bf16.mxu0 %v254
    %1420 = vmatpush1.bf16.msra.mxu0 %v253
    %1421 = vmatprep.subr.bf16.mxu0 %v258
    %1422 = vmatpush1.bf16.msra.mxu0 %v257
    %1423 = vmatprep.subr.bf16.mxu0 %v262
    %1424 = vmatpush1.bf16.msra.mxu0 %v261
    %1425 = vmatprep.subr.bf16.mxu0 %v266
    %1426 = vmatpush1.bf16.msra.mxu0 %v265
    %1427 = vmatprep.subr.bf16.mxu0 %v270
    %1428 = vmatpush1.bf16.msra.mxu0 %v269
    %1429 = vmatprep.subr.bf16.mxu0 %v274
    %1430 = vmatpush1.bf16.msra.mxu0 %v273
    %1431 = vmatprep.subr.bf16.mxu0 %v278
    %1432 = vmatpush1.bf16.msra.mxu0 %v277
    %1433 = vmatprep.subr.bf16.mxu0 0
    %1434 = vmatpush1.bf16.msra.mxu0 0
    %1435 = vmatprep.subr.bf16.mxu0 0
    %1436 = vmatpush1.bf16.msra.mxu0 0
    %1437 = vmatprep.subr.bf16.mxu0 0
    %1438 = vmatpush1.bf16.msra.mxu0 0
    %1439 = vmatprep.subr.bf16.mxu0 0
    %1440 = vmatpush1.bf16.msra.mxu0 0
    %1441 = vmatprep.subr.bf16.mxu0 0
    %1442 = vmatpush1.bf16.msra.mxu0 0
    %1443 = vmatprep.subr.bf16.mxu0 0
    %1444 = vmatpush1.bf16.msra.mxu0 0
    %1445 = vmatprep.subr.bf16.mxu0 0
    %1446 = vmatpush1.bf16.msra.mxu0 0
    %1447 = vmatprep.subr.bf16.mxu0 0
    %1448 = vmatpush1.bf16.msra.mxu0 0
    %1449 = vmatprep.mubr.bf16.mxu0 0
    %1450 = vmatmul.mubr.bf16.gmra.mrb[0].mxu0 %v1294
    %v1451 = vpop.f32.mrb[0].mxu0
    %v1452 = vadd.f32 0.0, %v1451
    %v1453 = vpop.f32.mrb[0].mxu0
    %v1454 = vadd.f32 0.0, %v1453
    %v1455 = vpop.f32.mrb[0].mxu0
    %v1456 = vpop.f32.mrb[0].mxu0
    %1457 = vdwg.mxu0
    %1458 = vmatprep.subr.bf16.mxu0 %v252
    %1459 = vmatpush1.bf16.msra.mxu0 %v251
    %1460 = vmatprep.subr.bf16.mxu0 %v256
    %1461 = vmatpush1.bf16.msra.mxu0 %v255
    %1462 = vmatprep.subr.bf16.mxu0 %v260
    %1463 = vmatpush1.bf16.msra.mxu0 %v259
    %1464 = vmatprep.subr.bf16.mxu0 %v264
    %1465 = vmatpush1.bf16.msra.mxu0 %v263
    %1466 = vmatprep.subr.bf16.mxu0 %v268
    %1467 = vmatpush1.bf16.msra.mxu0 %v267
    %1468 = vmatprep.subr.bf16.mxu0 %v272
    %1469 = vmatpush1.bf16.msra.mxu0 %v271
    %1470 = vmatprep.subr.bf16.mxu0 %v276
    %1471 = vmatpush1.bf16.msra.mxu0 %v275
    %1472 = vmatprep.subr.bf16.mxu0 %v280
    %1473 = vmatpush1.bf16.msra.mxu0 %v279
    %1474 = vmatprep.subr.bf16.mxu0 0
    %1475 = vmatpush1.bf16.msra.mxu0 0
    %1476 = vmatprep.subr.bf16.mxu0 0
    %1477 = vmatpush1.bf16.msra.mxu0 0
    %1478 = vmatprep.subr.bf16.mxu0 0
    %1479 = vmatpush1.bf16.msra.mxu0 0
    %1480 = vmatprep.subr.bf16.mxu0 0
    %1481 = vmatpush1.bf16.msra.mxu0 0
    %1482 = vmatprep.subr.bf16.mxu0 0
    %1483 = vmatpush1.bf16.msra.mxu0 0
    %1484 = vmatprep.subr.bf16.mxu0 0
    %1485 = vmatpush1.bf16.msra.mxu0 0
    %1486 = vmatprep.subr.bf16.mxu0 0
    %1487 = vmatpush1.bf16.msra.mxu0 0
    %1488 = vmatprep.subr.bf16.mxu0 0
    %1489 = vmatpush1.bf16.msra.mxu0 0
    %1490 = vmatprep.mubr.bf16.mxu0 0
    %1491 = vmatmul.mubr.bf16.gmra.mrb[0].mxu0 %v1294
    %v1492 = vpop.f32.mrb[0].mxu0
    %v1493 = vadd.f32 0.0, %v1492
    %v1494 = vpop.f32.mrb[0].mxu0
    %v1495 = vadd.f32 0.0, %v1494
    %v1496 = vpop.f32.mrb[0].mxu0
    %v1497 = vpop.f32.mrb[0].mxu0
    %1498 = vdwg.mxu0
    %v1499 = vadd.f32 %v1413, %v1452
    %v1500 = vadd.f32 %v1414, %v1454
    %v1501 = vadd.f32 %v1415, %v1493
    %v1502 = vadd.f32 %v1416, %v1495
    %v1503 = vxor.u32 %v1499, 2147483648
    %v1504 = vmul.f32 %v1503, 1.442695
    %v1505 = vpow.pop %v1504
    %v1506 = vadd.f32 %v1505, 1.0
    %v1507 = vrcp.pop %v1506
    %v1508 = vmul.f32 1.0, %v1507
    %v1509 = vxor.u32 %v1500, 2147483648
    %v1510 = vmul.f32 %v1509, 1.442695
    %v1511 = vpow.pop %v1510
    %v1512 = vadd.f32 %v1511, 1.0
    %v1513 = vrcp.pop %v1512
    %v1514 = vmul.f32 1.0, %v1513
    %v1515 = vtanh.pop %v1501
    %v1516 = vxor.u32 %v1502, 2147483648
    %v1517 = vmul.f32 %v1516, 1.442695
    %v1518 = vpow.pop %v1517
    %v1519 = vadd.f32 %v1518, 1.0
    %v1520 = vrcp.pop %v1519
    %v1521 = vmul.f32 1.0, %v1520
    %v1522 = vmul.f32 %v1514, %v1291
    %v1523 = vmul.f32 %v1508, %v1515
    %v1524 = vadd.f32 %v1522, %v1523
    %v1525 = vtanh.pop %v1524
    %v1526 = vmul.f32 %v1521, %v1525
    %v1527 = vpack.c.bf16 %v1526, %v1526
    %v1528 = vpack.c.bf16 %v1401, %v1401
    %1529 = vmatprep.subr.bf16.mxu0 %v703
    %1530 = vmatpush1.bf16.msra.mxu0 %v702
    %1531 = vmatprep.subr.bf16.mxu0 %v707
    %1532 = vmatpush1.bf16.msra.mxu0 %v706
    %1533 = vmatprep.subr.bf16.mxu0 %v711
    %1534 = vmatpush1.bf16.msra.mxu0 %v710
    %1535 = vmatprep.subr.bf16.mxu0 %v715
    %1536 = vmatpush1.bf16.msra.mxu0 %v714
    %1537 = vmatprep.subr.bf16.mxu0 %v719
    %1538 = vmatpush1.bf16.msra.mxu0 %v718
    %1539 = vmatprep.subr.bf16.mxu0 %v723
    %1540 = vmatpush1.bf16.msra.mxu0 %v722
    %1541 = vmatprep.subr.bf16.mxu0 %v727
    %1542 = vmatpush1.bf16.msra.mxu0 %v726
    %1543 = vmatprep.subr.bf16.mxu0 %v731
    %1544 = vmatpush1.bf16.msra.mxu0 %v730
    %1545 = vmatprep.subr.bf16.mxu0 %v735
    %1546 = vmatpush1.bf16.msra.mxu0 %v734
    %1547 = vmatprep.subr.bf16.mxu0 %v739
    %1548 = vmatpush1.bf16.msra.mxu0 %v738
    %1549 = vmatprep.subr.bf16.mxu0 %v743
    %1550 = vmatpush1.bf16.msra.mxu0 %v742
    %1551 = vmatprep.subr.bf16.mxu0 %v747
    %1552 = vmatpush1.bf16.msra.mxu0 %v746
    %1553 = vmatprep.subr.bf16.mxu0 %v751
    %1554 = vmatpush1.bf16.msra.mxu0 %v750
    %1555 = vmatprep.subr.bf16.mxu0 %v755
    %1556 = vmatpush1.bf16.msra.mxu0 %v754
    %1557 = vmatprep.subr.bf16.mxu0 %v759
    %1558 = vmatpush1.bf16.msra.mxu0 %v758
    %1559 = vmatprep.subr.bf16.mxu0 %v763
    %1560 = vmatpush1.bf16.msra.mxu0 %v762
    %1561 = vmatprep.mubr.bf16.mxu0 %v1528
    %1562 = vmatmul.mubr.bf16.gmra.mrb[0].mxu0 %v1527
    %v1563 = vpop.f32.mrb[0].mxu0
    %v1564 = vadd.f32 %v493, %v1563
    %v1565 = vpop.f32.mrb[0].mxu0
    %v1566 = vadd.f32 %v497, %v1565
    %v1567 = vpop.f32.mrb[0].mxu0
    %v1568 = vpop.f32.mrb[0].mxu0
    %1569 = vdwg.mxu0
    %1570 = vmatprep.subr.bf16.mxu0 %v705
    %1571 = vmatpush1.bf16.msra.mxu0 %v704
    %1572 = vmatprep.subr.bf16.mxu0 %v709
    %1573 = vmatpush1.bf16.msra.mxu0 %v708
    %1574 = vmatprep.subr.bf16.mxu0 %v713
    %1575 = vmatpush1.bf16.msra.mxu0 %v712
    %1576 = vmatprep.subr.bf16.mxu0 %v717
    %1577 = vmatpush1.bf16.msra.mxu0 %v716
    %1578 = vmatprep.subr.bf16.mxu0 %v721
    %1579 = vmatpush1.bf16.msra.mxu0 %v720
    %1580 = vmatprep.subr.bf16.mxu0 %v725
    %1581 = vmatpush1.bf16.msra.mxu0 %v724
    %1582 = vmatprep.subr.bf16.mxu0 %v729
    %1583 = vmatpush1.bf16.msra.mxu0 %v728
    %1584 = vmatprep.subr.bf16.mxu0 %v733
    %1585 = vmatpush1.bf16.msra.mxu0 %v732
    %1586 = vmatprep.subr.bf16.mxu0 %v737
    %1587 = vmatpush1.bf16.msra.mxu0 %v736
    %1588 = vmatprep.subr.bf16.mxu0 %v741
    %1589 = vmatpush1.bf16.msra.mxu0 %v740
    %1590 = vmatprep.subr.bf16.mxu0 %v745
    %1591 = vmatpush1.bf16.msra.mxu0 %v744
    %1592 = vmatprep.subr.bf16.mxu0 %v749
    %1593 = vmatpush1.bf16.msra.mxu0 %v748
    %1594 = vmatprep.subr.bf16.mxu0 %v753
    %1595 = vmatpush1.bf16.msra.mxu0 %v752
    %1596 = vmatprep.subr.bf16.mxu0 %v757
    %1597 = vmatpush1.bf16.msra.mxu0 %v756
    %1598 = vmatprep.subr.bf16.mxu0 %v761
    %1599 = vmatpush1.bf16.msra.mxu0 %v760
    %1600 = vmatprep.subr.bf16.mxu0 %v765
    %1601 = vmatpush1.bf16.msra.mxu0 %v764
    %1602 = vmatprep.mubr.bf16.mxu0 %v1528
    %1603 = vmatmul.mubr.bf16.gmra.mrb[0].mxu0 %v1527
    %v1604 = vpop.f32.mrb[0].mxu0
    %v1605 = vadd.f32 %v501, %v1604
    %v1606 = vpop.f32.mrb[0].mxu0
    %v1607 = vadd.f32 %v505, %v1606
    %v1608 = vpop.f32.mrb[0].mxu0
    %v1609 = vpop.f32.mrb[0].mxu0
    %1610 = vdwg.mxu0
    %v1611 = vxor.u32 %v1564, 2147483648
    %v1612 = vmul.f32 %v1611, 1.442695
    %v1613 = vpow.pop %v1612
    %v1614 = vadd.f32 %v1613, 1.0
    %v1615 = vrcp.pop %v1614
    %v1616 = vmul.f32 1.0, %v1615
    %v1617 = vxor.u32 %v1566, 2147483648
    %v1618 = vmul.f32 %v1617, 1.442695
    %v1619 = vpow.pop %v1618
    %v1620 = vadd.f32 %v1619, 1.0
    %v1621 = vrcp.pop %v1620
    %v1622 = vmul.f32 1.0, %v1621
    %v1623 = vtanh.pop %v1605
    %v1624 = vxor.u32 %v1607, 2147483648
    %v1625 = vmul.f32 %v1624, 1.442695
    %v1626 = vpow.pop %v1625
    %v1627 = vadd.f32 %v1626, 1.0
    %v1628 = vrcp.pop %v1627
    %v1629 = vmul.f32 1.0, %v1628
    %v1630 = vmul.f32 %v1622, %v1399
    %v1631 = vmul.f32 %v1616, %v1623
    %v1632 = vadd.f32 %v1630, %v1631
    %v1633 = vtanh.pop %v1632
    %v1634 = vmul.f32 %v1629, %v1633
    %s1635 = scalar_lea.vmem %s0, 32
    %v1636 = vld [vmem:[%s1635] sm:$0xff]
    %1638 = vset.pattern.permute.xlu0 0
    %1639 = vperm.xlu0 %1638, %v1636
    %v1640 = vpop.permute.xlu0 %1639
    %v1642 = vmul.f32 %v1640, %v75
    %v1643 = vmul.f32 %v1640, %v79
    %v1644 = vmul.f32 %v1640, %v83
    %v1645 = vmul.f32 %v1640, %v87
    %v1646 = vadd.f32 %v1642, %v100
    %v1647 = vadd.f32 %v1643, %v104
    %v1648 = vadd.f32 %v1644, %v108
    %v1649 = vadd.f32 %v1645, %v112
    %1650 = vmatprep.subr.bf16.mxu0 %v250
    %1651 = vmatpush1.bf16.msra.mxu0 %v249
    %1652 = vmatprep.subr.bf16.mxu0 %v254
    %1653 = vmatpush1.bf16.msra.mxu0 %v253
    %1654 = vmatprep.subr.bf16.mxu0 %v258
    %1655 = vmatpush1.bf16.msra.mxu0 %v257
    %1656 = vmatprep.subr.bf16.mxu0 %v262
    %1657 = vmatpush1.bf16.msra.mxu0 %v261
    %1658 = vmatprep.subr.bf16.mxu0 %v266
    %1659 = vmatpush1.bf16.msra.mxu0 %v265
    %1660 = vmatprep.subr.bf16.mxu0 %v270
    %1661 = vmatpush1.bf16.msra.mxu0 %v269
    %1662 = vmatprep.subr.bf16.mxu0 %v274
    %1663 = vmatpush1.bf16.msra.mxu0 %v273
    %1664 = vmatprep.subr.bf16.mxu0 %v278
    %1665 = vmatpush1.bf16.msra.mxu0 %v277
    %1666 = vmatprep.subr.bf16.mxu0 0
    %1667 = vmatpush1.bf16.msra.mxu0 0
    %1668 = vmatprep.subr.bf16.mxu0 0
    %1669 = vmatpush1.bf16.msra.mxu0 0
    %1670 = vmatprep.subr.bf16.mxu0 0
    %1671 = vmatpush1.bf16.msra.mxu0 0
    %1672 = vmatprep.subr.bf16.mxu0 0
    %1673 = vmatpush1.bf16.msra.mxu0 0
    %1674 = vmatprep.subr.bf16.mxu0 0
    %1675 = vmatpush1.bf16.msra.mxu0 0
    %1676 = vmatprep.subr.bf16.mxu0 0
    %1677 = vmatpush1.bf16.msra.mxu0 0
    %1678 = vmatprep.subr.bf16.mxu0 0
    %1679 = vmatpush1.bf16.msra.mxu0 0
    %1680 = vmatprep.subr.bf16.mxu0 0
    %1681 = vmatpush1.bf16.msra.mxu0 0
    %1682 = vmatprep.mubr.bf16.mxu0 0
    %1683 = vmatmul.mubr.bf16.gmra.mrb[0].mxu0 %v1527
    %v1684 = vpop.f32.mrb[0].mxu0
    %v1685 = vadd.f32 0.0, %v1684
    %v1686 = vpop.f32.mrb[0].mxu0
    %v1687 = vadd.f32 0.0, %v1686
    %v1688 = vpop.f32.mrb[0].mxu0
    %v1689 = vpop.f32.mrb[0].mxu0
    %1690 = vdwg.mxu0
    %1691 = vmatprep.subr.bf16.mxu0 %v252
    %1692 = vmatpush1.bf16.msra.mxu0 %v251
    %1693 = vmatprep.subr.bf16.mxu0 %v256
    %1694 = vmatpush1.bf16.msra.mxu0 %v255
    %1695 = vmatprep.subr.bf16.mxu0 %v260
    %1696 = vmatpush1.bf16.msra.mxu0 %v259
    %1697 = vmatprep.subr.bf16.mxu0 %v264
    %1698 = vmatpush1.bf16.msra.mxu0 %v263
    %1699 = vmatprep.subr.bf16.mxu0 %v268
    %1700 = vmatpush1.bf16.msra.mxu0 %v267
    %1701 = vmatprep.subr.bf16.mxu0 %v272
    %1702 = vmatpush1.bf16.msra.mxu0 %v271
    %1703 = vmatprep.subr.bf16.mxu0 %v276
    %1704 = vmatpush1.bf16.msra.mxu0 %v275
    %1705 = vmatprep.subr.bf16.mxu0 %v280
    %1706 = vmatpush1.bf16.msra.mxu0 %v279
    %1707 = vmatprep.subr.bf16.mxu0 0
    %1708 = vmatpush1.bf16.msra.mxu0 0
    %1709 = vmatprep.subr.bf16.mxu0 0
    %1710 = vmatpush1.bf16.msra.mxu0 0
    %1711 = vmatprep.subr.bf16.mxu0 0
    %1712 = vmatpush1.bf16.msra.mxu0 0
    %1713 = vmatprep.subr.bf16.mxu0 0
    %1714 = vmatpush1.bf16.msra.mxu0 0
    %1715 = vmatprep.subr.bf16.mxu0 0
    %1716 = vmatpush1.bf16.msra.mxu0 0
    %1717 = vmatprep.subr.bf16.mxu0 0
    %1718 = vmatpush1.bf16.msra.mxu0 0
    %1719 = vmatprep.subr.bf16.mxu0 0
    %1720 = vmatpush1.bf16.msra.mxu0 0
    %1721 = vmatprep.subr.bf16.mxu0 0
    %1722 = vmatpush1.bf16.msra.mxu0 0
    %1723 = vmatprep.mubr.bf16.mxu0 0
    %1724 = vmatmul.mubr.bf16.gmra.mrb[0].mxu0 %v1527
    %v1725 = vpop.f32.mrb[0].mxu0
    %v1726 = vadd.f32 0.0, %v1725
    %v1727 = vpop.f32.mrb[0].mxu0
    %v1728 = vadd.f32 0.0, %v1727
    %v1729 = vpop.f32.mrb[0].mxu0
    %v1730 = vpop.f32.mrb[0].mxu0
    %1731 = vdwg.mxu0
    %v1732 = vadd.f32 %v1646, %v1685
    %v1733 = vadd.f32 %v1647, %v1687
    %v1734 = vadd.f32 %v1648, %v1726
    %v1735 = vadd.f32 %v1649, %v1728
    %v1736 = vxor.u32 %v1732, 2147483648
    %v1737 = vmul.f32 %v1736, 1.442695
    %v1738 = vpow.pop %v1737
    %v1739 = vadd.f32 %v1738, 1.0
    %v1740 = vrcp.pop %v1739
    %v1741 = vmul.f32 1.0, %v1740
    %v1742 = vxor.u32 %v1733, 2147483648
    %v1743 = vmul.f32 %v1742, 1.442695
    %v1744 = vpow.pop %v1743
    %v1745 = vadd.f32 %v1744, 1.0
    %v1746 = vrcp.pop %v1745
    %v1747 = vmul.f32 1.0, %v1746
    %v1748 = vtanh.pop %v1734
    %v1749 = vxor.u32 %v1735, 2147483648
    %v1750 = vmul.f32 %v1749, 1.442695
    %v1751 = vpow.pop %v1750
    %v1752 = vadd.f32 %v1751, 1.0
    %v1753 = vrcp.pop %v1752
    %v1754 = vmul.f32 1.0, %v1753
    %v1755 = vmul.f32 %v1747, %v1524
    %v1756 = vmul.f32 %v1741, %v1748
    %v1757 = vadd.f32 %v1755, %v1756
    %v1758 = vtanh.pop %v1757
    %v1759 = vmul.f32 %v1754, %v1758
    %v1760 = vpack.c.bf16 %v1759, %v1759
    %v1761 = vpack.c.bf16 %v1634, %v1634
    %1762 = vmatprep.subr.bf16.mxu0 %v703
    %1763 = vmatpush1.bf16.msra.mxu0 %v702
    %1764 = vmatprep.subr.bf16.mxu0 %v707
    %1765 = vmatpush1.bf16.msra.mxu0 %v706
    %1766 = vmatprep.subr.bf16.mxu0 %v711
    %1767 = vmatpush1.bf16.msra.mxu0 %v710
    %1768 = vmatprep.subr.bf16.mxu0 %v715
    %1769 = vmatpush1.bf16.msra.mxu0 %v714
    %1770 = vmatprep.subr.bf16.mxu0 %v719
    %1771 = vmatpush1.bf16.msra.mxu0 %v718
    %1772 = vmatprep.subr.bf16.mxu0 %v723
    %1773 = vmatpush1.bf16.msra.mxu0 %v722
    %1774 = vmatprep.subr.bf16.mxu0 %v727
    %1775 = vmatpush1.bf16.msra.mxu0 %v726
    %1776 = vmatprep.subr.bf16.mxu0 %v731
    %1777 = vmatpush1.bf16.msra.mxu0 %v730
    %1778 = vmatprep.subr.bf16.mxu0 %v735
    %1779 = vmatpush1.bf16.msra.mxu0 %v734
    %1780 = vmatprep.subr.bf16.mxu0 %v739
    %1781 = vmatpush1.bf16.msra.mxu0 %v738
    %1782 = vmatprep.subr.bf16.mxu0 %v743
    %1783 = vmatpush1.bf16.msra.mxu0 %v742
    %1784 = vmatprep.subr.bf16.mxu0 %v747
    %1785 = vmatpush1.bf16.msra.mxu0 %v746
    %1786 = vmatprep.subr.bf16.mxu0 %v751
    %1787 = vmatpush1.bf16.msra.mxu0 %v750
    %1788 = vmatprep.subr.bf16.mxu0 %v755
    %1789 = vmatpush1.bf16.msra.mxu0 %v754
    %1790 = vmatprep.subr.bf16.mxu0 %v759
    %1791 = vmatpush1.bf16.msra.mxu0 %v758
    %1792 = vmatprep.subr.bf16.mxu0 %v763
    %1793 = vmatpush1.bf16.msra.mxu0 %v762
    %1794 = vmatprep.mubr.bf16.mxu0 %v1761
    %1795 = vmatmul.mubr.bf16.gmra.mrb[0].mxu0 %v1760
    %v1796 = vpop.f32.mrb[0].mxu0
    %v1797 = vadd.f32 %v493, %v1796
    %v1798 = vpop.f32.mrb[0].mxu0
    %v1799 = vadd.f32 %v497, %v1798
    %v1800 = vpop.f32.mrb[0].mxu0
    %v1801 = vpop.f32.mrb[0].mxu0
    %1802 = vdwg.mxu0
    %1803 = vmatprep.subr.bf16.mxu0 %v705
    %1804 = vmatpush1.bf16.msra.mxu0 %v704
    %1805 = vmatprep.subr.bf16.mxu0 %v709
    %1806 = vmatpush1.bf16.msra.mxu0 %v708
    %1807 = vmatprep.subr.bf16.mxu0 %v713
    %1808 = vmatpush1.bf16.msra.mxu0 %v712
    %1809 = vmatprep.subr.bf16.mxu0 %v717
    %1810 = vmatpush1.bf16.msra.mxu0 %v716
    %1811 = vmatprep.subr.bf16.mxu0 %v721
    %1812 = vmatpush1.bf16.msra.mxu0 %v720
    %1813 = vmatprep.subr.bf16.mxu0 %v725
    %1814 = vmatpush1.bf16.msra.mxu0 %v724
    %1815 = vmatprep.subr.bf16.mxu0 %v729
    %1816 = vmatpush1.bf16.msra.mxu0 %v728
    %1817 = vmatprep.subr.bf16.mxu0 %v733
    %1818 = vmatpush1.bf16.msra.mxu0 %v732
    %1819 = vmatprep.subr.bf16.mxu0 %v737
    %1820 = vmatpush1.bf16.msra.mxu0 %v736
    %1821 = vmatprep.subr.bf16.mxu0 %v741
    %1822 = vmatpush1.bf16.msra.mxu0 %v740
    %1823 = vmatprep.subr.bf16.mxu0 %v745
    %1824 = vmatpush1.bf16.msra.mxu0 %v744
    %1825 = vmatprep.subr.bf16.mxu0 %v749
    %1826 = vmatpush1.bf16.msra.mxu0 %v748
    %1827 = vmatprep.subr.bf16.mxu0 %v753
    %1828 = vmatpush1.bf16.msra.mxu0 %v752
    %1829 = vmatprep.subr.bf16.mxu0 %v757
    %1830 = vmatpush1.bf16.msra.mxu0 %v756
    %1831 = vmatprep.subr.bf16.mxu0 %v761
    %1832 = vmatpush1.bf16.msra.mxu0 %v760
    %1833 = vmatprep.subr.bf16.mxu0 %v765
    %1834 = vmatpush1.bf16.msra.mxu0 %v764
    %1835 = vmatprep.mubr.bf16.mxu0 %v1761
    %1836 = vmatmul.mubr.bf16.gmra.mrb[0].mxu0 %v1760
    %v1837 = vpop.f32.mrb[0].mxu0
    %v1838 = vadd.f32 %v501, %v1837
    %v1839 = vpop.f32.mrb[0].mxu0
    %v1840 = vadd.f32 %v505, %v1839
    %v1841 = vpop.f32.mrb[0].mxu0
    %v1842 = vpop.f32.mrb[0].mxu0
    %1843 = vdwg.mxu0
    %v1844 = vxor.u32 %v1797, 2147483648
    %v1845 = vmul.f32 %v1844, 1.442695
    %v1846 = vpow.pop %v1845
    %v1847 = vadd.f32 %v1846, 1.0
    %v1848 = vrcp.pop %v1847
    %v1849 = vmul.f32 1.0, %v1848
    %v1850 = vxor.u32 %v1799, 2147483648
    %v1851 = vmul.f32 %v1850, 1.442695
    %v1852 = vpow.pop %v1851
    %v1853 = vadd.f32 %v1852, 1.0
    %v1854 = vrcp.pop %v1853
    %v1855 = vmul.f32 1.0, %v1854
    %v1856 = vtanh.pop %v1838
    %v1857 = vxor.u32 %v1840, 2147483648
    %v1858 = vmul.f32 %v1857, 1.442695
    %v1859 = vpow.pop %v1858
    %v1860 = vadd.f32 %v1859, 1.0
    %v1861 = vrcp.pop %v1860
    %v1862 = vmul.f32 1.0, %v1861
    %v1863 = vmul.f32 %v1855, %v1632
    %v1864 = vmul.f32 %v1849, %v1856
    %v1865 = vadd.f32 %v1863, %v1864
    %v1866 = vtanh.pop %v1865
    %v1867 = vmul.f32 %v1862, %v1866
    %s1868 = scalar_lea.vmem %s0, 40
    %v1869 = vld [vmem:[%s1868] sm:$0xff]
    %1871 = vset.pattern.permute.xlu0 0
    %1872 = vperm.xlu0 %1871, %v1869
    %v1873 = vpop.permute.xlu0 %1872
    %v1875 = vmul.f32 %v1873, %v75
    %v1876 = vmul.f32 %v1873, %v79
    %v1877 = vmul.f32 %v1873, %v83
    %v1878 = vmul.f32 %v1873, %v87
    %v1879 = vadd.f32 %v1875, %v100
    %v1880 = vadd.f32 %v1876, %v104
    %v1881 = vadd.f32 %v1877, %v108
    %v1882 = vadd.f32 %v1878, %v112
    %1883 = vmatprep.subr.bf16.mxu0 %v250
    %1884 = vmatpush1.bf16.msra.mxu0 %v249
    %1885 = vmatprep.subr.bf16.mxu0 %v254
    %1886 = vmatpush1.bf16.msra.mxu0 %v253
    %1887 = vmatprep.subr.bf16.mxu0 %v258
    %1888 = vmatpush1.bf16.msra.mxu0 %v257
    %1889 = vmatprep.subr.bf16.mxu0 %v262
    %1890 = vmatpush1.bf16.msra.mxu0 %v261
    %1891 = vmatprep.subr.bf16.mxu0 %v266
    %1892 = vmatpush1.bf16.msra.mxu0 %v265
    %1893 = vmatprep.subr.bf16.mxu0 %v270
    %1894 = vmatpush1.bf16.msra.mxu0 %v269
    %1895 = vmatprep.subr.bf16.mxu0 %v274
    %1896 = vmatpush1.bf16.msra.mxu0 %v273
    %1897 = vmatprep.subr.bf16.mxu0 %v278
    %1898 = vmatpush1.bf16.msra.mxu0 %v277
    %1899 = vmatprep.subr.bf16.mxu0 0
    %1900 = vmatpush1.bf16.msra.mxu0 0
    %1901 = vmatprep.subr.bf16.mxu0 0
    %1902 = vmatpush1.bf16.msra.mxu0 0
    %1903 = vmatprep.subr.bf16.mxu0 0
    %1904 = vmatpush1.bf16.msra.mxu0 0
    %1905 = vmatprep.subr.bf16.mxu0 0
    %1906 = vmatpush1.bf16.msra.mxu0 0
    %1907 = vmatprep.subr.bf16.mxu0 0
    %1908 = vmatpush1.bf16.msra.mxu0 0
    %1909 = vmatprep.subr.bf16.mxu0 0
    %1910 = vmatpush1.bf16.msra.mxu0 0
    %1911 = vmatprep.subr.bf16.mxu0 0
    %1912 = vmatpush1.bf16.msra.mxu0 0
    %1913 = vmatprep.subr.bf16.mxu0 0
    %1914 = vmatpush1.bf16.msra.mxu0 0
    %1915 = vmatprep.mubr.bf16.mxu0 0
    %1916 = vmatmul.mubr.bf16.gmra.mrb[0].mxu0 %v1760
    %v1917 = vpop.f32.mrb[0].mxu0
    %v1918 = vadd.f32 0.0, %v1917
    %v1919 = vpop.f32.mrb[0].mxu0
    %v1920 = vadd.f32 0.0, %v1919
    %v1921 = vpop.f32.mrb[0].mxu0
    %v1922 = vpop.f32.mrb[0].mxu0
    %1923 = vdwg.mxu0
    %1924 = vmatprep.subr.bf16.mxu0 %v252
    %1925 = vmatpush1.bf16.msra.mxu0 %v251
    %1926 = vmatprep.subr.bf16.mxu0 %v256
    %1927 = vmatpush1.bf16.msra.mxu0 %v255
    %1928 = vmatprep.subr.bf16.mxu0 %v260
    %1929 = vmatpush1.bf16.msra.mxu0 %v259
    %1930 = vmatprep.subr.bf16.mxu0 %v264
    %1931 = vmatpush1.bf16.msra.mxu0 %v263
    %1932 = vmatprep.subr.bf16.mxu0 %v268
    %1933 = vmatpush1.bf16.msra.mxu0 %v267
    %1934 = vmatprep.subr.bf16.mxu0 %v272
    %1935 = vmatpush1.bf16.msra.mxu0 %v271
    %1936 = vmatprep.subr.bf16.mxu0 %v276
    %1937 = vmatpush1.bf16.msra.mxu0 %v275
    %1938 = vmatprep.subr.bf16.mxu0 %v280
    %1939 = vmatpush1.bf16.msra.mxu0 %v279
    %1940 = vmatprep.subr.bf16.mxu0 0
    %1941 = vmatpush1.bf16.msra.mxu0 0
    %1942 = vmatprep.subr.bf16.mxu0 0
    %1943 = vmatpush1.bf16.msra.mxu0 0
    %1944 = vmatprep.subr.bf16.mxu0 0
    %1945 = vmatpush1.bf16.msra.mxu0 0
    %1946 = vmatprep.subr.bf16.mxu0 0
    %1947 = vmatpush1.bf16.msra.mxu0 0
    %1948 = vmatprep.subr.bf16.mxu0 0
    %1949 = vmatpush1.bf16.msra.mxu0 0
    %1950 = vmatprep.subr.bf16.mxu0 0
    %1951 = vmatpush1.bf16.msra.mxu0 0
    %1952 = vmatprep.subr.bf16.mxu0 0
    %1953 = vmatpush1.bf16.msra.mxu0 0
    %1954 = vmatprep.subr.bf16.mxu0 0
    %1955 = vmatpush1.bf16.msra.mxu0 0
    %1956 = vmatprep.mubr.bf16.mxu0 0
    %1957 = vmatmul.mubr.bf16.gmra.mrb[0].mxu0 %v1760
    %v1958 = vpop.f32.mrb[0].mxu0
    %v1959 = vadd.f32 0.0, %v1958
    %v1960 = vpop.f32.mrb[0].mxu0
    %v1961 = vadd.f32 0.0, %v1960
    %v1962 = vpop.f32.mrb[0].mxu0
    %v1963 = vpop.f32.mrb[0].mxu0
    %1964 = vdwg.mxu0
    %v1965 = vadd.f32 %v1879, %v1918
    %v1966 = vadd.f32 %v1880, %v1920
    %v1967 = vadd.f32 %v1881, %v1959
    %v1968 = vadd.f32 %v1882, %v1961
    %v1969 = vxor.u32 %v1965, 2147483648
    %v1970 = vmul.f32 %v1969, 1.442695
    %v1971 = vpow.pop %v1970
    %v1972 = vadd.f32 %v1971, 1.0
    %v1973 = vrcp.pop %v1972
    %v1974 = vmul.f32 1.0, %v1973
    %v1975 = vxor.u32 %v1966, 2147483648
    %v1976 = vmul.f32 %v1975, 1.442695
    %v1977 = vpow.pop %v1976
    %v1978 = vadd.f32 %v1977, 1.0
    %v1979 = vrcp.pop %v1978
    %v1980 = vmul.f32 1.0, %v1979
    %v1981 = vtanh.pop %v1967
    %v1982 = vxor.u32 %v1968, 2147483648
    %v1983 = vmul.f32 %v1982, 1.442695
    %v1984 = vpow.pop %v1983
    %v1985 = vadd.f32 %v1984, 1.0
    %v1986 = vrcp.pop %v1985
    %v1987 = vmul.f32 1.0, %v1986
    %v1988 = vmul.f32 %v1980, %v1757
    %v1989 = vmul.f32 %v1974, %v1981
    %v1990 = vadd.f32 %v1988, %v1989
    %v1991 = vtanh.pop %v1990
    %v1992 = vmul.f32 %v1987, %v1991
    %v1993 = vpack.c.bf16 %v1992, %v1992
    %v1994 = vpack.c.bf16 %v1867, %v1867
    %1995 = vmatprep.subr.bf16.mxu0 %v703
    %1996 = vmatpush1.bf16.msra.mxu0 %v702
    %1997 = vmatprep.subr.bf16.mxu0 %v707
    %1998 = vmatpush1.bf16.msra.mxu0 %v706
    %1999 = vmatprep.subr.bf16.mxu0 %v711
    %2000 = vmatpush1.bf16.msra.mxu0 %v710
    %2001 = vmatprep.subr.bf16.mxu0 %v715
    %2002 = vmatpush1.bf16.msra.mxu0 %v714
    %2003 = vmatprep.subr.bf16.mxu0 %v719
    %2004 = vmatpush1.bf16.msra.mxu0 %v718
    %2005 = vmatprep.subr.bf16.mxu0 %v723
    %2006 = vmatpush1.bf16.msra.mxu0 %v722
    %2007 = vmatprep.subr.bf16.mxu0 %v727
    %2008 = vmatpush1.bf16.msra.mxu0 %v726
    %2009 = vmatprep.subr.bf16.mxu0 %v731
    %2010 = vmatpush1.bf16.msra.mxu0 %v730
    %2011 = vmatprep.subr.bf16.mxu0 %v735
    %2012 = vmatpush1.bf16.msra.mxu0 %v734
    %2013 = vmatprep.subr.bf16.mxu0 %v739
    %2014 = vmatpush1.bf16.msra.mxu0 %v738
    %2015 = vmatprep.subr.bf16.mxu0 %v743
    %2016 = vmatpush1.bf16.msra.mxu0 %v742
    %2017 = vmatprep.subr.bf16.mxu0 %v747
    %2018 = vmatpush1.bf16.msra.mxu0 %v746
    %2019 = vmatprep.subr.bf16.mxu0 %v751
    %2020 = vmatpush1.bf16.msra.mxu0 %v750
    %2021 = vmatprep.subr.bf16.mxu0 %v755
    %2022 = vmatpush1.bf16.msra.mxu0 %v754
    %2023 = vmatprep.subr.bf16.mxu0 %v759
    %2024 = vmatpush1.bf16.msra.mxu0 %v758
    %2025 = vmatprep.subr.bf16.mxu0 %v763
    %2026 = vmatpush1.bf16.msra.mxu0 %v762
    %2027 = vmatprep.mubr.bf16.mxu0 %v1994
    %2028 = vmatmul.mubr.bf16.gmra.mrb[0].mxu0 %v1993
    %v2029 = vpop.f32.mrb[0].mxu0
    %v2030 = vadd.f32 %v493, %v2029
    %v2031 = vpop.f32.mrb[0].mxu0
    %v2032 = vadd.f32 %v497, %v2031
    %v2033 = vpop.f32.mrb[0].mxu0
    %v2034 = vpop.f32.mrb[0].mxu0
    %2035 = vdwg.mxu0
    %2036 = vmatprep.subr.bf16.mxu0 %v705
    %2037 = vmatpush1.bf16.msra.mxu0 %v704
    %2038 = vmatprep.subr.bf16.mxu0 %v709
    %2039 = vmatpush1.bf16.msra.mxu0 %v708
    %2040 = vmatprep.subr.bf16.mxu0 %v713
    %2041 = vmatpush1.bf16.msra.mxu0 %v712
    %2042 = vmatprep.subr.bf16.mxu0 %v717
    %2043 = vmatpush1.bf16.msra.mxu0 %v716
    %2044 = vmatprep.subr.bf16.mxu0 %v721
    %2045 = vmatpush1.bf16.msra.mxu0 %v720
    %2046 = vmatprep.subr.bf16.mxu0 %v725
    %2047 = vmatpush1.bf16.msra.mxu0 %v724
    %2048 = vmatprep.subr.bf16.mxu0 %v729
    %2049 = vmatpush1.bf16.msra.mxu0 %v728
    %2050 = vmatprep.subr.bf16.mxu0 %v733
    %2051 = vmatpush1.bf16.msra.mxu0 %v732
    %2052 = vmatprep.subr.bf16.mxu0 %v737
    %2053 = vmatpush1.bf16.msra.mxu0 %v736
    %2054 = vmatprep.subr.bf16.mxu0 %v741
    %2055 = vmatpush1.bf16.msra.mxu0 %v740
    %2056 = vmatprep.subr.bf16.mxu0 %v745
    %2057 = vmatpush1.bf16.msra.mxu0 %v744
    %2058 = vmatprep.subr.bf16.mxu0 %v749
    %2059 = vmatpush1.bf16.msra.mxu0 %v748
    %2060 = vmatprep.subr.bf16.mxu0 %v753
    %2061 = vmatpush1.bf16.msra.mxu0 %v752
    %2062 = vmatprep.subr.bf16.mxu0 %v757
    %2063 = vmatpush1.bf16.msra.mxu0 %v756
    %2064 = vmatprep.subr.bf16.mxu0 %v761
    %2065 = vmatpush1.bf16.msra.mxu0 %v760
    %2066 = vmatprep.subr.bf16.mxu0 %v765
    %2067 = vmatpush1.bf16.msra.mxu0 %v764
    %2068 = vmatprep.mubr.bf16.mxu0 %v1994
    %2069 = vmatmul.mubr.bf16.gmra.mrb[0].mxu0 %v1993
    %v2070 = vpop.f32.mrb[0].mxu0
    %v2071 = vadd.f32 %v501, %v2070
    %v2072 = vpop.f32.mrb[0].mxu0
    %v2073 = vadd.f32 %v505, %v2072
    %v2074 = vpop.f32.mrb[0].mxu0
    %v2075 = vpop.f32.mrb[0].mxu0
    %2076 = vdwg.mxu0
    %v2077 = vxor.u32 %v2030, 2147483648
    %v2078 = vmul.f32 %v2077, 1.442695
    %v2079 = vpow.pop %v2078
    %v2080 = vadd.f32 %v2079, 1.0
    %v2081 = vrcp.pop %v2080
    %v2082 = vmul.f32 1.0, %v2081
    %v2083 = vxor.u32 %v2032, 2147483648
    %v2084 = vmul.f32 %v2083, 1.442695
    %v2085 = vpow.pop %v2084
    %v2086 = vadd.f32 %v2085, 1.0
    %v2087 = vrcp.pop %v2086
    %v2088 = vmul.f32 1.0, %v2087
    %v2089 = vtanh.pop %v2071
    %v2090 = vxor.u32 %v2073, 2147483648
    %v2091 = vmul.f32 %v2090, 1.442695
    %v2092 = vpow.pop %v2091
    %v2093 = vadd.f32 %v2092, 1.0
    %v2094 = vrcp.pop %v2093
    %v2095 = vmul.f32 1.0, %v2094
    %v2096 = vmul.f32 %v2088, %v1865
    %v2097 = vmul.f32 %v2082, %v2089
    %v2098 = vadd.f32 %v2096, %v2097
    %v2099 = vtanh.pop %v2098
    %v2100 = vmul.f32 %v2095, %v2099
    %s2101 = scalar_lea.vmem %s0, 48
    %v2102 = vld [vmem:[%s2101] sm:$0xff]
    %2104 = vset.pattern.permute.xlu0 0
    %2105 = vperm.xlu0 %2104, %v2102
    %v2106 = vpop.permute.xlu0 %2105
    %v2108 = vmul.f32 %v2106, %v75
    %v2109 = vmul.f32 %v2106, %v79
    %v2110 = vmul.f32 %v2106, %v83
    %v2111 = vmul.f32 %v2106, %v87
    %v2112 = vadd.f32 %v2108, %v100
    %v2113 = vadd.f32 %v2109, %v104
    %v2114 = vadd.f32 %v2110, %v108
    %v2115 = vadd.f32 %v2111, %v112
    %2116 = vmatprep.subr.bf16.mxu0 %v250
    %2117 = vmatpush1.bf16.msra.mxu0 %v249
    %2118 = vmatprep.subr.bf16.mxu0 %v254
    %2119 = vmatpush1.bf16.msra.mxu0 %v253
    %2120 = vmatprep.subr.bf16.mxu0 %v258
    %2121 = vmatpush1.bf16.msra.mxu0 %v257
    %2122 = vmatprep.subr.bf16.mxu0 %v262
    %2123 = vmatpush1.bf16.msra.mxu0 %v261
    %2124 = vmatprep.subr.bf16.mxu0 %v266
    %2125 = vmatpush1.bf16.msra.mxu0 %v265
    %2126 = vmatprep.subr.bf16.mxu0 %v270
    %2127 = vmatpush1.bf16.msra.mxu0 %v269
    %2128 = vmatprep.subr.bf16.mxu0 %v274
    %2129 = vmatpush1.bf16.msra.mxu0 %v273
    %2130 = vmatprep.subr.bf16.mxu0 %v278
    %2131 = vmatpush1.bf16.msra.mxu0 %v277
    %2132 = vmatprep.subr.bf16.mxu0 0
    %2133 = vmatpush1.bf16.msra.mxu0 0
    %2134 = vmatprep.subr.bf16.mxu0 0
    %2135 = vmatpush1.bf16.msra.mxu0 0
    %2136 = vmatprep.subr.bf16.mxu0 0
    %2137 = vmatpush1.bf16.msra.mxu0 0
    %2138 = vmatprep.subr.bf16.mxu0 0
    %2139 = vmatpush1.bf16.msra.mxu0 0
    %2140 = vmatprep.subr.bf16.mxu0 0
    %2141 = vmatpush1.bf16.msra.mxu0 0
    %2142 = vmatprep.subr.bf16.mxu0 0
    %2143 = vmatpush1.bf16.msra.mxu0 0
    %2144 = vmatprep.subr.bf16.mxu0 0
    %2145 = vmatpush1.bf16.msra.mxu0 0
    %2146 = vmatprep.subr.bf16.mxu0 0
    %2147 = vmatpush1.bf16.msra.mxu0 0
    %2148 = vmatprep.mubr.bf16.mxu0 0
    %2149 = vmatmul.mubr.bf16.gmra.mrb[0].mxu0 %v1993
    %v2150 = vpop.f32.mrb[0].mxu0
    %v2151 = vadd.f32 0.0, %v2150
    %v2152 = vpop.f32.mrb[0].mxu0
    %v2153 = vadd.f32 0.0, %v2152
    %v2154 = vpop.f32.mrb[0].mxu0
    %v2155 = vpop.f32.mrb[0].mxu0
    %2156 = vdwg.mxu0
    %2157 = vmatprep.subr.bf16.mxu0 %v252
    %2158 = vmatpush1.bf16.msra.mxu0 %v251
    %2159 = vmatprep.subr.bf16.mxu0 %v256
    %2160 = vmatpush1.bf16.msra.mxu0 %v255
    %2161 = vmatprep.subr.bf16.mxu0 %v260
    %2162 = vmatpush1.bf16.msra.mxu0 %v259
    %2163 = vmatprep.subr.bf16.mxu0 %v264
    %2164 = vmatpush1.bf16.msra.mxu0 %v263
    %2165 = vmatprep.subr.bf16.mxu0 %v268
    %2166 = vmatpush1.bf16.msra.mxu0 %v267
    %2167 = vmatprep.subr.bf16.mxu0 %v272
    %2168 = vmatpush1.bf16.msra.mxu0 %v271
    %2169 = vmatprep.subr.bf16.mxu0 %v276
    %2170 = vmatpush1.bf16.msra.mxu0 %v275
    %2171 = vmatprep.subr.bf16.mxu0 %v280
    %2172 = vmatpush1.bf16.msra.mxu0 %v279
    %2173 = vmatprep.subr.bf16.mxu0 0
    %2174 = vmatpush1.bf16.msra.mxu0 0
    %2175 = vmatprep.subr.bf16.mxu0 0
    %2176 = vmatpush1.bf16.msra.mxu0 0
    %2177 = vmatprep.subr.bf16.mxu0 0
    %2178 = vmatpush1.bf16.msra.mxu0 0
    %2179 = vmatprep.subr.bf16.mxu0 0
    %2180 = vmatpush1.bf16.msra.mxu0 0
    %2181 = vmatprep.subr.bf16.mxu0 0
    %2182 = vmatpush1.bf16.msra.mxu0 0
    %2183 = vmatprep.subr.bf16.mxu0 0
    %2184 = vmatpush1.bf16.msra.mxu0 0
    %2185 = vmatprep.subr.bf16.mxu0 0
    %2186 = vmatpush1.bf16.msra.mxu0 0
    %2187 = vmatprep.subr.bf16.mxu0 0
    %2188 = vmatpush1.bf16.msra.mxu0 0
    %2189 = vmatprep.mubr.bf16.mxu0 0
    %2190 = vmatmul.mubr.bf16.gmra.mrb[0].mxu0 %v1993
    %v2191 = vpop.f32.mrb[0].mxu0
    %v2192 = vadd.f32 0.0, %v2191
    %v2193 = vpop.f32.mrb[0].mxu0
    %v2194 = vadd.f32 0.0, %v2193
    %v2195 = vpop.f32.mrb[0].mxu0
    %v2196 = vpop.f32.mrb[0].mxu0
    %2197 = vdwg.mxu0
    %v2198 = vadd.f32 %v2112, %v2151
    %v2199 = vadd.f32 %v2113, %v2153
    %v2200 = vadd.f32 %v2114, %v2192
    %v2201 = vadd.f32 %v2115, %v2194
    %v2202 = vxor.u32 %v2198, 2147483648
    %v2203 = vmul.f32 %v2202, 1.442695
    %v2204 = vpow.pop %v2203
    %v2205 = vadd.f32 %v2204, 1.0
    %v2206 = vrcp.pop %v2205
    %v2207 = vmul.f32 1.0, %v2206
    %v2208 = vxor.u32 %v2199, 2147483648
    %v2209 = vmul.f32 %v2208, 1.442695
    %v2210 = vpow.pop %v2209
    %v2211 = vadd.f32 %v2210, 1.0
    %v2212 = vrcp.pop %v2211
    %v2213 = vmul.f32 1.0, %v2212
    %v2214 = vtanh.pop %v2200
    %v2215 = vxor.u32 %v2201, 2147483648
    %v2216 = vmul.f32 %v2215, 1.442695
    %v2217 = vpow.pop %v2216
    %v2218 = vadd.f32 %v2217, 1.0
    %v2219 = vrcp.pop %v2218
    %v2220 = vmul.f32 1.0, %v2219
    %v2221 = vmul.f32 %v2213, %v1990
    %v2222 = vmul.f32 %v2207, %v2214
    %v2223 = vadd.f32 %v2221, %v2222
    %v2224 = vtanh.pop %v2223
    %v2225 = vmul.f32 %v2220, %v2224
    %v2226 = vpack.c.bf16 %v2225, %v2225
    %v2227 = vpack.c.bf16 %v2100, %v2100
    %2228 = vmatprep.subr.bf16.mxu0 %v703
    %2229 = vmatpush1.bf16.msra.mxu0 %v702
    %2230 = vmatprep.subr.bf16.mxu0 %v707
    %2231 = vmatpush1.bf16.msra.mxu0 %v706
    %2232 = vmatprep.subr.bf16.mxu0 %v711
    %2233 = vmatpush1.bf16.msra.mxu0 %v710
    %2234 = vmatprep.subr.bf16.mxu0 %v715
    %2235 = vmatpush1.bf16.msra.mxu0 %v714
    %2236 = vmatprep.subr.bf16.mxu0 %v719
    %2237 = vmatpush1.bf16.msra.mxu0 %v718
    %2238 = vmatprep.subr.bf16.mxu0 %v723
    %2239 = vmatpush1.bf16.msra.mxu0 %v722
    %2240 = vmatprep.subr.bf16.mxu0 %v727
    %2241 = vmatpush1.bf16.msra.mxu0 %v726
    %2242 = vmatprep.subr.bf16.mxu0 %v731
    %2243 = vmatpush1.bf16.msra.mxu0 %v730
    %2244 = vmatprep.subr.bf16.mxu0 %v735
    %2245 = vmatpush1.bf16.msra.mxu0 %v734
    %2246 = vmatprep.subr.bf16.mxu0 %v739
    %2247 = vmatpush1.bf16.msra.mxu0 %v738
    %2248 = vmatprep.subr.bf16.mxu0 %v743
    %2249 = vmatpush1.bf16.msra.mxu0 %v742
    %2250 = vmatprep.subr.bf16.mxu0 %v747
    %2251 = vmatpush1.bf16.msra.mxu0 %v746
    %2252 = vmatprep.subr.bf16.mxu0 %v751
    %2253 = vmatpush1.bf16.msra.mxu0 %v750
    %2254 = vmatprep.subr.bf16.mxu0 %v755
    %2255 = vmatpush1.bf16.msra.mxu0 %v754
    %2256 = vmatprep.subr.bf16.mxu0 %v759
    %2257 = vmatpush1.bf16.msra.mxu0 %v758
    %2258 = vmatprep.subr.bf16.mxu0 %v763
    %2259 = vmatpush1.bf16.msra.mxu0 %v762
    %2260 = vmatprep.mubr.bf16.mxu0 %v2227
    %2261 = vmatmul.mubr.bf16.gmra.mrb[0].mxu0 %v2226
    %v2262 = vpop.f32.mrb[0].mxu0
    %v2263 = vadd.f32 %v493, %v2262
    %v2264 = vpop.f32.mrb[0].mxu0
    %v2265 = vadd.f32 %v497, %v2264
    %v2266 = vpop.f32.mrb[0].mxu0
    %v2267 = vpop.f32.mrb[0].mxu0
    %2268 = vdwg.mxu0
    %2269 = vmatprep.subr.bf16.mxu0 %v705
    %2270 = vmatpush1.bf16.msra.mxu0 %v704
    %2271 = vmatprep.subr.bf16.mxu0 %v709
    %2272 = vmatpush1.bf16.msra.mxu0 %v708
    %2273 = vmatprep.subr.bf16.mxu0 %v713
    %2274 = vmatpush1.bf16.msra.mxu0 %v712
    %2275 = vmatprep.subr.bf16.mxu0 %v717
    %2276 = vmatpush1.bf16.msra.mxu0 %v716
    %2277 = vmatprep.subr.bf16.mxu0 %v721
    %2278 = vmatpush1.bf16.msra.mxu0 %v720
    %2279 = vmatprep.subr.bf16.mxu0 %v725
    %2280 = vmatpush1.bf16.msra.mxu0 %v724
    %2281 = vmatprep.subr.bf16.mxu0 %v729
    %2282 = vmatpush1.bf16.msra.mxu0 %v728
    %2283 = vmatprep.subr.bf16.mxu0 %v733
    %2284 = vmatpush1.bf16.msra.mxu0 %v732
    %2285 = vmatprep.subr.bf16.mxu0 %v737
    %2286 = vmatpush1.bf16.msra.mxu0 %v736
    %2287 = vmatprep.subr.bf16.mxu0 %v741
    %2288 = vmatpush1.bf16.msra.mxu0 %v740
    %2289 = vmatprep.subr.bf16.mxu0 %v745
    %2290 = vmatpush1.bf16.msra.mxu0 %v744
    %2291 = vmatprep.subr.bf16.mxu0 %v749
    %2292 = vmatpush1.bf16.msra.mxu0 %v748
    %2293 = vmatprep.subr.bf16.mxu0 %v753
    %2294 = vmatpush1.bf16.msra.mxu0 %v752
    %2295 = vmatprep.subr.bf16.mxu0 %v757
    %2296 = vmatpush1.bf16.msra.mxu0 %v756
    %2297 = vmatprep.subr.bf16.mxu0 %v761
    %2298 = vmatpush1.bf16.msra.mxu0 %v760
    %2299 = vmatprep.subr.bf16.mxu0 %v765
    %2300 = vmatpush1.bf16.msra.mxu0 %v764
    %2301 = vmatprep.mubr.bf16.mxu0 %v2227
    %2302 = vmatmul.mubr.bf16.gmra.mrb[0].mxu0 %v2226
    %v2303 = vpop.f32.mrb[0].mxu0
    %v2304 = vadd.f32 %v501, %v2303
    %v2305 = vpop.f32.mrb[0].mxu0
    %v2306 = vadd.f32 %v505, %v2305
    %v2307 = vpop.f32.mrb[0].mxu0
    %v2308 = vpop.f32.mrb[0].mxu0
    %2309 = vdwg.mxu0
    %v2310 = vxor.u32 %v2263, 2147483648
    %v2311 = vmul.f32 %v2310, 1.442695
    %v2312 = vpow.pop %v2311
    %v2313 = vadd.f32 %v2312, 1.0
    %v2314 = vrcp.pop %v2313
    %v2315 = vmul.f32 1.0, %v2314
    %v2316 = vxor.u32 %v2265, 2147483648
    %v2317 = vmul.f32 %v2316, 1.442695
    %v2318 = vpow.pop %v2317
    %v2319 = vadd.f32 %v2318, 1.0
    %v2320 = vrcp.pop %v2319
    %v2321 = vmul.f32 1.0, %v2320
    %v2322 = vtanh.pop %v2304
    %v2323 = vxor.u32 %v2306, 2147483648
    %v2324 = vmul.f32 %v2323, 1.442695
    %v2325 = vpow.pop %v2324
    %v2326 = vadd.f32 %v2325, 1.0
    %v2327 = vrcp.pop %v2326
    %v2328 = vmul.f32 1.0, %v2327
    %v2329 = vmul.f32 %v2321, %v2098
    %v2330 = vmul.f32 %v2315, %v2322
    %v2331 = vadd.f32 %v2329, %v2330
    %v2332 = vtanh.pop %v2331
    %v2333 = vmul.f32 %v2328, %v2332
    %s2334 = scalar_lea.vmem %s0, 56
    %v2335 = vld [vmem:[%s2334] sm:$0xff]
    %2337 = vset.pattern.permute.xlu0 0
    %2338 = vperm.xlu0 %2337, %v2335
    %v2339 = vpop.permute.xlu0 %2338
    %v2341 = vmul.f32 %v2339, %v75
    %v2342 = vmul.f32 %v2339, %v79
    %v2343 = vmul.f32 %v2339, %v83
    %v2344 = vmul.f32 %v2339, %v87
    %v2345 = vadd.f32 %v2341, %v100
    %v2346 = vadd.f32 %v2342, %v104
    %v2347 = vadd.f32 %v2343, %v108
    %v2348 = vadd.f32 %v2344, %v112
    %2349 = vmatprep.subr.bf16.mxu0 %v250
    %2350 = vmatpush1.bf16.msra.mxu0 %v249
    %2351 = vmatprep.subr.bf16.mxu0 %v254
    %2352 = vmatpush1.bf16.msra.mxu0 %v253
    %2353 = vmatprep.subr.bf16.mxu0 %v258
    %2354 = vmatpush1.bf16.msra.mxu0 %v257
    %2355 = vmatprep.subr.bf16.mxu0 %v262
    %2356 = vmatpush1.bf16.msra.mxu0 %v261
    %2357 = vmatprep.subr.bf16.mxu0 %v266
    %2358 = vmatpush1.bf16.msra.mxu0 %v265
    %2359 = vmatprep.subr.bf16.mxu0 %v270
    %2360 = vmatpush1.bf16.msra.mxu0 %v269
    %2361 = vmatprep.subr.bf16.mxu0 %v274
    %2362 = vmatpush1.bf16.msra.mxu0 %v273
    %2363 = vmatprep.subr.bf16.mxu0 %v278
    %2364 = vmatpush1.bf16.msra.mxu0 %v277
    %2365 = vmatprep.subr.bf16.mxu0 0
    %2366 = vmatpush1.bf16.msra.mxu0 0
    %2367 = vmatprep.subr.bf16.mxu0 0
    %2368 = vmatpush1.bf16.msra.mxu0 0
    %2369 = vmatprep.subr.bf16.mxu0 0
    %2370 = vmatpush1.bf16.msra.mxu0 0
    %2371 = vmatprep.subr.bf16.mxu0 0
    %2372 = vmatpush1.bf16.msra.mxu0 0
    %2373 = vmatprep.subr.bf16.mxu0 0
    %2374 = vmatpush1.bf16.msra.mxu0 0
    %2375 = vmatprep.subr.bf16.mxu0 0
    %2376 = vmatpush1.bf16.msra.mxu0 0
    %2377 = vmatprep.subr.bf16.mxu0 0
    %2378 = vmatpush1.bf16.msra.mxu0 0
    %2379 = vmatprep.subr.bf16.mxu0 0
    %2380 = vmatpush1.bf16.msra.mxu0 0
    %2381 = vmatprep.mubr.bf16.mxu0 0
    %2382 = vmatmul.mubr.bf16.gmra.mrb[0].mxu0 %v2226
    %v2383 = vpop.f32.mrb[0].mxu0
    %v2384 = vadd.f32 0.0, %v2383
    %v2385 = vpop.f32.mrb[0].mxu0
    %v2386 = vadd.f32 0.0, %v2385
    %v2387 = vpop.f32.mrb[0].mxu0
    %v2388 = vpop.f32.mrb[0].mxu0
    %2389 = vdwg.mxu0
    %2390 = vmatprep.subr.bf16.mxu0 %v252
    %2391 = vmatpush1.bf16.msra.mxu0 %v251
    %2392 = vmatprep.subr.bf16.mxu0 %v256
    %2393 = vmatpush1.bf16.msra.mxu0 %v255
    %2394 = vmatprep.subr.bf16.mxu0 %v260
    %2395 = vmatpush1.bf16.msra.mxu0 %v259
    %2396 = vmatprep.subr.bf16.mxu0 %v264
    %2397 = vmatpush1.bf16.msra.mxu0 %v263
    %2398 = vmatprep.subr.bf16.mxu0 %v268
    %2399 = vmatpush1.bf16.msra.mxu0 %v267
    %2400 = vmatprep.subr.bf16.mxu0 %v272
    %2401 = vmatpush1.bf16.msra.mxu0 %v271
    %2402 = vmatprep.subr.bf16.mxu0 %v276
    %2403 = vmatpush1.bf16.msra.mxu0 %v275
    %2404 = vmatprep.subr.bf16.mxu0 %v280
    %2405 = vmatpush1.bf16.msra.mxu0 %v279
    %2406 = vmatprep.subr.bf16.mxu0 0
    %2407 = vmatpush1.bf16.msra.mxu0 0
    %2408 = vmatprep.subr.bf16.mxu0 0
    %2409 = vmatpush1.bf16.msra.mxu0 0
    %2410 = vmatprep.subr.bf16.mxu0 0
    %2411 = vmatpush1.bf16.msra.mxu0 0
    %2412 = vmatprep.subr.bf16.mxu0 0
    %2413 = vmatpush1.bf16.msra.mxu0 0
    %2414 = vmatprep.subr.bf16.mxu0 0
    %2415 = vmatpush1.bf16.msra.mxu0 0
    %2416 = vmatprep.subr.bf16.mxu0 0
    %2417 = vmatpush1.bf16.msra.mxu0 0
    %2418 = vmatprep.subr.bf16.mxu0 0
    %2419 = vmatpush1.bf16.msra.mxu0 0
    %2420 = vmatprep.subr.bf16.mxu0 0
    %2421 = vmatpush1.bf16.msra.mxu0 0
    %2422 = vmatprep.mubr.bf16.mxu0 0
    %2423 = vmatmul.mubr.bf16.gmra.mrb[0].mxu0 %v2226
    %v2424 = vpop.f32.mrb[0].mxu0
    %v2425 = vadd.f32 0.0, %v2424
    %v2426 = vpop.f32.mrb[0].mxu0
    %v2427 = vadd.f32 0.0, %v2426
    %v2428 = vpop.f32.mrb[0].mxu0
    %v2429 = vpop.f32.mrb[0].mxu0
    %2430 = vdwg.mxu0
    %v2431 = vadd.f32 %v2345, %v2384
    %v2432 = vadd.f32 %v2346, %v2386
    %v2433 = vadd.f32 %v2347, %v2425
    %v2434 = vadd.f32 %v2348, %v2427
    %v2435 = vxor.u32 %v2431, 2147483648
    %v2436 = vmul.f32 %v2435, 1.442695
    %v2437 = vpow.pop %v2436
    %v2438 = vadd.f32 %v2437, 1.0
    %v2439 = vrcp.pop %v2438
    %v2440 = vmul.f32 1.0, %v2439
    %v2441 = vxor.u32 %v2432, 2147483648
    %v2442 = vmul.f32 %v2441, 1.442695
    %v2443 = vpow.pop %v2442
    %v2444 = vadd.f32 %v2443, 1.0
    %v2445 = vrcp.pop %v2444
    %v2446 = vmul.f32 1.0, %v2445
    %v2447 = vtanh.pop %v2433
    %v2448 = vxor.u32 %v2434, 2147483648
    %v2449 = vmul.f32 %v2448, 1.442695
    %v2450 = vpow.pop %v2449
    %v2451 = vadd.f32 %v2450, 1.0
    %v2452 = vrcp.pop %v2451
    %v2453 = vmul.f32 1.0, %v2452
    %v2454 = vmul.f32 %v2446, %v2223
    %v2455 = vmul.f32 %v2440, %v2447
    %v2456 = vadd.f32 %v2454, %v2455
    %v2457 = vtanh.pop %v2456
    %v2458 = vmul.f32 %v2453, %v2457
    %v2459 = vpack.c.bf16 %v2458, %v2458
    %v2460 = vpack.c.bf16 %v2333, %v2333
    %2461 = vmatprep.subr.bf16.mxu0 %v703
    %2462 = vmatpush1.bf16.msra.mxu0 %v702
    %2463 = vmatprep.subr.bf16.mxu0 %v707
    %2464 = vmatpush1.bf16.msra.mxu0 %v706
    %2465 = vmatprep.subr.bf16.mxu0 %v711
    %2466 = vmatpush1.bf16.msra.mxu0 %v710
    %2467 = vmatprep.subr.bf16.mxu0 %v715
    %2468 = vmatpush1.bf16.msra.mxu0 %v714
    %2469 = vmatprep.subr.bf16.mxu0 %v719
    %2470 = vmatpush1.bf16.msra.mxu0 %v718
    %2471 = vmatprep.subr.bf16.mxu0 %v723
    %2472 = vmatpush1.bf16.msra.mxu0 %v722
    %2473 = vmatprep.subr.bf16.mxu0 %v727
    %2474 = vmatpush1.bf16.msra.mxu0 %v726
    %2475 = vmatprep.subr.bf16.mxu0 %v731
    %2476 = vmatpush1.bf16.msra.mxu0 %v730
    %2477 = vmatprep.subr.bf16.mxu0 %v735
    %2478 = vmatpush1.bf16.msra.mxu0 %v734
    %2479 = vmatprep.subr.bf16.mxu0 %v739
    %2480 = vmatpush1.bf16.msra.mxu0 %v738
    %2481 = vmatprep.subr.bf16.mxu0 %v743
    %2482 = vmatpush1.bf16.msra.mxu0 %v742
    %2483 = vmatprep.subr.bf16.mxu0 %v747
    %2484 = vmatpush1.bf16.msra.mxu0 %v746
    %2485 = vmatprep.subr.bf16.mxu0 %v751
    %2486 = vmatpush1.bf16.msra.mxu0 %v750
    %2487 = vmatprep.subr.bf16.mxu0 %v755
    %2488 = vmatpush1.bf16.msra.mxu0 %v754
    %2489 = vmatprep.subr.bf16.mxu0 %v759
    %2490 = vmatpush1.bf16.msra.mxu0 %v758
    %2491 = vmatprep.subr.bf16.mxu0 %v763
    %2492 = vmatpush1.bf16.msra.mxu0 %v762
    %2493 = vmatprep.mubr.bf16.mxu0 %v2460
    %2494 = vmatmul.mubr.bf16.gmra.mrb[0].mxu0 %v2459
    %v2495 = vpop.f32.mrb[0].mxu0
    %v2496 = vadd.f32 %v493, %v2495
    %v2497 = vpop.f32.mrb[0].mxu0
    %v2498 = vadd.f32 %v497, %v2497
    %v2499 = vpop.f32.mrb[0].mxu0
    %v2500 = vpop.f32.mrb[0].mxu0
    %2501 = vdwg.mxu0
    %2502 = vmatprep.subr.bf16.mxu0 %v705
    %2503 = vmatpush1.bf16.msra.mxu0 %v704
    %2504 = vmatprep.subr.bf16.mxu0 %v709
    %2505 = vmatpush1.bf16.msra.mxu0 %v708
    %2506 = vmatprep.subr.bf16.mxu0 %v713
    %2507 = vmatpush1.bf16.msra.mxu0 %v712
    %2508 = vmatprep.subr.bf16.mxu0 %v717
    %2509 = vmatpush1.bf16.msra.mxu0 %v716
    %2510 = vmatprep.subr.bf16.mxu0 %v721
    %2511 = vmatpush1.bf16.msra.mxu0 %v720
    %2512 = vmatprep.subr.bf16.mxu0 %v725
    %2513 = vmatpush1.bf16.msra.mxu0 %v724
    %2514 = vmatprep.subr.bf16.mxu0 %v729
    %2515 = vmatpush1.bf16.msra.mxu0 %v728
    %2516 = vmatprep.subr.bf16.mxu0 %v733
    %2517 = vmatpush1.bf16.msra.mxu0 %v732
    %2518 = vmatprep.subr.bf16.mxu0 %v737
    %2519 = vmatpush1.bf16.msra.mxu0 %v736
    %2520 = vmatprep.subr.bf16.mxu0 %v741
    %2521 = vmatpush1.bf16.msra.mxu0 %v740
    %2522 = vmatprep.subr.bf16.mxu0 %v745
    %2523 = vmatpush1.bf16.msra.mxu0 %v744
    %2524 = vmatprep.subr.bf16.mxu0 %v749
    %2525 = vmatpush1.bf16.msra.mxu0 %v748
    %2526 = vmatprep.subr.bf16.mxu0 %v753
    %2527 = vmatpush1.bf16.msra.mxu0 %v752
    %2528 = vmatprep.subr.bf16.mxu0 %v757
    %2529 = vmatpush1.bf16.msra.mxu0 %v756
    %2530 = vmatprep.subr.bf16.mxu0 %v761
    %2531 = vmatpush1.bf16.msra.mxu0 %v760
    %2532 = vmatprep.subr.bf16.mxu0 %v765
    %2533 = vmatpush1.bf16.msra.mxu0 %v764
    %2534 = vmatprep.mubr.bf16.mxu0 %v2460
    %2535 = vmatmul.mubr.bf16.gmra.mrb[0].mxu0 %v2459
    %v2536 = vpop.f32.mrb[0].mxu0
    %v2537 = vadd.f32 %v501, %v2536
    %v2538 = vpop.f32.mrb[0].mxu0
    %v2539 = vadd.f32 %v505, %v2538
    %v2540 = vpop.f32.mrb[0].mxu0
    %v2541 = vpop.f32.mrb[0].mxu0
    %2542 = vdwg.mxu0
    %v2543 = vxor.u32 %v2496, 2147483648
    %v2544 = vmul.f32 %v2543, 1.442695
    %v2545 = vpow.pop %v2544
    %v2546 = vadd.f32 %v2545, 1.0
    %v2547 = vrcp.pop %v2546
    %v2548 = vmul.f32 1.0, %v2547
    %v2549 = vxor.u32 %v2498, 2147483648
    %v2550 = vmul.f32 %v2549, 1.442695
    %v2551 = vpow.pop %v2550
    %v2552 = vadd.f32 %v2551, 1.0
    %v2553 = vrcp.pop %v2552
    %v2554 = vmul.f32 1.0, %v2553
    %v2555 = vtanh.pop %v2537
    %v2556 = vxor.u32 %v2539, 2147483648
    %v2557 = vmul.f32 %v2556, 1.442695
    %v2558 = vpow.pop %v2557
    %v2559 = vadd.f32 %v2558, 1.0
    %v2560 = vrcp.pop %v2559
    %v2561 = vmul.f32 1.0, %v2560
    %v2562 = vmul.f32 %v2554, %v2331
    %v2563 = vmul.f32 %v2548, %v2555
    %v2564 = vadd.f32 %v2562, %v2563
    %v2565 = vtanh.pop %v2564
    %v2566 = vmul.f32 %v2561, %v2565
    %v2568 = vlaneseq
    %v2569 = vshrl.u32 %v2568, 7
    %v2570 = vsub.s32 0, %v2569
    %v2571 = vrot.slane %v63, %v2570
    %v2573 = vmul.f32 %v2566, %v2571
    %2574 = vadd.xlane.f32.xlu0 %v2573
    %v2575 = vpop.xlane.xlu0 %2574
    %v2577 = vlaneseq
    %v2578 = vshrl.u32 %v2577, 7
    %v2579 = vsub.s32 0, %v2578
    %v2580 = vrot.slane %v64, %v2579
    %v2582 = vadd.f32 %v2575, %v2580
    %vm2583 = vcmask 7168
    %2584 = vst.msk [vmem:[%s8] sm:$0xff] %vm2583, %v2582
    // Predicated region
    $region42: #{lstm_model_forward.1} parent=1 // pred_check
      _
    $region43: #{lstm_model_forward.1} parent=1 // pred_check_branch
      %2586 = sbr.rel (0) target = $region45
    $region44: #{lstm_model_forward.1} parent=1 // pred_region
      _
    $region45: #{lstm_model_forward.1} parent=1 // pred_fallthru
      _
    // Predicated region
    $region46: #{lstm_model_forward.1} parent=1 // pred_check
      _
    $region47: #{lstm_model_forward.1} parent=1 // pred_check_branch
      %2588 = sbr.rel (0) target = $region49
    $region48: #{lstm_model_forward.1} parent=1 // pred_region
      _
    $region49: #{lstm_model_forward.1} parent=1 // pred_fallthru
      _
    %2589 = vsyncpa [#allocation4], 1
    %2590 = vsyncpa [#allocation6], 1

</llo_original>
